<compile_context>
chip_gen: v6e
topology: v6e:2x2x1
jax: 0.10.0
libtpu: 0.0.40
codegen_flags: <defaults>
</compile_context>

<pallas_src>
import functools

import jax
import jax.numpy as jnp
from jax import lax
from jax.experimental import pallas as pl
from jax.experimental.pallas import tpu as pltpu


def _round_up(x, m):
    return (x + m - 1) // m * m


def _srcnn_kernel(x_ref, mask_ref, w1_ref, b1_ref, w2_ref, b2_ref, w3_ref,
                  b3_ref, o_ref, p_ref, y1_ref, y2_ref, z_ref, *, H, W, Wf):
    """Fused SRCNN forward for one image.

    Frame convention: activations live on an "extended frame" of (H+4) rows x
    Wf columns (Wf >= W+12), flattened row-major to length Me = (H+4)*Wf.
    Frame position (r, c) corresponds to conv2's padded-output pixel (h2, w2);
    columns c >= W+4 are don't-care frame padding.  Because every buffer uses
    the same row stride Wf, every conv tap shift is a contiguous 1-D slice.

    x_ref   : (1, 1, Lx)  image zero-padded by 6 and framed with stride Wf
    mask_ref: (1, Me)     1.0 on the y1 interior (r,c) in [2,H+2)x[2,W+2)
    w1_ref  : (64, 128)   conv1 weights, tap-major (kh*9+kw), K padded to 128
    b1_ref  : (64, 1)
    w2_ref  : (32, 64)    conv2 (1x1) weights, channel-major
    b2_ref  : (32, 1)
    w3_ref  : (32, 32)    conv3 weights, [tap=kh*5+kw (padded to 32), cin]
    b3_ref  : (1,)        SMEM scalar
    o_ref   : (1, 1, Mo)  flat output frame (Mo = H*Wf)
    p_ref   : (128, Me)   VMEM scratch: conv1 im2col patches (tap-major)
    y1_ref  : (64, Me)    VMEM scratch: conv1 activations (channel-major)
    y2_ref  : (32, Me)    VMEM scratch: conv2 activations (channel-major)
    z_ref   : (32, Lz)    VMEM scratch: w3-contracted per-tap planes
    """
    Me = (H + 4) * Wf
    Mo = H * Wf
    Lz = z_ref.shape[1]

    # ---- conv1 patch build: 81 shifted contiguous slices of the flat frame.
    # Zero the K-padding rows first (aligned 80:128 slab; row 80 -- the last
    # real tap -- is rewritten below).  Unconditional & megacore-safe.
    p_ref[80:128, :] = jnp.zeros((48, Me), jnp.float32)
    for kh in range(9):
        for kw in range(9):
            t = kh * 9 + kw
            off = kh * Wf + kw
            p_ref[t:t + 1, :] = x_ref[0, :, off:off + Me]

    # ---- conv1: (64,128)@(128,Me) MXU matmul + bias + ReLU, then mask off
    # everything outside the true y1 interior (the mask also zeroes the frame
    # padding columns, so no garbage ever propagates into valid pixels).
    y1_ref[...] = jnp.maximum(
        jnp.dot(w1_ref[...], p_ref[...], preferred_element_type=jnp.float32)
        + b1_ref[...], 0.0) * mask_ref[...]

    # ---- conv2 (1x1): (32,64)@(64,Me) MXU matmul + bias + ReLU.
    # On the masked (zeroed) ring this yields relu(b2) == conv2's pad=2 pixels.
    y2_ref[...] = jnp.maximum(
        jnp.dot(w2_ref[...], y1_ref[...], preferred_element_type=jnp.float32)
        + b2_ref[...], 0.0)

    # ---- conv3 channel contraction on the MXU: (32,32)@(32,Me).
    # Row t = kh*5+kw of z holds sum_c w3[kh,kw,c] * y2[c, :]; rows >= 25 are 0.
    z_ref[:, :Me] = jnp.dot(w3_ref[...], y2_ref[...],
                            preferred_element_type=jnp.float32)
    z_ref[:, Me:] = jnp.zeros((32, Lz - Me), jnp.float32)

    # ---- conv3 spatial sum: 25 shifted, full-lane-width adds (VPU/XLU).
    acc = z_ref[0:1, 0:Mo]
    for kh in range(5):
        for kw in range(5):
            if kh == 0 and kw == 0:
                continue
            t = kh * 5 + kw
            off = kh * Wf + kw
            acc = acc + z_ref[t:t + 1, off:off + Mo]
    o_ref[0] = (acc + b3_ref[0]).astype(o_ref.dtype)


@jax.jit
def srcnn_forward(x_nchw, params):
    N, C, H, W = x_nchw.shape
    assert C == 1

    Wf = _round_up(W + 12, 8)                  # frame row stride
    Me = (H + 4) * Wf                          # extended-frame length
    Mo = H * Wf                                # output-frame length
    Lx = _round_up((H + 12) * Wf + 8, 128)     # framed-input length
    Lz = _round_up(Me + 4 * Wf + 8, 128)       # z scratch length (shift slack)

    # Input: zero-pad by 6 (conv1 pad 4 + conv2 pad 2), embed rows in a
    # Wf-strided frame, flatten.  ~4 B/px of HBM traffic.
    xp = jnp.pad(x_nchw[:, 0], ((0, 0), (6, 6), (6, 6)))          # (N,H+12,W+12)
    xp = jnp.pad(xp, ((0, 0), (0, 0), (0, Wf - (W + 12))))        # (N,H+12,Wf)
    xflat = xp.reshape(N, 1, (H + 12) * Wf)
    xflat = jnp.pad(xflat, ((0, 0), (0, 0), (0, Lx - (H + 12) * Wf)))

    # Interior mask on the extended frame (1 where y1 is a real conv1 output).
    r = jnp.arange(H + 4)
    c = jnp.arange(Wf)
    mask = ((r[:, None] >= 2) & (r[:, None] < H + 2) &
            (c[None, :] >= 2) & (c[None, :] < W + 2))
    mask = mask.astype(jnp.float32).reshape(1, Me)

    # Weight layout plumbing (tiny, once per call under jit).
    w1 = jnp.pad(params["w1"].reshape(81, 64).T, ((0, 0), (0, 128 - 81)))
    b1 = params["b1"].reshape(64, 1)
    w2 = params["w2"].reshape(64, 32).T                            # (32, 64)
    b2 = params["b2"].reshape(32, 1)
    w3 = jnp.pad(params["w3"][:, :, :, 0].reshape(25, 32), ((0, 7), (0, 0)))
    b3 = params["b3"].reshape(1)

    kernel = functools.partial(_srcnn_kernel, H=H, W=W, Wf=Wf)

    out_flat = pl.pallas_call(
        kernel,
        out_shape=jax.ShapeDtypeStruct((N, 1, Mo), x_nchw.dtype),
        grid=(N,),
        in_specs=[
            pl.BlockSpec((1, 1, Lx), lambda n: (n, 0, 0)),         # framed input
            pl.BlockSpec((1, Me), lambda n: (0, 0)),               # interior mask
            pl.BlockSpec((64, 128), lambda n: (0, 0)),             # w1 (K->128)
            pl.BlockSpec((64, 1), lambda n: (0, 0)),               # b1
            pl.BlockSpec((32, 64), lambda n: (0, 0)),              # w2
            pl.BlockSpec((32, 1), lambda n: (0, 0)),               # b2
            pl.BlockSpec((32, 32), lambda n: (0, 0)),              # w3 (taps->32)
            pl.BlockSpec(memory_space=pltpu.MemorySpace.SMEM),     # b3 scalar
        ],
        out_specs=pl.BlockSpec((1, 1, Mo), lambda n: (n, 0, 0)),
        scratch_shapes=[
            pltpu.VMEM((128, Me), jnp.float32),   # conv1 im2col patches
            pltpu.VMEM((64, Me), jnp.float32),    # y1 (channel-major)
            pltpu.VMEM((32, Me), jnp.float32),    # y2 (channel-major)
            pltpu.VMEM((32, Lz), jnp.float32),    # w3-contracted tap planes
        ],
        compiler_params=pltpu.CompilerParams(
            dimension_semantics=("parallel",)),
    )(xflat, mask, w1, b1, w2, b2, w3, b3)

    out = out_flat.reshape(N, H, Wf)[:, :, :W]    # strip frame-padding columns
    return out[:, None, :, :]                     # NCHW, C=1


def init_srcnn_params(key):
    """Deterministic synthetic parameters with the SRCNN shapes (HWIO layout)."""
    k1, k2, k3, k4, k5, k6 = jax.random.split(key, 6)
    return {
        "w1": jax.random.normal(k1, (9, 9, 1, 64), jnp.float32) * 0.05,
        "b1": jax.random.normal(k2, (64,), jnp.float32) * 0.05,
        "w2": jax.random.normal(k3, (1, 1, 64, 32), jnp.float32) * 0.05,
        "b2": jax.random.normal(k4, (32,), jnp.float32) * 0.05,
        "w3": jax.random.normal(k5, (5, 5, 32, 1), jnp.float32) * 0.05,
        "b3": jax.random.normal(k6, (1,), jnp.float32) * 0.05,
    }


def _reference_forward(x_nchw, params):
    """Pure-JAX reference (lax conv) for validation."""
    x = jnp.transpose(x_nchw, (0, 2, 3, 1))
    dn = ("NHWC", "HWIO", "NHWC")

    def conv(x, w, b, pad):
        y = lax.conv_general_dilated(x, w, (1, 1), [(pad, pad), (pad, pad)],
                                     dimension_numbers=dn)
        return y + b

    x = jax.nn.relu(conv(x, params["w1"], params["b1"], 4))
    x = jax.nn.relu(conv(x, params["w2"], params["b2"], 2))
    x = conv(x, params["w3"], params["b3"], 0)
    return jnp.transpose(x, (0, 3, 1, 2))


if __name__ == "__main__":
    key = jax.random.PRNGKey(0)
    kp, kx = jax.random.split(key)
    params = init_srcnn_params(kp)

    # SRCNN expects single-channel (e.g. Y-channel) images: N=2, C=1, H=W=16.
    x = jax.random.normal(kx, (2, 1, 16, 16), jnp.float32)

    out = jax.block_until_ready(srcnn_forward(x, params))
    assert out.shape == (2, 1, 16, 16), out.shape

    ref = jax.block_until_ready(_reference_forward(x, params))
    assert jnp.allclose(out, ref, atol=1e-4, rtol=1e-4), float(jnp.abs(out - ref).max())

    print("KERNEL_OK")
</pallas_src>

<mosaic_0001>
module attributes {stable_mosaic.version = 11 : i64} {
  func.func @_srcnn_kernel(%arg0: i32, %arg1: memref<1x1x1024xf32, #tpu.memory_space<vmem>>, %arg2: memref<1x640xf32, #tpu.memory_space<vmem>>, %arg3: memref<64x128xf32, #tpu.memory_space<vmem>>, %arg4: memref<64x1xf32, #tpu.memory_space<vmem>>, %arg5: memref<32x64xf32, #tpu.memory_space<vmem>>, %arg6: memref<32x1xf32, #tpu.memory_space<vmem>>, %arg7: memref<32x32xf32, #tpu.memory_space<vmem>>, %arg8: memref<1xf32, #tpu.memory_space<smem>>, %arg9: memref<1x1x512xf32, #tpu.memory_space<vmem>>, %arg10: memref<128x640xf32, #tpu.memory_space<vmem>>, %arg11: memref<64x640xf32, #tpu.memory_space<vmem>>, %arg12: memref<32x640xf32, #tpu.memory_space<vmem>>, %arg13: memref<32x896xf32, #tpu.memory_space<vmem>>) attributes {dimension_semantics = [#tpu.dimension_semantics<parallel>], iteration_bounds = array<i64: 2>, scalar_prefetch = 0 : i64, scratch_operands = 4 : i64, tpu.core_type = #tpu.core_type<tc>, window_params = [{transform_indices = @transform_0, window_bounds = array<i64: 1, 1, 1024>}, {pipeline_mode = #tpu.pipeline_mode<synchronous>, transform_indices = @transform_1, window_bounds = array<i64: 1, 640>}, {pipeline_mode = #tpu.pipeline_mode<synchronous>, transform_indices = @transform_2, window_bounds = array<i64: 64, 128>}, {pipeline_mode = #tpu.pipeline_mode<synchronous>, transform_indices = @transform_3, window_bounds = array<i64: 64, 1>}, {pipeline_mode = #tpu.pipeline_mode<synchronous>, transform_indices = @transform_4, window_bounds = array<i64: 32, 64>}, {pipeline_mode = #tpu.pipeline_mode<synchronous>, transform_indices = @transform_5, window_bounds = array<i64: 32, 1>}, {pipeline_mode = #tpu.pipeline_mode<synchronous>, transform_indices = @transform_6, window_bounds = array<i64: 32, 32>}, {transform_indices = @transform_7, window_bounds = array<i64: 1>}, {transform_indices = @transform_8, window_bounds = array<i64: 1, 1, 512>}]} {
    %cst = arith.constant 0.000000e+00 : f32
    %0 = vector.broadcast %cst : f32 to vector<48x640xf32>
    %c80 = arith.constant 80 : index
    %c0 = arith.constant 0 : index
    %1 = vector.load %arg10[%c80, %c0] : memref<128x640xf32, #tpu.memory_space<vmem>>, vector<48x640xf32>
    tpu.vector_store %arg10[%c80, %c0], %0 {strides = array<i32>} : memref<128x640xf32, #tpu.memory_space<vmem>>, vector<48x640xf32>,
    %c0_0 = arith.constant 0 : index
    %c0_1 = arith.constant 0 : index
    %c0_2 = arith.constant 0 : index
    %2 = vector.load %arg1[%c0_0, %c0_1, %c0_2] : memref<1x1x1024xf32, #tpu.memory_space<vmem>>, vector<1x1x640xf32>
    %3 = vector.shape_cast %2 : vector<1x1x640xf32> to vector<1x640xf32>
    %c0_3 = arith.constant 0 : index
    %c0_4 = arith.constant 0 : index
    %4 = vector.load %arg10[%c0_3, %c0_4] : memref<128x640xf32, #tpu.memory_space<vmem>>, vector<1x640xf32>
    tpu.vector_store %arg10[%c0_3, %c0_4], %3 {strides = array<i32>} : memref<128x640xf32, #tpu.memory_space<vmem>>, vector<1x640xf32>,
    %c0_5 = arith.constant 0 : index
    %c0_6 = arith.constant 0 : index
    %c1 = arith.constant 1 : index
    %5 = vector.load %arg1[%c0_5, %c0_6, %c1] : memref<1x1x1024xf32, #tpu.memory_space<vmem>>, vector<1x1x640xf32>
    %6 = vector.shape_cast %5 : vector<1x1x640xf32> to vector<1x640xf32>
    %c1_7 = arith.constant 1 : index
    %c0_8 = arith.constant 0 : index
    %7 = vector.load %arg10[%c1_7, %c0_8] : memref<128x640xf32, #tpu.memory_space<vmem>>, vector<1x640xf32>
    tpu.vector_store %arg10[%c1_7, %c0_8], %6 {strides = array<i32>} : memref<128x640xf32, #tpu.memory_space<vmem>>, vector<1x640xf32>,
    %c0_9 = arith.constant 0 : index
    %c0_10 = arith.constant 0 : index
    %c2 = arith.constant 2 : index
    %8 = vector.load %arg1[%c0_9, %c0_10, %c2] : memref<1x1x1024xf32, #tpu.memory_space<vmem>>, vector<1x1x640xf32>
    %9 = vector.shape_cast %8 : vector<1x1x640xf32> to vector<1x640xf32>
    %c2_11 = arith.constant 2 : index
    %c0_12 = arith.constant 0 : index
    %10 = vector.load %arg10[%c2_11, %c0_12] : memref<128x640xf32, #tpu.memory_space<vmem>>, vector<1x640xf32>
    tpu.vector_store %arg10[%c2_11, %c0_12], %9 {strides = array<i32>} : memref<128x640xf32, #tpu.memory_space<vmem>>, vector<1x640xf32>,
    %c0_13 = arith.constant 0 : index
    %c0_14 = arith.constant 0 : index
    %c3 = arith.constant 3 : index
    %11 = vector.load %arg1[%c0_13, %c0_14, %c3] : memref<1x1x1024xf32, #tpu.memory_space<vmem>>, vector<1x1x640xf32>
    %12 = vector.shape_cast %11 : vector<1x1x640xf32> to vector<1x640xf32>
    %c3_15 = arith.constant 3 : index
    %c0_16 = arith.constant 0 : index
    %13 = vector.load %arg10[%c3_15, %c0_16] : memref<128x640xf32, #tpu.memory_space<vmem>>, vector<1x640xf32>
    tpu.vector_store %arg10[%c3_15, %c0_16], %12 {strides = array<i32>} : memref<128x640xf32, #tpu.memory_space<vmem>>, vector<1x640xf32>,
    %c0_17 = arith.constant 0 : index
    %c0_18 = arith.constant 0 : index
    %c4 = arith.constant 4 : index
    %14 = vector.load %arg1[%c0_17, %c0_18, %c4] : memref<1x1x1024xf32, #tpu.memory_space<vmem>>, vector<1x1x640xf32>
    %15 = vector.shape_cast %14 : vector<1x1x640xf32> to vector<1x640xf32>
    %c4_19 = arith.constant 4 : index
    %c0_20 = arith.constant 0 : index
    %16 = vector.load %arg10[%c4_19, %c0_20] : memref<128x640xf32, #tpu.memory_space<vmem>>, vector<1x640xf32>
    tpu.vector_store %arg10[%c4_19, %c0_20], %15 {strides = array<i32>} : memref<128x640xf32, #tpu.memory_space<vmem>>, vector<1x640xf32>,
    %c0_21 = arith.constant 0 : index
    %c0_22 = arith.constant 0 : index
    %c5 = arith.constant 5 : index
    %17 = vector.load %arg1[%c0_21, %c0_22, %c5] : memref<1x1x1024xf32, #tpu.memory_space<vmem>>, vector<1x1x640xf32>
    %18 = vector.shape_cast %17 : vector<1x1x640xf32> to vector<1x640xf32>
    %c5_23 = arith.constant 5 : index
    %c0_24 = arith.constant 0 : index
    %19 = vector.load %arg10[%c5_23, %c0_24] : memref<128x640xf32, #tpu.memory_space<vmem>>, vector<1x640xf32>
    tpu.vector_store %arg10[%c5_23, %c0_24], %18 {strides = array<i32>} : memref<128x640xf32, #tpu.memory_space<vmem>>, vector<1x640xf32>,
    %c0_25 = arith.constant 0 : index
    %c0_26 = arith.constant 0 : index
    %c6 = arith.constant 6 : index
    %20 = vector.load %arg1[%c0_25, %c0_26, %c6] : memref<1x1x1024xf32, #tpu.memory_space<vmem>>, vector<1x1x640xf32>
    %21 = vector.shape_cast %20 : vector<1x1x640xf32> to vector<1x640xf32>
    %c6_27 = arith.constant 6 : index
    %c0_28 = arith.constant 0 : index
    %22 = vector.load %arg10[%c6_27, %c0_28] : memref<128x640xf32, #tpu.memory_space<vmem>>, vector<1x640xf32>
    tpu.vector_store %arg10[%c6_27, %c0_28], %21 {strides = array<i32>} : memref<128x640xf32, #tpu.memory_space<vmem>>, vector<1x640xf32>,
    %c0_29 = arith.constant 0 : index
    %c0_30 = arith.constant 0 : index
    %c7 = arith.constant 7 : index
    %23 = vector.load %arg1[%c0_29, %c0_30, %c7] : memref<1x1x1024xf32, #tpu.memory_space<vmem>>, vector<1x1x640xf32>
    %24 = vector.shape_cast %23 : vector<1x1x640xf32> to vector<1x640xf32>
    %c7_31 = arith.constant 7 : index
    %c0_32 = arith.constant 0 : index
    %25 = vector.load %arg10[%c7_31, %c0_32] : memref<128x640xf32, #tpu.memory_space<vmem>>, vector<1x640xf32>
    tpu.vector_store %arg10[%c7_31, %c0_32], %24 {strides = array<i32>} : memref<128x640xf32, #tpu.memory_space<vmem>>, vector<1x640xf32>,
    %c0_33 = arith.constant 0 : index
    %c0_34 = arith.constant 0 : index
    %c8 = arith.constant 8 : index
    %26 = vector.load %arg1[%c0_33, %c0_34, %c8] : memref<1x1x1024xf32, #tpu.memory_space<vmem>>, vector<1x1x640xf32>
    %27 = vector.shape_cast %26 : vector<1x1x640xf32> to vector<1x640xf32>
    %c8_35 = arith.constant 8 : index
    %c0_36 = arith.constant 0 : index
    %28 = vector.load %arg10[%c8_35, %c0_36] : memref<128x640xf32, #tpu.memory_space<vmem>>, vector<1x640xf32>
    tpu.vector_store %arg10[%c8_35, %c0_36], %27 {strides = array<i32>} : memref<128x640xf32, #tpu.memory_space<vmem>>, vector<1x640xf32>,
    %c0_37 = arith.constant 0 : index
    %c0_38 = arith.constant 0 : index
    %c32 = arith.constant 32 : index
    %29 = vector.load %arg1[%c0_37, %c0_38, %c32] : memref<1x1x1024xf32, #tpu.memory_space<vmem>>, vector<1x1x640xf32>
    %30 = vector.shape_cast %29 : vector<1x1x640xf32> to vector<1x640xf32>
    %c9 = arith.constant 9 : index
    %c0_39 = arith.constant 0 : index
    %31 = vector.load %arg10[%c9, %c0_39] : memref<128x640xf32, #tpu.memory_space<vmem>>, vector<1x640xf32>
    tpu.vector_store %arg10[%c9, %c0_39], %30 {strides = array<i32>} : memref<128x640xf32, #tpu.memory_space<vmem>>, vector<1x640xf32>,
    %c0_40 = arith.constant 0 : index
    %c0_41 = arith.constant 0 : index
    %c33 = arith.constant 33 : index
    %32 = vector.load %arg1[%c0_40, %c0_41, %c33] : memref<1x1x1024xf32, #tpu.memory_space<vmem>>, vector<1x1x640xf32>
    %33 = vector.shape_cast %32 : vector<1x1x640xf32> to vector<1x640xf32>
    %c10 = arith.constant 10 : index
    %c0_42 = arith.constant 0 : index
    %34 = vector.load %arg10[%c10, %c0_42] : memref<128x640xf32, #tpu.memory_space<vmem>>, vector<1x640xf32>
    tpu.vector_store %arg10[%c10, %c0_42], %33 {strides = array<i32>} : memref<128x640xf32, #tpu.memory_space<vmem>>, vector<1x640xf32>,
    %c0_43 = arith.constant 0 : index
    %c0_44 = arith.constant 0 : index
    %c34 = arith.constant 34 : index
    %35 = vector.load %arg1[%c0_43, %c0_44, %c34] : memref<1x1x1024xf32, #tpu.memory_space<vmem>>, vector<1x1x640xf32>
    %36 = vector.shape_cast %35 : vector<1x1x640xf32> to vector<1x640xf32>
    %c11 = arith.constant 11 : index
    %c0_45 = arith.constant 0 : index
    %37 = vector.load %arg10[%c11, %c0_45] : memref<128x640xf32, #tpu.memory_space<vmem>>, vector<1x640xf32>
    tpu.vector_store %arg10[%c11, %c0_45], %36 {strides = array<i32>} : memref<128x640xf32, #tpu.memory_space<vmem>>, vector<1x640xf32>,
    %c0_46 = arith.constant 0 : index
    %c0_47 = arith.constant 0 : index
    %c35 = arith.constant 35 : index
    %38 = vector.load %arg1[%c0_46, %c0_47, %c35] : memref<1x1x1024xf32, #tpu.memory_space<vmem>>, vector<1x1x640xf32>
    %39 = vector.shape_cast %38 : vector<1x1x640xf32> to vector<1x640xf32>
    %c12 = arith.constant 12 : index
    %c0_48 = arith.constant 0 : index
    %40 = vector.load %arg10[%c12, %c0_48] : memref<128x640xf32, #tpu.memory_space<vmem>>, vector<1x640xf32>
    tpu.vector_store %arg10[%c12, %c0_48], %39 {strides = array<i32>} : memref<128x640xf32, #tpu.memory_space<vmem>>, vector<1x640xf32>,
    %c0_49 = arith.constant 0 : index
    %c0_50 = arith.constant 0 : index
    %c36 = arith.constant 36 : index
    %41 = vector.load %arg1[%c0_49, %c0_50, %c36] : memref<1x1x1024xf32, #tpu.memory_space<vmem>>, vector<1x1x640xf32>
    %42 = vector.shape_cast %41 : vector<1x1x640xf32> to vector<1x640xf32>
    %c13 = arith.constant 13 : index
    %c0_51 = arith.constant 0 : index
    %43 = vector.load %arg10[%c13, %c0_51] : memref<128x640xf32, #tpu.memory_space<vmem>>, vector<1x640xf32>
    tpu.vector_store %arg10[%c13, %c0_51], %42 {strides = array<i32>} : memref<128x640xf32, #tpu.memory_space<vmem>>, vector<1x640xf32>,
    %c0_52 = arith.constant 0 : index
    %c0_53 = arith.constant 0 : index
    %c37 = arith.constant 37 : index
    %44 = vector.load %arg1[%c0_52, %c0_53, %c37] : memref<1x1x1024xf32, #tpu.memory_space<vmem>>, vector<1x1x640xf32>
    %45 = vector.shape_cast %44 : vector<1x1x640xf32> to vector<1x640xf32>
    %c14 = arith.constant 14 : index
    %c0_54 = arith.constant 0 : index
    %46 = vector.load %arg10[%c14, %c0_54] : memref<128x640xf32, #tpu.memory_space<vmem>>, vector<1x640xf32>
    tpu.vector_store %arg10[%c14, %c0_54], %45 {strides = array<i32>} : memref<128x640xf32, #tpu.memory_space<vmem>>, vector<1x640xf32>,
    %c0_55 = arith.constant 0 : index
    %c0_56 = arith.constant 0 : index
    %c38 = arith.constant 38 : index
    %47 = vector.load %arg1[%c0_55, %c0_56, %c38] : memref<1x1x1024xf32, #tpu.memory_space<vmem>>, vector<1x1x640xf32>
    %48 = vector.shape_cast %47 : vector<1x1x640xf32> to vector<1x640xf32>
    %c15 = arith.constant 15 : index
    %c0_57 = arith.constant 0 : index
    %49 = vector.load %arg10[%c15, %c0_57] : memref<128x640xf32, #tpu.memory_space<vmem>>, vector<1x640xf32>
    tpu.vector_store %arg10[%c15, %c0_57], %48 {strides = array<i32>} : memref<128x640xf32, #tpu.memory_space<vmem>>, vector<1x640xf32>,
    %c0_58 = arith.constant 0 : index
    %c0_59 = arith.constant 0 : index
    %c39 = arith.constant 39 : index
    %50 = vector.load %arg1[%c0_58, %c0_59, %c39] : memref<1x1x1024xf32, #tpu.memory_space<vmem>>, vector<1x1x640xf32>
    %51 = vector.shape_cast %50 : vector<1x1x640xf32> to vector<1x640xf32>
    %c16 = arith.constant 16 : index
    %c0_60 = arith.constant 0 : index
    %52 = vector.load %arg10[%c16, %c0_60] : memref<128x640xf32, #tpu.memory_space<vmem>>, vector<1x640xf32>
    tpu.vector_store %arg10[%c16, %c0_60], %51 {strides = array<i32>} : memref<128x640xf32, #tpu.memory_space<vmem>>, vector<1x640xf32>,
    %c0_61 = arith.constant 0 : index
    %c0_62 = arith.constant 0 : index
    %c40 = arith.constant 40 : index
    %53 = vector.load %arg1[%c0_61, %c0_62, %c40] : memref<1x1x1024xf32, #tpu.memory_space<vmem>>, vector<1x1x640xf32>
    %54 = vector.shape_cast %53 : vector<1x1x640xf32> to vector<1x640xf32>
    %c17 = arith.constant 17 : index
    %c0_63 = arith.constant 0 : index
    %55 = vector.load %arg10[%c17, %c0_63] : memref<128x640xf32, #tpu.memory_space<vmem>>, vector<1x640xf32>
    tpu.vector_store %arg10[%c17, %c0_63], %54 {strides = array<i32>} : memref<128x640xf32, #tpu.memory_space<vmem>>, vector<1x640xf32>,
    %c0_64 = arith.constant 0 : index
    %c0_65 = arith.constant 0 : index
    %c64 = arith.constant 64 : index
    %56 = vector.load %arg1[%c0_64, %c0_65, %c64] : memref<1x1x1024xf32, #tpu.memory_space<vmem>>, vector<1x1x640xf32>
    %57 = vector.shape_cast %56 : vector<1x1x640xf32> to vector<1x640xf32>
    %c18 = arith.constant 18 : index
    %c0_66 = arith.constant 0 : index
    %58 = vector.load %arg10[%c18, %c0_66] : memref<128x640xf32, #tpu.memory_space<vmem>>, vector<1x640xf32>
    tpu.vector_store %arg10[%c18, %c0_66], %57 {strides = array<i32>} : memref<128x640xf32, #tpu.memory_space<vmem>>, vector<1x640xf32>,
    %c0_67 = arith.constant 0 : index
    %c0_68 = arith.constant 0 : index
    %c65 = arith.constant 65 : index
    %59 = vector.load %arg1[%c0_67, %c0_68, %c65] : memref<1x1x1024xf32, #tpu.memory_space<vmem>>, vector<1x1x640xf32>
    %60 = vector.shape_cast %59 : vector<1x1x640xf32> to vector<1x640xf32>
    %c19 = arith.constant 19 : index
    %c0_69 = arith.constant 0 : index
    %61 = vector.load %arg10[%c19, %c0_69] : memref<128x640xf32, #tpu.memory_space<vmem>>, vector<1x640xf32>
    tpu.vector_store %arg10[%c19, %c0_69], %60 {strides = array<i32>} : memref<128x640xf32, #tpu.memory_space<vmem>>, vector<1x640xf32>,
    %c0_70 = arith.constant 0 : index
    %c0_71 = arith.constant 0 : index
    %c66 = arith.constant 66 : index
    %62 = vector.load %arg1[%c0_70, %c0_71, %c66] : memref<1x1x1024xf32, #tpu.memory_space<vmem>>, vector<1x1x640xf32>
    %63 = vector.shape_cast %62 : vector<1x1x640xf32> to vector<1x640xf32>
    %c20 = arith.constant 20 : index
    %c0_72 = arith.constant 0 : index
    %64 = vector.load %arg10[%c20, %c0_72] : memref<128x640xf32, #tpu.memory_space<vmem>>, vector<1x640xf32>
    tpu.vector_store %arg10[%c20, %c0_72], %63 {strides = array<i32>} : memref<128x640xf32, #tpu.memory_space<vmem>>, vector<1x640xf32>,
    %c0_73 = arith.constant 0 : index
    %c0_74 = arith.constant 0 : index
    %c67 = arith.constant 67 : index
    %65 = vector.load %arg1[%c0_73, %c0_74, %c67] : memref<1x1x1024xf32, #tpu.memory_space<vmem>>, vector<1x1x640xf32>
    %66 = vector.shape_cast %65 : vector<1x1x640xf32> to vector<1x640xf32>
    %c21 = arith.constant 21 : index
    %c0_75 = arith.constant 0 : index
    %67 = vector.load %arg10[%c21, %c0_75] : memref<128x640xf32, #tpu.memory_space<vmem>>, vector<1x640xf32>
    tpu.vector_store %arg10[%c21, %c0_75], %66 {strides = array<i32>} : memref<128x640xf32, #tpu.memory_space<vmem>>, vector<1x640xf32>,
    %c0_76 = arith.constant 0 : index
    %c0_77 = arith.constant 0 : index
    %c68 = arith.constant 68 : index
    %68 = vector.load %arg1[%c0_76, %c0_77, %c68] : memref<1x1x1024xf32, #tpu.memory_space<vmem>>, vector<1x1x640xf32>
    %69 = vector.shape_cast %68 : vector<1x1x640xf32> to vector<1x640xf32>
    %c22 = arith.constant 22 : index
    %c0_78 = arith.constant 0 : index
    %70 = vector.load %arg10[%c22, %c0_78] : memref<128x640xf32, #tpu.memory_space<vmem>>, vector<1x640xf32>
    tpu.vector_store %arg10[%c22, %c0_78], %69 {strides = array<i32>} : memref<128x640xf32, #tpu.memory_space<vmem>>, vector<1x640xf32>,
    %c0_79 = arith.constant 0 : index
    %c0_80 = arith.constant 0 : index
    %c69 = arith.constant 69 : index
    %71 = vector.load %arg1[%c0_79, %c0_80, %c69] : memref<1x1x1024xf32, #tpu.memory_space<vmem>>, vector<1x1x640xf32>
    %72 = vector.shape_cast %71 : vector<1x1x640xf32> to vector<1x640xf32>
    %c23 = arith.constant 23 : index
    %c0_81 = arith.constant 0 : index
    %73 = vector.load %arg10[%c23, %c0_81] : memref<128x640xf32, #tpu.memory_space<vmem>>, vector<1x640xf32>
    tpu.vector_store %arg10[%c23, %c0_81], %72 {strides = array<i32>} : memref<128x640xf32, #tpu.memory_space<vmem>>, vector<1x640xf32>,
    %c0_82 = arith.constant 0 : index
    %c0_83 = arith.constant 0 : index
    %c70 = arith.constant 70 : index
    %74 = vector.load %arg1[%c0_82, %c0_83, %c70] : memref<1x1x1024xf32, #tpu.memory_space<vmem>>, vector<1x1x640xf32>
    %75 = vector.shape_cast %74 : vector<1x1x640xf32> to vector<1x640xf32>
    %c24 = arith.constant 24 : index
    %c0_84 = arith.constant 0 : index
    %76 = vector.load %arg10[%c24, %c0_84] : memref<128x640xf32, #tpu.memory_space<vmem>>, vector<1x640xf32>
    tpu.vector_store %arg10[%c24, %c0_84], %75 {strides = array<i32>} : memref<128x640xf32, #tpu.memory_space<vmem>>, vector<1x640xf32>,
    %c0_85 = arith.constant 0 : index
    %c0_86 = arith.constant 0 : index
    %c71 = arith.constant 71 : index
    %77 = vector.load %arg1[%c0_85, %c0_86, %c71] : memref<1x1x1024xf32, #tpu.memory_space<vmem>>, vector<1x1x640xf32>
    %78 = vector.shape_cast %77 : vector<1x1x640xf32> to vector<1x640xf32>
    %c25 = arith.constant 25 : index
    %c0_87 = arith.constant 0 : index
    %79 = vector.load %arg10[%c25, %c0_87] : memref<128x640xf32, #tpu.memory_space<vmem>>, vector<1x640xf32>
    tpu.vector_store %arg10[%c25, %c0_87], %78 {strides = array<i32>} : memref<128x640xf32, #tpu.memory_space<vmem>>, vector<1x640xf32>,
    %c0_88 = arith.constant 0 : index
    %c0_89 = arith.constant 0 : index
    %c72 = arith.constant 72 : index
    %80 = vector.load %arg1[%c0_88, %c0_89, %c72] : memref<1x1x1024xf32, #tpu.memory_space<vmem>>, vector<1x1x640xf32>
    %81 = vector.shape_cast %80 : vector<1x1x640xf32> to vector<1x640xf32>
    %c26 = arith.constant 26 : index
    %c0_90 = arith.constant 0 : index
    %82 = vector.load %arg10[%c26, %c0_90] : memref<128x640xf32, #tpu.memory_space<vmem>>, vector<1x640xf32>
    tpu.vector_store %arg10[%c26, %c0_90], %81 {strides = array<i32>} : memref<128x640xf32, #tpu.memory_space<vmem>>, vector<1x640xf32>,
    %c0_91 = arith.constant 0 : index
    %c0_92 = arith.constant 0 : index
    %c96 = arith.constant 96 : index
    %83 = vector.load %arg1[%c0_91, %c0_92, %c96] : memref<1x1x1024xf32, #tpu.memory_space<vmem>>, vector<1x1x640xf32>
    %84 = vector.shape_cast %83 : vector<1x1x640xf32> to vector<1x640xf32>
    %c27 = arith.constant 27 : index
    %c0_93 = arith.constant 0 : index
    %85 = vector.load %arg10[%c27, %c0_93] : memref<128x640xf32, #tpu.memory_space<vmem>>, vector<1x640xf32>
    tpu.vector_store %arg10[%c27, %c0_93], %84 {strides = array<i32>} : memref<128x640xf32, #tpu.memory_space<vmem>>, vector<1x640xf32>,
    %c0_94 = arith.constant 0 : index
    %c0_95 = arith.constant 0 : index
    %c97 = arith.constant 97 : index
    %86 = vector.load %arg1[%c0_94, %c0_95, %c97] : memref<1x1x1024xf32, #tpu.memory_space<vmem>>, vector<1x1x640xf32>
    %87 = vector.shape_cast %86 : vector<1x1x640xf32> to vector<1x640xf32>
    %c28 = arith.constant 28 : index
    %c0_96 = arith.constant 0 : index
    %88 = vector.load %arg10[%c28, %c0_96] : memref<128x640xf32, #tpu.memory_space<vmem>>, vector<1x640xf32>
    tpu.vector_store %arg10[%c28, %c0_96], %87 {strides = array<i32>} : memref<128x640xf32, #tpu.memory_space<vmem>>, vector<1x640xf32>,
    %c0_97 = arith.constant 0 : index
    %c0_98 = arith.constant 0 : index
    %c98 = arith.constant 98 : index
    %89 = vector.load %arg1[%c0_97, %c0_98, %c98] : memref<1x1x1024xf32, #tpu.memory_space<vmem>>, vector<1x1x640xf32>
    %90 = vector.shape_cast %89 : vector<1x1x640xf32> to vector<1x640xf32>
    %c29 = arith.constant 29 : index
    %c0_99 = arith.constant 0 : index
    %91 = vector.load %arg10[%c29, %c0_99] : memref<128x640xf32, #tpu.memory_space<vmem>>, vector<1x640xf32>
    tpu.vector_store %arg10[%c29, %c0_99], %90 {strides = array<i32>} : memref<128x640xf32, #tpu.memory_space<vmem>>, vector<1x640xf32>,
    %c0_100 = arith.constant 0 : index
    %c0_101 = arith.constant 0 : index
    %c99 = arith.constant 99 : index
    %92 = vector.load %arg1[%c0_100, %c0_101, %c99] : memref<1x1x1024xf32, #tpu.memory_space<vmem>>, vector<1x1x640xf32>
    %93 = vector.shape_cast %92 : vector<1x1x640xf32> to vector<1x640xf32>
    %c30 = arith.constant 30 : index
    %c0_102 = arith.constant 0 : index
    %94 = vector.load %arg10[%c30, %c0_102] : memref<128x640xf32, #tpu.memory_space<vmem>>, vector<1x640xf32>
    tpu.vector_store %arg10[%c30, %c0_102], %93 {strides = array<i32>} : memref<128x640xf32, #tpu.memory_space<vmem>>, vector<1x640xf32>,
    %c0_103 = arith.constant 0 : index
    %c0_104 = arith.constant 0 : index
    %c100 = arith.constant 100 : index
    %95 = vector.load %arg1[%c0_103, %c0_104, %c100] : memref<1x1x1024xf32, #tpu.memory_space<vmem>>, vector<1x1x640xf32>
    %96 = vector.shape_cast %95 : vector<1x1x640xf32> to vector<1x640xf32>
    %c31 = arith.constant 31 : index
    %c0_105 = arith.constant 0 : index
    %97 = vector.load %arg10[%c31, %c0_105] : memref<128x640xf32, #tpu.memory_space<vmem>>, vector<1x640xf32>
    tpu.vector_store %arg10[%c31, %c0_105], %96 {strides = array<i32>} : memref<128x640xf32, #tpu.memory_space<vmem>>, vector<1x640xf32>,
    %c0_106 = arith.constant 0 : index
    %c0_107 = arith.constant 0 : index
    %c101 = arith.constant 101 : index
    %98 = vector.load %arg1[%c0_106, %c0_107, %c101] : memref<1x1x1024xf32, #tpu.memory_space<vmem>>, vector<1x1x640xf32>
    %99 = vector.shape_cast %98 : vector<1x1x640xf32> to vector<1x640xf32>
    %c32_108 = arith.constant 32 : index
    %c0_109 = arith.constant 0 : index
    %100 = vector.load %arg10[%c32_108, %c0_109] : memref<128x640xf32, #tpu.memory_space<vmem>>, vector<1x640xf32>
    tpu.vector_store %arg10[%c32_108, %c0_109], %99 {strides = array<i32>} : memref<128x640xf32, #tpu.memory_space<vmem>>, vector<1x640xf32>,
    %c0_110 = arith.constant 0 : index
    %c0_111 = arith.constant 0 : index
    %c102 = arith.constant 102 : index
    %101 = vector.load %arg1[%c0_110, %c0_111, %c102] : memref<1x1x1024xf32, #tpu.memory_space<vmem>>, vector<1x1x640xf32>
    %102 = vector.shape_cast %101 : vector<1x1x640xf32> to vector<1x640xf32>
    %c33_112 = arith.constant 33 : index
    %c0_113 = arith.constant 0 : index
    %103 = vector.load %arg10[%c33_112, %c0_113] : memref<128x640xf32, #tpu.memory_space<vmem>>, vector<1x640xf32>
    tpu.vector_store %arg10[%c33_112, %c0_113], %102 {strides = array<i32>} : memref<128x640xf32, #tpu.memory_space<vmem>>, vector<1x640xf32>,
    %c0_114 = arith.constant 0 : index
    %c0_115 = arith.constant 0 : index
    %c103 = arith.constant 103 : index
    %104 = vector.load %arg1[%c0_114, %c0_115, %c103] : memref<1x1x1024xf32, #tpu.memory_space<vmem>>, vector<1x1x640xf32>
    %105 = vector.shape_cast %104 : vector<1x1x640xf32> to vector<1x640xf32>
    %c34_116 = arith.constant 34 : index
    %c0_117 = arith.constant 0 : index
    %106 = vector.load %arg10[%c34_116, %c0_117] : memref<128x640xf32, #tpu.memory_space<vmem>>, vector<1x640xf32>
    tpu.vector_store %arg10[%c34_116, %c0_117], %105 {strides = array<i32>} : memref<128x640xf32, #tpu.memory_space<vmem>>, vector<1x640xf32>,
    %c0_118 = arith.constant 0 : index
    %c0_119 = arith.constant 0 : index
    %c104 = arith.constant 104 : index
    %107 = vector.load %arg1[%c0_118, %c0_119, %c104] : memref<1x1x1024xf32, #tpu.memory_space<vmem>>, vector<1x1x640xf32>
    %108 = vector.shape_cast %107 : vector<1x1x640xf32> to vector<1x640xf32>
    %c35_120 = arith.constant 35 : index
    %c0_121 = arith.constant 0 : index
    %109 = vector.load %arg10[%c35_120, %c0_121] : memref<128x640xf32, #tpu.memory_space<vmem>>, vector<1x640xf32>
    tpu.vector_store %arg10[%c35_120, %c0_121], %108 {strides = array<i32>} : memref<128x640xf32, #tpu.memory_space<vmem>>, vector<1x640xf32>,
    %c0_122 = arith.constant 0 : index
    %c0_123 = arith.constant 0 : index
    %c128 = arith.constant 128 : index
    %110 = vector.load %arg1[%c0_122, %c0_123, %c128] : memref<1x1x1024xf32, #tpu.memory_space<vmem>>, vector<1x1x640xf32>
    %111 = vector.shape_cast %110 : vector<1x1x640xf32> to vector<1x640xf32>
    %c36_124 = arith.constant 36 : index
    %c0_125 = arith.constant 0 : index
    %112 = vector.load %arg10[%c36_124, %c0_125] : memref<128x640xf32, #tpu.memory_space<vmem>>, vector<1x640xf32>
    tpu.vector_store %arg10[%c36_124, %c0_125], %111 {strides = array<i32>} : memref<128x640xf32, #tpu.memory_space<vmem>>, vector<1x640xf32>,
    %c0_126 = arith.constant 0 : index
    %c0_127 = arith.constant 0 : index
    %c129 = arith.constant 129 : index
    %113 = vector.load %arg1[%c0_126, %c0_127, %c129] : memref<1x1x1024xf32, #tpu.memory_space<vmem>>, vector<1x1x640xf32>
    %114 = vector.shape_cast %113 : vector<1x1x640xf32> to vector<1x640xf32>
    %c37_128 = arith.constant 37 : index
    %c0_129 = arith.constant 0 : index
    %115 = vector.load %arg10[%c37_128, %c0_129] : memref<128x640xf32, #tpu.memory_space<vmem>>, vector<1x640xf32>
    tpu.vector_store %arg10[%c37_128, %c0_129], %114 {strides = array<i32>} : memref<128x640xf32, #tpu.memory_space<vmem>>, vector<1x640xf32>,
    %c0_130 = arith.constant 0 : index
    %c0_131 = arith.constant 0 : index
    %c130 = arith.constant 130 : index
    %116 = vector.load %arg1[%c0_130, %c0_131, %c130] : memref<1x1x1024xf32, #tpu.memory_space<vmem>>, vector<1x1x640xf32>
    %117 = vector.shape_cast %116 : vector<1x1x640xf32> to vector<1x640xf32>
    %c38_132 = arith.constant 38 : index
    %c0_133 = arith.constant 0 : index
    %118 = vector.load %arg10[%c38_132, %c0_133] : memref<128x640xf32, #tpu.memory_space<vmem>>, vector<1x640xf32>
    tpu.vector_store %arg10[%c38_132, %c0_133], %117 {strides = array<i32>} : memref<128x640xf32, #tpu.memory_space<vmem>>, vector<1x640xf32>,
    %c0_134 = arith.constant 0 : index
    %c0_135 = arith.constant 0 : index
    %c131 = arith.constant 131 : index
    %119 = vector.load %arg1[%c0_134, %c0_135, %c131] : memref<1x1x1024xf32, #tpu.memory_space<vmem>>, vector<1x1x640xf32>
    %120 = vector.shape_cast %119 : vector<1x1x640xf32> to vector<1x640xf32>
    %c39_136 = arith.constant 39 : index
    %c0_137 = arith.constant 0 : index
    %121 = vector.load %arg10[%c39_136, %c0_137] : memref<128x640xf32, #tpu.memory_space<vmem>>, vector<1x640xf32>
    tpu.vector_store %arg10[%c39_136, %c0_137], %120 {strides = array<i32>} : memref<128x640xf32, #tpu.memory_space<vmem>>, vector<1x640xf32>,
    %c0_138 = arith.constant 0 : index
    %c0_139 = arith.constant 0 : index
    %c132 = arith.constant 132 : index
    %122 = vector.load %arg1[%c0_138, %c0_139, %c132] : memref<1x1x1024xf32, #tpu.memory_space<vmem>>, vector<1x1x640xf32>
    %123 = vector.shape_cast %122 : vector<1x1x640xf32> to vector<1x640xf32>
    %c40_140 = arith.constant 40 : index
    %c0_141 = arith.constant 0 : index
    %124 = vector.load %arg10[%c40_140, %c0_141] : memref<128x640xf32, #tpu.memory_space<vmem>>, vector<1x640xf32>
    tpu.vector_store %arg10[%c40_140, %c0_141], %123 {strides = array<i32>} : memref<128x640xf32, #tpu.memory_space<vmem>>, vector<1x640xf32>,
    %c0_142 = arith.constant 0 : index
    %c0_143 = arith.constant 0 : index
    %c133 = arith.constant 133 : index
    %125 = vector.load %arg1[%c0_142, %c0_143, %c133] : memref<1x1x1024xf32, #tpu.memory_space<vmem>>, vector<1x1x640xf32>
    %126 = vector.shape_cast %125 : vector<1x1x640xf32> to vector<1x640xf32>
    %c41 = arith.constant 41 : index
    %c0_144 = arith.constant 0 : index
    %127 = vector.load %arg10[%c41, %c0_144] : memref<128x640xf32, #tpu.memory_space<vmem>>, vector<1x640xf32>
    tpu.vector_store %arg10[%c41, %c0_144], %126 {strides = array<i32>} : memref<128x640xf32, #tpu.memory_space<vmem>>, vector<1x640xf32>,
    %c0_145 = arith.constant 0 : index
    %c0_146 = arith.constant 0 : index
    %c134 = arith.constant 134 : index
    %128 = vector.load %arg1[%c0_145, %c0_146, %c134] : memref<1x1x1024xf32, #tpu.memory_space<vmem>>, vector<1x1x640xf32>
    %129 = vector.shape_cast %128 : vector<1x1x640xf32> to vector<1x640xf32>
    %c42 = arith.constant 42 : index
    %c0_147 = arith.constant 0 : index
    %130 = vector.load %arg10[%c42, %c0_147] : memref<128x640xf32, #tpu.memory_space<vmem>>, vector<1x640xf32>
    tpu.vector_store %arg10[%c42, %c0_147], %129 {strides = array<i32>} : memref<128x640xf32, #tpu.memory_space<vmem>>, vector<1x640xf32>,
    %c0_148 = arith.constant 0 : index
    %c0_149 = arith.constant 0 : index
    %c135 = arith.constant 135 : index
    %131 = vector.load %arg1[%c0_148, %c0_149, %c135] : memref<1x1x1024xf32, #tpu.memory_space<vmem>>, vector<1x1x640xf32>
    %132 = vector.shape_cast %131 : vector<1x1x640xf32> to vector<1x640xf32>
    %c43 = arith.constant 43 : index
    %c0_150 = arith.constant 0 : index
    %133 = vector.load %arg10[%c43, %c0_150] : memref<128x640xf32, #tpu.memory_space<vmem>>, vector<1x640xf32>
    tpu.vector_store %arg10[%c43, %c0_150], %132 {strides = array<i32>} : memref<128x640xf32, #tpu.memory_space<vmem>>, vector<1x640xf32>,
    %c0_151 = arith.constant 0 : index
    %c0_152 = arith.constant 0 : index
    %c136 = arith.constant 136 : index
    %134 = vector.load %arg1[%c0_151, %c0_152, %c136] : memref<1x1x1024xf32, #tpu.memory_space<vmem>>, vector<1x1x640xf32>
    %135 = vector.shape_cast %134 : vector<1x1x640xf32> to vector<1x640xf32>
    %c44 = arith.constant 44 : index
    %c0_153 = arith.constant 0 : index
    %136 = vector.load %arg10[%c44, %c0_153] : memref<128x640xf32, #tpu.memory_space<vmem>>, vector<1x640xf32>
    tpu.vector_store %arg10[%c44, %c0_153], %135 {strides = array<i32>} : memref<128x640xf32, #tpu.memory_space<vmem>>, vector<1x640xf32>,
    %c0_154 = arith.constant 0 : index
    %c0_155 = arith.constant 0 : index
    %c160 = arith.constant 160 : index
    %137 = vector.load %arg1[%c0_154, %c0_155, %c160] : memref<1x1x1024xf32, #tpu.memory_space<vmem>>, vector<1x1x640xf32>
    %138 = vector.shape_cast %137 : vector<1x1x640xf32> to vector<1x640xf32>
    %c45 = arith.constant 45 : index
    %c0_156 = arith.constant 0 : index
    %139 = vector.load %arg10[%c45, %c0_156] : memref<128x640xf32, #tpu.memory_space<vmem>>, vector<1x640xf32>
    tpu.vector_store %arg10[%c45, %c0_156], %138 {strides = array<i32>} : memref<128x640xf32, #tpu.memory_space<vmem>>, vector<1x640xf32>,
    %c0_157 = arith.constant 0 : index
    %c0_158 = arith.constant 0 : index
    %c161 = arith.constant 161 : index
    %140 = vector.load %arg1[%c0_157, %c0_158, %c161] : memref<1x1x1024xf32, #tpu.memory_space<vmem>>, vector<1x1x640xf32>
    %141 = vector.shape_cast %140 : vector<1x1x640xf32> to vector<1x640xf32>
    %c46 = arith.constant 46 : index
    %c0_159 = arith.constant 0 : index
    %142 = vector.load %arg10[%c46, %c0_159] : memref<128x640xf32, #tpu.memory_space<vmem>>, vector<1x640xf32>
    tpu.vector_store %arg10[%c46, %c0_159], %141 {strides = array<i32>} : memref<128x640xf32, #tpu.memory_space<vmem>>, vector<1x640xf32>,
    %c0_160 = arith.constant 0 : index
    %c0_161 = arith.constant 0 : index
    %c162 = arith.constant 162 : index
    %143 = vector.load %arg1[%c0_160, %c0_161, %c162] : memref<1x1x1024xf32, #tpu.memory_space<vmem>>, vector<1x1x640xf32>
    %144 = vector.shape_cast %143 : vector<1x1x640xf32> to vector<1x640xf32>
    %c47 = arith.constant 47 : index
    %c0_162 = arith.constant 0 : index
    %145 = vector.load %arg10[%c47, %c0_162] : memref<128x640xf32, #tpu.memory_space<vmem>>, vector<1x640xf32>
    tpu.vector_store %arg10[%c47, %c0_162], %144 {strides = array<i32>} : memref<128x640xf32, #tpu.memory_space<vmem>>, vector<1x640xf32>,
    %c0_163 = arith.constant 0 : index
    %c0_164 = arith.constant 0 : index
    %c163 = arith.constant 163 : index
    %146 = vector.load %arg1[%c0_163, %c0_164, %c163] : memref<1x1x1024xf32, #tpu.memory_space<vmem>>, vector<1x1x640xf32>
    %147 = vector.shape_cast %146 : vector<1x1x640xf32> to vector<1x640xf32>
    %c48 = arith.constant 48 : index
    %c0_165 = arith.constant 0 : index
    %148 = vector.load %arg10[%c48, %c0_165] : memref<128x640xf32, #tpu.memory_space<vmem>>, vector<1x640xf32>
    tpu.vector_store %arg10[%c48, %c0_165], %147 {strides = array<i32>} : memref<128x640xf32, #tpu.memory_space<vmem>>, vector<1x640xf32>,
    %c0_166 = arith.constant 0 : index
    %c0_167 = arith.constant 0 : index
    %c164 = arith.constant 164 : index
    %149 = vector.load %arg1[%c0_166, %c0_167, %c164] : memref<1x1x1024xf32, #tpu.memory_space<vmem>>, vector<1x1x640xf32>
    %150 = vector.shape_cast %149 : vector<1x1x640xf32> to vector<1x640xf32>
    %c49 = arith.constant 49 : index
    %c0_168 = arith.constant 0 : index
    %151 = vector.load %arg10[%c49, %c0_168] : memref<128x640xf32, #tpu.memory_space<vmem>>, vector<1x640xf32>
    tpu.vector_store %arg10[%c49, %c0_168], %150 {strides = array<i32>} : memref<128x640xf32, #tpu.memory_space<vmem>>, vector<1x640xf32>,
    %c0_169 = arith.constant 0 : index
    %c0_170 = arith.constant 0 : index
    %c165 = arith.constant 165 : index
    %152 = vector.load %arg1[%c0_169, %c0_170, %c165] : memref<1x1x1024xf32, #tpu.memory_space<vmem>>, vector<1x1x640xf32>
    %153 = vector.shape_cast %152 : vector<1x1x640xf32> to vector<1x640xf32>
    %c50 = arith.constant 50 : index
    %c0_171 = arith.constant 0 : index
    %154 = vector.load %arg10[%c50, %c0_171] : memref<128x640xf32, #tpu.memory_space<vmem>>, vector<1x640xf32>
    tpu.vector_store %arg10[%c50, %c0_171], %153 {strides = array<i32>} : memref<128x640xf32, #tpu.memory_space<vmem>>, vector<1x640xf32>,
    %c0_172 = arith.constant 0 : index
    %c0_173 = arith.constant 0 : index
    %c166 = arith.constant 166 : index
    %155 = vector.load %arg1[%c0_172, %c0_173, %c166] : memref<1x1x1024xf32, #tpu.memory_space<vmem>>, vector<1x1x640xf32>
    %156 = vector.shape_cast %155 : vector<1x1x640xf32> to vector<1x640xf32>
    %c51 = arith.constant 51 : index
    %c0_174 = arith.constant 0 : index
    %157 = vector.load %arg10[%c51, %c0_174] : memref<128x640xf32, #tpu.memory_space<vmem>>, vector<1x640xf32>
    tpu.vector_store %arg10[%c51, %c0_174], %156 {strides = array<i32>} : memref<128x640xf32, #tpu.memory_space<vmem>>, vector<1x640xf32>,
    %c0_175 = arith.constant 0 : index
    %c0_176 = arith.constant 0 : index
    %c167 = arith.constant 167 : index
    %158 = vector.load %arg1[%c0_175, %c0_176, %c167] : memref<1x1x1024xf32, #tpu.memory_space<vmem>>, vector<1x1x640xf32>
    %159 = vector.shape_cast %158 : vector<1x1x640xf32> to vector<1x640xf32>
    %c52 = arith.constant 52 : index
    %c0_177 = arith.constant 0 : index
    %160 = vector.load %arg10[%c52, %c0_177] : memref<128x640xf32, #tpu.memory_space<vmem>>, vector<1x640xf32>
    tpu.vector_store %arg10[%c52, %c0_177], %159 {strides = array<i32>} : memref<128x640xf32, #tpu.memory_space<vmem>>, vector<1x640xf32>,
    %c0_178 = arith.constant 0 : index
    %c0_179 = arith.constant 0 : index
    %c168 = arith.constant 168 : index
    %161 = vector.load %arg1[%c0_178, %c0_179, %c168] : memref<1x1x1024xf32, #tpu.memory_space<vmem>>, vector<1x1x640xf32>
    %162 = vector.shape_cast %161 : vector<1x1x640xf32> to vector<1x640xf32>
    %c53 = arith.constant 53 : index
    %c0_180 = arith.constant 0 : index
    %163 = vector.load %arg10[%c53, %c0_180] : memref<128x640xf32, #tpu.memory_space<vmem>>, vector<1x640xf32>
    tpu.vector_store %arg10[%c53, %c0_180], %162 {strides = array<i32>} : memref<128x640xf32, #tpu.memory_space<vmem>>, vector<1x640xf32>,
    %c0_181 = arith.constant 0 : index
    %c0_182 = arith.constant 0 : index
    %c192 = arith.constant 192 : index
    %164 = vector.load %arg1[%c0_181, %c0_182, %c192] : memref<1x1x1024xf32, #tpu.memory_space<vmem>>, vector<1x1x640xf32>
    %165 = vector.shape_cast %164 : vector<1x1x640xf32> to vector<1x640xf32>
    %c54 = arith.constant 54 : index
    %c0_183 = arith.constant 0 : index
    %166 = vector.load %arg10[%c54, %c0_183] : memref<128x640xf32, #tpu.memory_space<vmem>>, vector<1x640xf32>
    tpu.vector_store %arg10[%c54, %c0_183], %165 {strides = array<i32>} : memref<128x640xf32, #tpu.memory_space<vmem>>, vector<1x640xf32>,
    %c0_184 = arith.constant 0 : index
    %c0_185 = arith.constant 0 : index
    %c193 = arith.constant 193 : index
    %167 = vector.load %arg1[%c0_184, %c0_185, %c193] : memref<1x1x1024xf32, #tpu.memory_space<vmem>>, vector<1x1x640xf32>
    %168 = vector.shape_cast %167 : vector<1x1x640xf32> to vector<1x640xf32>
    %c55 = arith.constant 55 : index
    %c0_186 = arith.constant 0 : index
    %169 = vector.load %arg10[%c55, %c0_186] : memref<128x640xf32, #tpu.memory_space<vmem>>, vector<1x640xf32>
    tpu.vector_store %arg10[%c55, %c0_186], %168 {strides = array<i32>} : memref<128x640xf32, #tpu.memory_space<vmem>>, vector<1x640xf32>,
    %c0_187 = arith.constant 0 : index
    %c0_188 = arith.constant 0 : index
    %c194 = arith.constant 194 : index
    %170 = vector.load %arg1[%c0_187, %c0_188, %c194] : memref<1x1x1024xf32, #tpu.memory_space<vmem>>, vector<1x1x640xf32>
    %171 = vector.shape_cast %170 : vector<1x1x640xf32> to vector<1x640xf32>
    %c56 = arith.constant 56 : index
    %c0_189 = arith.constant 0 : index
    %172 = vector.load %arg10[%c56, %c0_189] : memref<128x640xf32, #tpu.memory_space<vmem>>, vector<1x640xf32>
    tpu.vector_store %arg10[%c56, %c0_189], %171 {strides = array<i32>} : memref<128x640xf32, #tpu.memory_space<vmem>>, vector<1x640xf32>,
    %c0_190 = arith.constant 0 : index
    %c0_191 = arith.constant 0 : index
    %c195 = arith.constant 195 : index
    %173 = vector.load %arg1[%c0_190, %c0_191, %c195] : memref<1x1x1024xf32, #tpu.memory_space<vmem>>, vector<1x1x640xf32>
    %174 = vector.shape_cast %173 : vector<1x1x640xf32> to vector<1x640xf32>
    %c57 = arith.constant 57 : index
    %c0_192 = arith.constant 0 : index
    %175 = vector.load %arg10[%c57, %c0_192] : memref<128x640xf32, #tpu.memory_space<vmem>>, vector<1x640xf32>
    tpu.vector_store %arg10[%c57, %c0_192], %174 {strides = array<i32>} : memref<128x640xf32, #tpu.memory_space<vmem>>, vector<1x640xf32>,
    %c0_193 = arith.constant 0 : index
    %c0_194 = arith.constant 0 : index
    %c196 = arith.constant 196 : index
    %176 = vector.load %arg1[%c0_193, %c0_194, %c196] : memref<1x1x1024xf32, #tpu.memory_space<vmem>>, vector<1x1x640xf32>
    %177 = vector.shape_cast %176 : vector<1x1x640xf32> to vector<1x640xf32>
    %c58 = arith.constant 58 : index
    %c0_195 = arith.constant 0 : index
    %178 = vector.load %arg10[%c58, %c0_195] : memref<128x640xf32, #tpu.memory_space<vmem>>, vector<1x640xf32>
    tpu.vector_store %arg10[%c58, %c0_195], %177 {strides = array<i32>} : memref<128x640xf32, #tpu.memory_space<vmem>>, vector<1x640xf32>,
    %c0_196 = arith.constant 0 : index
    %c0_197 = arith.constant 0 : index
    %c197 = arith.constant 197 : index
    %179 = vector.load %arg1[%c0_196, %c0_197, %c197] : memref<1x1x1024xf32, #tpu.memory_space<vmem>>, vector<1x1x640xf32>
    %180 = vector.shape_cast %179 : vector<1x1x640xf32> to vector<1x640xf32>
    %c59 = arith.constant 59 : index
    %c0_198 = arith.constant 0 : index
    %181 = vector.load %arg10[%c59, %c0_198] : memref<128x640xf32, #tpu.memory_space<vmem>>, vector<1x640xf32>
    tpu.vector_store %arg10[%c59, %c0_198], %180 {strides = array<i32>} : memref<128x640xf32, #tpu.memory_space<vmem>>, vector<1x640xf32>,
    %c0_199 = arith.constant 0 : index
    %c0_200 = arith.constant 0 : index
    %c198 = arith.constant 198 : index
    %182 = vector.load %arg1[%c0_199, %c0_200, %c198] : memref<1x1x1024xf32, #tpu.memory_space<vmem>>, vector<1x1x640xf32>
    %183 = vector.shape_cast %182 : vector<1x1x640xf32> to vector<1x640xf32>
    %c60 = arith.constant 60 : index
    %c0_201 = arith.constant 0 : index
    %184 = vector.load %arg10[%c60, %c0_201] : memref<128x640xf32, #tpu.memory_space<vmem>>, vector<1x640xf32>
    tpu.vector_store %arg10[%c60, %c0_201], %183 {strides = array<i32>} : memref<128x640xf32, #tpu.memory_space<vmem>>, vector<1x640xf32>,
    %c0_202 = arith.constant 0 : index
    %c0_203 = arith.constant 0 : index
    %c199 = arith.constant 199 : index
    %185 = vector.load %arg1[%c0_202, %c0_203, %c199] : memref<1x1x1024xf32, #tpu.memory_space<vmem>>, vector<1x1x640xf32>
    %186 = vector.shape_cast %185 : vector<1x1x640xf32> to vector<1x640xf32>
    %c61 = arith.constant 61 : index
    %c0_204 = arith.constant 0 : index
    %187 = vector.load %arg10[%c61, %c0_204] : memref<128x640xf32, #tpu.memory_space<vmem>>, vector<1x640xf32>
    tpu.vector_store %arg10[%c61, %c0_204], %186 {strides = array<i32>} : memref<128x640xf32, #tpu.memory_space<vmem>>, vector<1x640xf32>,
    %c0_205 = arith.constant 0 : index
    %c0_206 = arith.constant 0 : index
    %c200 = arith.constant 200 : index
    %188 = vector.load %arg1[%c0_205, %c0_206, %c200] : memref<1x1x1024xf32, #tpu.memory_space<vmem>>, vector<1x1x640xf32>
    %189 = vector.shape_cast %188 : vector<1x1x640xf32> to vector<1x640xf32>
    %c62 = arith.constant 62 : index
    %c0_207 = arith.constant 0 : index
    %190 = vector.load %arg10[%c62, %c0_207] : memref<128x640xf32, #tpu.memory_space<vmem>>, vector<1x640xf32>
    tpu.vector_store %arg10[%c62, %c0_207], %189 {strides = array<i32>} : memref<128x640xf32, #tpu.memory_space<vmem>>, vector<1x640xf32>,
    %c0_208 = arith.constant 0 : index
    %c0_209 = arith.constant 0 : index
    %c224 = arith.constant 224 : index
    %191 = vector.load %arg1[%c0_208, %c0_209, %c224] : memref<1x1x1024xf32, #tpu.memory_space<vmem>>, vector<1x1x640xf32>
    %192 = vector.shape_cast %191 : vector<1x1x640xf32> to vector<1x640xf32>
    %c63 = arith.constant 63 : index
    %c0_210 = arith.constant 0 : index
    %193 = vector.load %arg10[%c63, %c0_210] : memref<128x640xf32, #tpu.memory_space<vmem>>, vector<1x640xf32>
    tpu.vector_store %arg10[%c63, %c0_210], %192 {strides = array<i32>} : memref<128x640xf32, #tpu.memory_space<vmem>>, vector<1x640xf32>,
    %c0_211 = arith.constant 0 : index
    %c0_212 = arith.constant 0 : index
    %c225 = arith.constant 225 : index
    %194 = vector.load %arg1[%c0_211, %c0_212, %c225] : memref<1x1x1024xf32, #tpu.memory_space<vmem>>, vector<1x1x640xf32>
    %195 = vector.shape_cast %194 : vector<1x1x640xf32> to vector<1x640xf32>
    %c64_213 = arith.constant 64 : index
    %c0_214 = arith.constant 0 : index
    %196 = vector.load %arg10[%c64_213, %c0_214] : memref<128x640xf32, #tpu.memory_space<vmem>>, vector<1x640xf32>
    tpu.vector_store %arg10[%c64_213, %c0_214], %195 {strides = array<i32>} : memref<128x640xf32, #tpu.memory_space<vmem>>, vector<1x640xf32>,
    %c0_215 = arith.constant 0 : index
    %c0_216 = arith.constant 0 : index
    %c226 = arith.constant 226 : index
    %197 = vector.load %arg1[%c0_215, %c0_216, %c226] : memref<1x1x1024xf32, #tpu.memory_space<vmem>>, vector<1x1x640xf32>
    %198 = vector.shape_cast %197 : vector<1x1x640xf32> to vector<1x640xf32>
    %c65_217 = arith.constant 65 : index
    %c0_218 = arith.constant 0 : index
    %199 = vector.load %arg10[%c65_217, %c0_218] : memref<128x640xf32, #tpu.memory_space<vmem>>, vector<1x640xf32>
    tpu.vector_store %arg10[%c65_217, %c0_218], %198 {strides = array<i32>} : memref<128x640xf32, #tpu.memory_space<vmem>>, vector<1x640xf32>,
    %c0_219 = arith.constant 0 : index
    %c0_220 = arith.constant 0 : index
    %c227 = arith.constant 227 : index
    %200 = vector.load %arg1[%c0_219, %c0_220, %c227] : memref<1x1x1024xf32, #tpu.memory_space<vmem>>, vector<1x1x640xf32>
    %201 = vector.shape_cast %200 : vector<1x1x640xf32> to vector<1x640xf32>
    %c66_221 = arith.constant 66 : index
    %c0_222 = arith.constant 0 : index
    %202 = vector.load %arg10[%c66_221, %c0_222] : memref<128x640xf32, #tpu.memory_space<vmem>>, vector<1x640xf32>
    tpu.vector_store %arg10[%c66_221, %c0_222], %201 {strides = array<i32>} : memref<128x640xf32, #tpu.memory_space<vmem>>, vector<1x640xf32>,
    %c0_223 = arith.constant 0 : index
    %c0_224 = arith.constant 0 : index
    %c228 = arith.constant 228 : index
    %203 = vector.load %arg1[%c0_223, %c0_224, %c228] : memref<1x1x1024xf32, #tpu.memory_space<vmem>>, vector<1x1x640xf32>
    %204 = vector.shape_cast %203 : vector<1x1x640xf32> to vector<1x640xf32>
    %c67_225 = arith.constant 67 : index
    %c0_226 = arith.constant 0 : index
    %205 = vector.load %arg10[%c67_225, %c0_226] : memref<128x640xf32, #tpu.memory_space<vmem>>, vector<1x640xf32>
    tpu.vector_store %arg10[%c67_225, %c0_226], %204 {strides = array<i32>} : memref<128x640xf32, #tpu.memory_space<vmem>>, vector<1x640xf32>,
    %c0_227 = arith.constant 0 : index
    %c0_228 = arith.constant 0 : index
    %c229 = arith.constant 229 : index
    %206 = vector.load %arg1[%c0_227, %c0_228, %c229] : memref<1x1x1024xf32, #tpu.memory_space<vmem>>, vector<1x1x640xf32>
    %207 = vector.shape_cast %206 : vector<1x1x640xf32> to vector<1x640xf32>
    %c68_229 = arith.constant 68 : index
    %c0_230 = arith.constant 0 : index
    %208 = vector.load %arg10[%c68_229, %c0_230] : memref<128x640xf32, #tpu.memory_space<vmem>>, vector<1x640xf32>
    tpu.vector_store %arg10[%c68_229, %c0_230], %207 {strides = array<i32>} : memref<128x640xf32, #tpu.memory_space<vmem>>, vector<1x640xf32>,
    %c0_231 = arith.constant 0 : index
    %c0_232 = arith.constant 0 : index
    %c230 = arith.constant 230 : index
    %209 = vector.load %arg1[%c0_231, %c0_232, %c230] : memref<1x1x1024xf32, #tpu.memory_space<vmem>>, vector<1x1x640xf32>
    %210 = vector.shape_cast %209 : vector<1x1x640xf32> to vector<1x640xf32>
    %c69_233 = arith.constant 69 : index
    %c0_234 = arith.constant 0 : index
    %211 = vector.load %arg10[%c69_233, %c0_234] : memref<128x640xf32, #tpu.memory_space<vmem>>, vector<1x640xf32>
    tpu.vector_store %arg10[%c69_233, %c0_234], %210 {strides = array<i32>} : memref<128x640xf32, #tpu.memory_space<vmem>>, vector<1x640xf32>,
    %c0_235 = arith.constant 0 : index
    %c0_236 = arith.constant 0 : index
    %c231 = arith.constant 231 : index
    %212 = vector.load %arg1[%c0_235, %c0_236, %c231] : memref<1x1x1024xf32, #tpu.memory_space<vmem>>, vector<1x1x640xf32>
    %213 = vector.shape_cast %212 : vector<1x1x640xf32> to vector<1x640xf32>
    %c70_237 = arith.constant 70 : index
    %c0_238 = arith.constant 0 : index
    %214 = vector.load %arg10[%c70_237, %c0_238] : memref<128x640xf32, #tpu.memory_space<vmem>>, vector<1x640xf32>
    tpu.vector_store %arg10[%c70_237, %c0_238], %213 {strides = array<i32>} : memref<128x640xf32, #tpu.memory_space<vmem>>, vector<1x640xf32>,
    %c0_239 = arith.constant 0 : index
    %c0_240 = arith.constant 0 : index
    %c232 = arith.constant 232 : index
    %215 = vector.load %arg1[%c0_239, %c0_240, %c232] : memref<1x1x1024xf32, #tpu.memory_space<vmem>>, vector<1x1x640xf32>
    %216 = vector.shape_cast %215 : vector<1x1x640xf32> to vector<1x640xf32>
    %c71_241 = arith.constant 71 : index
    %c0_242 = arith.constant 0 : index
    %217 = vector.load %arg10[%c71_241, %c0_242] : memref<128x640xf32, #tpu.memory_space<vmem>>, vector<1x640xf32>
    tpu.vector_store %arg10[%c71_241, %c0_242], %216 {strides = array<i32>} : memref<128x640xf32, #tpu.memory_space<vmem>>, vector<1x640xf32>,
    %c0_243 = arith.constant 0 : index
    %c0_244 = arith.constant 0 : index
    %c256 = arith.constant 256 : index
    %218 = vector.load %arg1[%c0_243, %c0_244, %c256] : memref<1x1x1024xf32, #tpu.memory_space<vmem>>, vector<1x1x640xf32>
    %219 = vector.shape_cast %218 : vector<1x1x640xf32> to vector<1x640xf32>
    %c72_245 = arith.constant 72 : index
    %c0_246 = arith.constant 0 : index
    %220 = vector.load %arg10[%c72_245, %c0_246] : memref<128x640xf32, #tpu.memory_space<vmem>>, vector<1x640xf32>
    tpu.vector_store %arg10[%c72_245, %c0_246], %219 {strides = array<i32>} : memref<128x640xf32, #tpu.memory_space<vmem>>, vector<1x640xf32>,
    %c0_247 = arith.constant 0 : index
    %c0_248 = arith.constant 0 : index
    %c257 = arith.constant 257 : index
    %221 = vector.load %arg1[%c0_247, %c0_248, %c257] : memref<1x1x1024xf32, #tpu.memory_space<vmem>>, vector<1x1x640xf32>
    %222 = vector.shape_cast %221 : vector<1x1x640xf32> to vector<1x640xf32>
    %c73 = arith.constant 73 : index
    %c0_249 = arith.constant 0 : index
    %223 = vector.load %arg10[%c73, %c0_249] : memref<128x640xf32, #tpu.memory_space<vmem>>, vector<1x640xf32>
    tpu.vector_store %arg10[%c73, %c0_249], %222 {strides = array<i32>} : memref<128x640xf32, #tpu.memory_space<vmem>>, vector<1x640xf32>,
    %c0_250 = arith.constant 0 : index
    %c0_251 = arith.constant 0 : index
    %c258 = arith.constant 258 : index
    %224 = vector.load %arg1[%c0_250, %c0_251, %c258] : memref<1x1x1024xf32, #tpu.memory_space<vmem>>, vector<1x1x640xf32>
    %225 = vector.shape_cast %224 : vector<1x1x640xf32> to vector<1x640xf32>
    %c74 = arith.constant 74 : index
    %c0_252 = arith.constant 0 : index
    %226 = vector.load %arg10[%c74, %c0_252] : memref<128x640xf32, #tpu.memory_space<vmem>>, vector<1x640xf32>
    tpu.vector_store %arg10[%c74, %c0_252], %225 {strides = array<i32>} : memref<128x640xf32, #tpu.memory_space<vmem>>, vector<1x640xf32>,
    %c0_253 = arith.constant 0 : index
    %c0_254 = arith.constant 0 : index
    %c259 = arith.constant 259 : index
    %227 = vector.load %arg1[%c0_253, %c0_254, %c259] : memref<1x1x1024xf32, #tpu.memory_space<vmem>>, vector<1x1x640xf32>
    %228 = vector.shape_cast %227 : vector<1x1x640xf32> to vector<1x640xf32>
    %c75 = arith.constant 75 : index
    %c0_255 = arith.constant 0 : index
    %229 = vector.load %arg10[%c75, %c0_255] : memref<128x640xf32, #tpu.memory_space<vmem>>, vector<1x640xf32>
    tpu.vector_store %arg10[%c75, %c0_255], %228 {strides = array<i32>} : memref<128x640xf32, #tpu.memory_space<vmem>>, vector<1x640xf32>,
    %c0_256 = arith.constant 0 : index
    %c0_257 = arith.constant 0 : index
    %c260 = arith.constant 260 : index
    %230 = vector.load %arg1[%c0_256, %c0_257, %c260] : memref<1x1x1024xf32, #tpu.memory_space<vmem>>, vector<1x1x640xf32>
    %231 = vector.shape_cast %230 : vector<1x1x640xf32> to vector<1x640xf32>
    %c76 = arith.constant 76 : index
    %c0_258 = arith.constant 0 : index
    %232 = vector.load %arg10[%c76, %c0_258] : memref<128x640xf32, #tpu.memory_space<vmem>>, vector<1x640xf32>
    tpu.vector_store %arg10[%c76, %c0_258], %231 {strides = array<i32>} : memref<128x640xf32, #tpu.memory_space<vmem>>, vector<1x640xf32>,
    %c0_259 = arith.constant 0 : index
    %c0_260 = arith.constant 0 : index
    %c261 = arith.constant 261 : index
    %233 = vector.load %arg1[%c0_259, %c0_260, %c261] : memref<1x1x1024xf32, #tpu.memory_space<vmem>>, vector<1x1x640xf32>
    %234 = vector.shape_cast %233 : vector<1x1x640xf32> to vector<1x640xf32>
    %c77 = arith.constant 77 : index
    %c0_261 = arith.constant 0 : index
    %235 = vector.load %arg10[%c77, %c0_261] : memref<128x640xf32, #tpu.memory_space<vmem>>, vector<1x640xf32>
    tpu.vector_store %arg10[%c77, %c0_261], %234 {strides = array<i32>} : memref<128x640xf32, #tpu.memory_space<vmem>>, vector<1x640xf32>,
    %c0_262 = arith.constant 0 : index
    %c0_263 = arith.constant 0 : index
    %c262 = arith.constant 262 : index
    %236 = vector.load %arg1[%c0_262, %c0_263, %c262] : memref<1x1x1024xf32, #tpu.memory_space<vmem>>, vector<1x1x640xf32>
    %237 = vector.shape_cast %236 : vector<1x1x640xf32> to vector<1x640xf32>
    %c78 = arith.constant 78 : index
    %c0_264 = arith.constant 0 : index
    %238 = vector.load %arg10[%c78, %c0_264] : memref<128x640xf32, #tpu.memory_space<vmem>>, vector<1x640xf32>
    tpu.vector_store %arg10[%c78, %c0_264], %237 {strides = array<i32>} : memref<128x640xf32, #tpu.memory_space<vmem>>, vector<1x640xf32>,
    %c0_265 = arith.constant 0 : index
    %c0_266 = arith.constant 0 : index
    %c263 = arith.constant 263 : index
    %239 = vector.load %arg1[%c0_265, %c0_266, %c263] : memref<1x1x1024xf32, #tpu.memory_space<vmem>>, vector<1x1x640xf32>
    %240 = vector.shape_cast %239 : vector<1x1x640xf32> to vector<1x640xf32>
    %c79 = arith.constant 79 : index
    %c0_267 = arith.constant 0 : index
    %241 = vector.load %arg10[%c79, %c0_267] : memref<128x640xf32, #tpu.memory_space<vmem>>, vector<1x640xf32>
    tpu.vector_store %arg10[%c79, %c0_267], %240 {strides = array<i32>} : memref<128x640xf32, #tpu.memory_space<vmem>>, vector<1x640xf32>,
    %c0_268 = arith.constant 0 : index
    %c0_269 = arith.constant 0 : index
    %c264 = arith.constant 264 : index
    %242 = vector.load %arg1[%c0_268, %c0_269, %c264] : memref<1x1x1024xf32, #tpu.memory_space<vmem>>, vector<1x1x640xf32>
    %243 = vector.shape_cast %242 : vector<1x1x640xf32> to vector<1x640xf32>
    %c80_270 = arith.constant 80 : index
    %c0_271 = arith.constant 0 : index
    %244 = vector.load %arg10[%c80_270, %c0_271] : memref<128x640xf32, #tpu.memory_space<vmem>>, vector<1x640xf32>
    tpu.vector_store %arg10[%c80_270, %c0_271], %243 {strides = array<i32>} : memref<128x640xf32, #tpu.memory_space<vmem>>, vector<1x640xf32>,
    %c0_272 = arith.constant 0 : index
    %c0_273 = arith.constant 0 : index
    %245 = vector.load %arg3[%c0_272, %c0_273] : memref<64x128xf32, #tpu.memory_space<vmem>>, vector<64x128xf32>
    %c0_274 = arith.constant 0 : index
    %c0_275 = arith.constant 0 : index
    %246 = vector.load %arg10[%c0_274, %c0_275] : memref<128x640xf32, #tpu.memory_space<vmem>>, vector<128x640xf32>
    %cst_276 = arith.constant dense<0.000000e+00> : vector<64x640xf32>
    %247 = tpu.matmul %245, %246, %cst_276 {dimension_numbers = #tpu.dot_dimension_numbers<[1], [0], [0], [1], [0, 0, 1, 1], [], []>} : vector<64x128xf32>, vector<128x640xf32>, vector<64x640xf32> -> vector<64x640xf32>
    %c0_277 = arith.constant 0 : index
    %c0_278 = arith.constant 0 : index
    %248 = vector.load %arg4[%c0_277, %c0_278] : memref<64x1xf32, #tpu.memory_space<vmem>>, vector<64x1xf32>
    %249 = vector.broadcast %248 : vector<64x1xf32> to vector<64x640xf32>
    %250 = arith.addf %247, %249 : vector<64x640xf32>
    %cst_279 = arith.constant 0.000000e+00 : f32
    %251 = vector.broadcast %cst_279 : f32 to vector<64x640xf32>
    %252 = arith.maximumf %250, %251 : vector<64x640xf32>
    %c0_280 = arith.constant 0 : index
    %c0_281 = arith.constant 0 : index
    %253 = vector.load %arg2[%c0_280, %c0_281] : memref<1x640xf32, #tpu.memory_space<vmem>>, vector<1x640xf32>
    %254 = vector.broadcast %253 : vector<1x640xf32> to vector<64x640xf32>
    %255 = arith.mulf %252, %254 : vector<64x640xf32>
    %c0_282 = arith.constant 0 : index
    %c0_283 = arith.constant 0 : index
    %256 = vector.load %arg11[%c0_282, %c0_283] : memref<64x640xf32, #tpu.memory_space<vmem>>, vector<64x640xf32>
    tpu.vector_store %arg11[%c0_282, %c0_283], %255 {strides = array<i32>} : memref<64x640xf32, #tpu.memory_space<vmem>>, vector<64x640xf32>,
    %c0_284 = arith.constant 0 : index
    %c0_285 = arith.constant 0 : index
    %257 = vector.load %arg5[%c0_284, %c0_285] : memref<32x64xf32, #tpu.memory_space<vmem>>, vector<32x64xf32>
    %c0_286 = arith.constant 0 : index
    %c0_287 = arith.constant 0 : index
    %258 = vector.load %arg11[%c0_286, %c0_287] : memref<64x640xf32, #tpu.memory_space<vmem>>, vector<64x640xf32>
    %cst_288 = arith.constant dense<0.000000e+00> : vector<32x640xf32>
    %259 = tpu.matmul %257, %258, %cst_288 {dimension_numbers = #tpu.dot_dimension_numbers<[1], [0], [0], [1], [0, 0, 1, 1], [], []>} : vector<32x64xf32>, vector<64x640xf32>, vector<32x640xf32> -> vector<32x640xf32>
    %c0_289 = arith.constant 0 : index
    %c0_290 = arith.constant 0 : index
    %260 = vector.load %arg6[%c0_289, %c0_290] : memref<32x1xf32, #tpu.memory_space<vmem>>, vector<32x1xf32>
    %261 = vector.broadcast %260 : vector<32x1xf32> to vector<32x640xf32>
    %262 = arith.addf %259, %261 : vector<32x640xf32>
    %cst_291 = arith.constant 0.000000e+00 : f32
    %263 = vector.broadcast %cst_291 : f32 to vector<32x640xf32>
    %264 = arith.maximumf %262, %263 : vector<32x640xf32>
    %c0_292 = arith.constant 0 : index
    %c0_293 = arith.constant 0 : index
    %265 = vector.load %arg12[%c0_292, %c0_293] : memref<32x640xf32, #tpu.memory_space<vmem>>, vector<32x640xf32>
    tpu.vector_store %arg12[%c0_292, %c0_293], %264 {strides = array<i32>} : memref<32x640xf32, #tpu.memory_space<vmem>>, vector<32x640xf32>,
    %c0_294 = arith.constant 0 : index
    %c0_295 = arith.constant 0 : index
    %266 = vector.load %arg7[%c0_294, %c0_295] : memref<32x32xf32, #tpu.memory_space<vmem>>, vector<32x32xf32>
    %c0_296 = arith.constant 0 : index
    %c0_297 = arith.constant 0 : index
    %267 = vector.load %arg12[%c0_296, %c0_297] : memref<32x640xf32, #tpu.memory_space<vmem>>, vector<32x640xf32>
    %cst_298 = arith.constant dense<0.000000e+00> : vector<32x640xf32>
    %268 = tpu.matmul %266, %267, %cst_298 {dimension_numbers = #tpu.dot_dimension_numbers<[1], [0], [0], [1], [0, 0, 1, 1], [], []>} : vector<32x32xf32>, vector<32x640xf32>, vector<32x640xf32> -> vector<32x640xf32>
    %c0_299 = arith.constant 0 : index
    %c0_300 = arith.constant 0 : index
    %269 = vector.load %arg13[%c0_299, %c0_300] : memref<32x896xf32, #tpu.memory_space<vmem>>, vector<32x640xf32>
    tpu.vector_store %arg13[%c0_299, %c0_300], %268 {strides = array<i32>} : memref<32x896xf32, #tpu.memory_space<vmem>>, vector<32x640xf32>,
    %cst_301 = arith.constant 0.000000e+00 : f32
    %270 = vector.broadcast %cst_301 : f32 to vector<32x256xf32>
    %c0_302 = arith.constant 0 : index
    %c640 = arith.constant 640 : index
    %271 = vector.load %arg13[%c0_302, %c640] : memref<32x896xf32, #tpu.memory_space<vmem>>, vector<32x256xf32>
    tpu.vector_store %arg13[%c0_302, %c640], %270 {strides = array<i32>} : memref<32x896xf32, #tpu.memory_space<vmem>>, vector<32x256xf32>,
    %c0_303 = arith.constant 0 : index
    %c0_304 = arith.constant 0 : index
    %272 = vector.load %arg13[%c0_303, %c0_304] : memref<32x896xf32, #tpu.memory_space<vmem>>, vector<1x512xf32>
    %c1_305 = arith.constant 1 : index
    %c1_306 = arith.constant 1 : index
    %273 = vector.load %arg13[%c1_305, %c1_306] : memref<32x896xf32, #tpu.memory_space<vmem>>, vector<1x512xf32>
    %274 = arith.addf %272, %273 : vector<1x512xf32>
    %c2_307 = arith.constant 2 : index
    %c2_308 = arith.constant 2 : index
    %275 = vector.load %arg13[%c2_307, %c2_308] : memref<32x896xf32, #tpu.memory_space<vmem>>, vector<1x512xf32>
    %276 = arith.addf %274, %275 : vector<1x512xf32>
    %c3_309 = arith.constant 3 : index
    %c3_310 = arith.constant 3 : index
    %277 = vector.load %arg13[%c3_309, %c3_310] : memref<32x896xf32, #tpu.memory_space<vmem>>, vector<1x512xf32>
    %278 = arith.addf %276, %277 : vector<1x512xf32>
    %c4_311 = arith.constant 4 : index
    %c4_312 = arith.constant 4 : index
    %279 = vector.load %arg13[%c4_311, %c4_312] : memref<32x896xf32, #tpu.memory_space<vmem>>, vector<1x512xf32>
    %280 = arith.addf %278, %279 : vector<1x512xf32>
    %c5_313 = arith.constant 5 : index
    %c32_314 = arith.constant 32 : index
    %281 = vector.load %arg13[%c5_313, %c32_314] : memref<32x896xf32, #tpu.memory_space<vmem>>, vector<1x512xf32>
    %282 = arith.addf %280, %281 : vector<1x512xf32>
    %c6_315 = arith.constant 6 : index
    %c33_316 = arith.constant 33 : index
    %283 = vector.load %arg13[%c6_315, %c33_316] : memref<32x896xf32, #tpu.memory_space<vmem>>, vector<1x512xf32>
    %284 = arith.addf %282, %283 : vector<1x512xf32>
    %c7_317 = arith.constant 7 : index
    %c34_318 = arith.constant 34 : index
    %285 = vector.load %arg13[%c7_317, %c34_318] : memref<32x896xf32, #tpu.memory_space<vmem>>, vector<1x512xf32>
    %286 = arith.addf %284, %285 : vector<1x512xf32>
    %c8_319 = arith.constant 8 : index
    %c35_320 = arith.constant 35 : index
    %287 = vector.load %arg13[%c8_319, %c35_320] : memref<32x896xf32, #tpu.memory_space<vmem>>, vector<1x512xf32>
    %288 = arith.addf %286, %287 : vector<1x512xf32>
    %c9_321 = arith.constant 9 : index
    %c36_322 = arith.constant 36 : index
    %289 = vector.load %arg13[%c9_321, %c36_322] : memref<32x896xf32, #tpu.memory_space<vmem>>, vector<1x512xf32>
    %290 = arith.addf %288, %289 : vector<1x512xf32>
    %c10_323 = arith.constant 10 : index
    %c64_324 = arith.constant 64 : index
    %291 = vector.load %arg13[%c10_323, %c64_324] : memref<32x896xf32, #tpu.memory_space<vmem>>, vector<1x512xf32>
    %292 = arith.addf %290, %291 : vector<1x512xf32>
    %c11_325 = arith.constant 11 : index
    %c65_326 = arith.constant 65 : index
    %293 = vector.load %arg13[%c11_325, %c65_326] : memref<32x896xf32, #tpu.memory_space<vmem>>, vector<1x512xf32>
    %294 = arith.addf %292, %293 : vector<1x512xf32>
    %c12_327 = arith.constant 12 : index
    %c66_328 = arith.constant 66 : index
    %295 = vector.load %arg13[%c12_327, %c66_328] : memref<32x896xf32, #tpu.memory_space<vmem>>, vector<1x512xf32>
    %296 = arith.addf %294, %295 : vector<1x512xf32>
    %c13_329 = arith.constant 13 : index
    %c67_330 = arith.constant 67 : index
    %297 = vector.load %arg13[%c13_329, %c67_330] : memref<32x896xf32, #tpu.memory_space<vmem>>, vector<1x512xf32>
    %298 = arith.addf %296, %297 : vector<1x512xf32>
    %c14_331 = arith.constant 14 : index
    %c68_332 = arith.constant 68 : index
    %299 = vector.load %arg13[%c14_331, %c68_332] : memref<32x896xf32, #tpu.memory_space<vmem>>, vector<1x512xf32>
    %300 = arith.addf %298, %299 : vector<1x512xf32>
    %c15_333 = arith.constant 15 : index
    %c96_334 = arith.constant 96 : index
    %301 = vector.load %arg13[%c15_333, %c96_334] : memref<32x896xf32, #tpu.memory_space<vmem>>, vector<1x512xf32>
    %302 = arith.addf %300, %301 : vector<1x512xf32>
    %c16_335 = arith.constant 16 : index
    %c97_336 = arith.constant 97 : index
    %303 = vector.load %arg13[%c16_335, %c97_336] : memref<32x896xf32, #tpu.memory_space<vmem>>, vector<1x512xf32>
    %304 = arith.addf %302, %303 : vector<1x512xf32>
    %c17_337 = arith.constant 17 : index
    %c98_338 = arith.constant 98 : index
    %305 = vector.load %arg13[%c17_337, %c98_338] : memref<32x896xf32, #tpu.memory_space<vmem>>, vector<1x512xf32>
    %306 = arith.addf %304, %305 : vector<1x512xf32>
    %c18_339 = arith.constant 18 : index
    %c99_340 = arith.constant 99 : index
    %307 = vector.load %arg13[%c18_339, %c99_340] : memref<32x896xf32, #tpu.memory_space<vmem>>, vector<1x512xf32>
    %308 = arith.addf %306, %307 : vector<1x512xf32>
    %c19_341 = arith.constant 19 : index
    %c100_342 = arith.constant 100 : index
    %309 = vector.load %arg13[%c19_341, %c100_342] : memref<32x896xf32, #tpu.memory_space<vmem>>, vector<1x512xf32>
    %310 = arith.addf %308, %309 : vector<1x512xf32>
    %c20_343 = arith.constant 20 : index
    %c128_344 = arith.constant 128 : index
    %311 = vector.load %arg13[%c20_343, %c128_344] : memref<32x896xf32, #tpu.memory_space<vmem>>, vector<1x512xf32>
    %312 = arith.addf %310, %311 : vector<1x512xf32>
    %c21_345 = arith.constant 21 : index
    %c129_346 = arith.constant 129 : index
    %313 = vector.load %arg13[%c21_345, %c129_346] : memref<32x896xf32, #tpu.memory_space<vmem>>, vector<1x512xf32>
    %314 = arith.addf %312, %313 : vector<1x512xf32>
    %c22_347 = arith.constant 22 : index
    %c130_348 = arith.constant 130 : index
    %315 = vector.load %arg13[%c22_347, %c130_348] : memref<32x896xf32, #tpu.memory_space<vmem>>, vector<1x512xf32>
    %316 = arith.addf %314, %315 : vector<1x512xf32>
    %c23_349 = arith.constant 23 : index
    %c131_350 = arith.constant 131 : index
    %317 = vector.load %arg13[%c23_349, %c131_350] : memref<32x896xf32, #tpu.memory_space<vmem>>, vector<1x512xf32>
    %318 = arith.addf %316, %317 : vector<1x512xf32>
    %c24_351 = arith.constant 24 : index
    %c132_352 = arith.constant 132 : index
    %319 = vector.load %arg13[%c24_351, %c132_352] : memref<32x896xf32, #tpu.memory_space<vmem>>, vector<1x512xf32>
    %320 = arith.addf %318, %319 : vector<1x512xf32>
    %c0_353 = arith.constant 0 : index
    %321 = memref.load %arg8[%c0_353] : memref<1xf32, #tpu.memory_space<smem>>
    %322 = vector.broadcast %321 : f32 to vector<1x512xf32>
    %323 = arith.addf %320, %322 : vector<1x512xf32>
    %c0_354 = arith.constant 0 : index
    %c0_355 = arith.constant 0 : index
    %c0_356 = arith.constant 0 : index
    %324 = vector.load %arg9[%c0_354, %c0_355, %c0_356] : memref<1x1x512xf32, #tpu.memory_space<vmem>>, vector<1x1x512xf32>
    %325 = vector.shape_cast %324 : vector<1x1x512xf32> to vector<1x512xf32>
    %326 = vector.shape_cast %323 : vector<1x512xf32> to vector<1x1x512xf32>
    tpu.vector_store %arg9[%c0_354, %c0_355, %c0_356], %326 {strides = array<i32>} : memref<1x1x512xf32, #tpu.memory_space<vmem>>, vector<1x1x512xf32>,
    return
  }
  func.func @transform_0(%arg0: i32) -> (i32, i32, i32) {
    %c0_i32 = arith.constant 0 : i32
    %c0_i32_0 = arith.constant 0 : i32
    %c0_i32_1 = arith.constant 0 : i32
    return %arg0, %c0_i32, %c0_i32_0 : i32, i32, i32
  }
  func.func @transform_1(%arg0: i32) -> (i32, i32) {
    %c0_i32 = arith.constant 0 : i32
    %c0_i32_0 = arith.constant 0 : i32
    %c0_i32_1 = arith.constant 0 : i32
    return %c0_i32, %c0_i32_0 : i32, i32
  }
  func.func @transform_2(%arg0: i32) -> (i32, i32) {
    %c0_i32 = arith.constant 0 : i32
    %c0_i32_0 = arith.constant 0 : i32
    %c0_i32_1 = arith.constant 0 : i32
    return %c0_i32, %c0_i32_0 : i32, i32
  }
  func.func @transform_3(%arg0: i32) -> (i32, i32) {
    %c0_i32 = arith.constant 0 : i32
    %c0_i32_0 = arith.constant 0 : i32
    %c0_i32_1 = arith.constant 0 : i32
    return %c0_i32, %c0_i32_0 : i32, i32
  }
  func.func @transform_4(%arg0: i32) -> (i32, i32) {
    %c0_i32 = arith.constant 0 : i32
    %c0_i32_0 = arith.constant 0 : i32
    %c0_i32_1 = arith.constant 0 : i32
    return %c0_i32, %c0_i32_0 : i32, i32
  }
  func.func @transform_5(%arg0: i32) -> (i32, i32) {
    %c0_i32 = arith.constant 0 : i32
    %c0_i32_0 = arith.constant 0 : i32
    %c0_i32_1 = arith.constant 0 : i32
    return %c0_i32, %c0_i32_0 : i32, i32
  }
  func.func @transform_6(%arg0: i32) -> (i32, i32) {
    %c0_i32 = arith.constant 0 : i32
    %c0_i32_0 = arith.constant 0 : i32
    %c0_i32_1 = arith.constant 0 : i32
    return %c0_i32, %c0_i32_0 : i32, i32
  }
  func.func @transform_7(%arg0: i32) -> i32 {
    %c0_i32 = arith.constant 0 : i32
    %c0_i32_0 = arith.constant 0 : i32
    return %c0_i32 : i32
  }
  func.func @transform_8(%arg0: i32) -> (i32, i32, i32) {
    %c0_i32 = arith.constant 0 : i32
    %c0_i32_0 = arith.constant 0 : i32
    %c0_i32_1 = arith.constant 0 : i32
    return %arg0, %c0_i32, %c0_i32_0 : i32, i32, i32
  }
}

</mosaic_0001>

<llo_original>
// kernel: squeeze.3
$region0: #{squeeze.3}
  %s0 = inlined_call_operand.vmem [shape: f32[5,5,32], index: 0, kind: input, shape index: {}]
  %s1 = inlined_call_operand.vmem [shape: f32[25,32], index: 1, kind: output, shape index: {}]
  %v2 = vld [vmem:[%s0] sm:$0x1f]
  %vm3 = vcmask 261120
  %4 = vst.msk [vmem:[%s1] sm:$0x1f] %vm3, %v2
  %s5 = scalar_lea.vmem %s0, 8
  %v6 = vld [vmem:[%s5] sm:$0x1f]
  %vm7 = vcmask 261120
  %s8 = scalar_lea.vmem %s1, 5
  %9 = vst.msk [vmem:[%s8] sm:$0x1f] %vm7, %v6
  %s10 = scalar_lea.vmem %s0, 16
  %v11 = vld [vmem:[%s10] sm:$0x1f]
  %vm12 = vcmask 261120
  %s13 = scalar_lea.vmem %s1, 10
  %14 = vst.msk [vmem:[%s13] sm:$0x1f] %vm12, %v11
  %s15 = scalar_lea.vmem %s0, 24
  %v16 = vld [vmem:[%s15] sm:$0x1f]
  %vm17 = vcmask 261120
  %s18 = scalar_lea.vmem %s1, 15
  %19 = vst.msk [vmem:[%s18] sm:$0x1f] %vm17, %v16
  %s20 = scalar_lea.vmem %s0, 32
  %v21 = vld [vmem:[%s20] sm:$0x1f]
  %vm22 = vcmask 261120
  %s23 = scalar_lea.vmem %s1, 20
  %24 = vst.msk [vmem:[%s23] sm:$0x1f] %vm22, %v21

// kernel: srcnn_forward.1
$region0: #{srcnn_forward.1}
  #allocation0 [shape = 'u32[]', space=smem, size = 0x4, offset = 0x4, fixed_abs, tag = 'smem constant byte address 0x4 - core index']
  #allocation1 [shape = 'u32[144,128]{1,0:T(1,128)}', space=vmem, size = 0x12000, scoped, tag = 'internal scratch']
  #allocation2 [shape = 'f32[128,640]{1,0:T(8,128)}', space=vmem, size = 0x50000, scoped, tag = 'scratch operand']
  #allocation3 [shape = 'f32[64,640]{1,0:T(8,128)}', space=vmem, size = 0x28000, scoped, tag = 'scratch operand']
  #allocation4 [shape = 'f32[32,640]{1,0:T(8,128)}', space=vmem, size = 0x14000, scoped, tag = 'scratch operand']
  #allocation5 [shape = 'f32[32,896]{1,0:T(8,128)}', space=vmem, size = 0x1c000, scoped, tag = 'scratch operand']
  #allocation6 [shape = 'f32[1]{0:T(128)S(6)}', space=smem, size = 0x200, scoped, tag = 'scoped memory for srcnn_forward.1']
  %s0 = inlined_call_operand.vmem [shape: f32[2,1,1024], index: 0, kind: input, shape index: {}]
  %s1 = inlined_call_operand.vmem [shape: f32[1,640], index: 1, kind: input, shape index: {}]
  %s2 = inlined_call_operand.vmem [shape: f32[64,128], index: 2, kind: input, shape index: {}]
  %s3 = inlined_call_operand.vmem [shape: f32[64,1], index: 3, kind: input, shape index: {}]
  %s4 = inlined_call_operand.vmem [shape: f32[32,64], index: 4, kind: input, shape index: {}]
  %s5 = inlined_call_operand.vmem [shape: f32[32,1], index: 5, kind: input, shape index: {}]
  %s6 = inlined_call_operand.vmem [shape: f32[32,32], index: 6, kind: input, shape index: {}]
  %s7 = inlined_call_operand.<no memory space> [shape: f32[1], index: 7, kind: input, shape index: {}]
  %s8 = inlined_call_operand.vmem [shape: f32[2,1,512], index: 8, kind: output, shape index: {}]
  %s9 = sld [smem:[#allocation0]]
  $region65: #{srcnn_forward.1} parent=0
    _
  %s11 = ssub.s32 1, %s9
  %s12 = scalar_select 0, %s11, %s9
  %13 = sst [smem:[#allocation6]] %s7
  loop: start=0, step=1, limit=4
  $region2: #{srcnn_forward.1} parent=0 // loop_pre_header
    _
  $region3: #{srcnn_forward.1} parent=0 // loop_header
    %s15 = sphi 0, %s19
    %p16 = scmp.ge.s32.totalorder %s15, 4
    %s25 = sphi 0, %s27
    %s28 = sphi 0, %s25
    %s29 = sphi 0, %s28
    %s45 = sphi 0, %s29
    %s49 = sphi 0, %s49
    %s51 = sphi 0, %s49
    %s52 = sphi 0, %s51
    %s66 = sphi 0, %s52
    %s70 = sphi 0, %s70
    %s72 = sphi 0, %s70
    %s73 = sphi 0, %s72
    %s87 = sphi 0, %s73
    %s91 = sphi 0, %s91
    %s93 = sphi 0, %s91
    %s94 = sphi 0, %s93
    %s108 = sphi 0, %s94
    %s112 = sphi 0, %s112
    %s114 = sphi 0, %s112
    %s115 = sphi 0, %s114
    %s129 = sphi 0, %s115
    %s133 = sphi 0, %s133
    %s135 = sphi 0, %s133
    %s136 = sphi 0, %s135
    %s150 = sphi 0, %s136
    %s154 = sphi 0, %s154
    %s156 = sphi 0, %s154
    %s157 = sphi 0, %s156
    %s171 = sphi 0, %s157
    %s175 = sphi 0, %s175
    %s177 = sphi 0, %s175
    %s178 = sphi 0, %s177
    %s192 = sphi 0, %s178
    %s198 = sphi 0, %s200
    %s201 = sphi 0, %s198
    %s202 = sphi 0, %s201
    %s218 = sphi 0, %s202
  $region4: #{srcnn_forward.1} parent=0 // loop_header_branch
    %18 = sbr.rel (%p16) target = $region8
  $region5: #{srcnn_forward.1} parent=0 // loop_body
    %s20 = ssub.s32 %s15, 1
    %s21 = ssub.s32 %s15, 2
    %s22 = sadd.s32 %s15, 1
    %s23 = ssub.s32 %s15, %s22
    %p24 = scmp.eq.s32.totalorder %s23, 0
    %s26 = sadd.s32 %s25, 1
    %s27 = scalar_select %p24, %s25, %s26
    %p30 = pneg %p24
    %p31 = scmp.eq.s32.totalorder %s15, 1
    %p32 = por %p30, %p31
    %p33 = scmp.ne.s32.totalorder %s25, %s28
    %p34 = scmp.eq.s32.totalorder %s15, 0
    %p35 = por %p33, %p34
    %p36 = scmp.ne.s32.totalorder %s25, %s28
    %p37 = scmp.eq.s32.totalorder %s20, 1
    %p38 = por %p36, %p37
    %p39 = scmp.ne.s32.totalorder %s28, %s29
    %p40 = scmp.eq.s32.totalorder %s20, 0
    %p41 = por %p39, %p40
    %p42 = scmp.ne.s32.totalorder %s28, %s29
    %p43 = scmp.eq.s32.totalorder %s21, 1
    %p44 = por %p42, %p43
    %p46 = scmp.ne.s32.totalorder %s29, %s45
    %p47 = scmp.eq.s32.totalorder %s21, 0
    %p48 = por %p46, %p47
    %s50 = sadd.s32 %s49, 1
    %p53 = scmp.eq.s32.totalorder %s15, 1
    %p54 = scmp.ne.s32.totalorder %s49, %s51
    %p55 = scmp.eq.s32.totalorder %s15, 0
    %p56 = por %p54, %p55
    %p57 = scmp.ne.s32.totalorder %s49, %s51
    %p58 = scmp.eq.s32.totalorder %s20, 1
    %p59 = por %p57, %p58
    %p60 = scmp.ne.s32.totalorder %s51, %s52
    %p61 = scmp.eq.s32.totalorder %s20, 0
    %p62 = por %p60, %p61
    %p63 = scmp.ne.s32.totalorder %s51, %s52
    %p64 = scmp.eq.s32.totalorder %s21, 1
    %p65 = por %p63, %p64
    %p67 = scmp.ne.s32.totalorder %s52, %s66
    %p68 = scmp.eq.s32.totalorder %s21, 0
    %p69 = por %p67, %p68
    %s71 = sadd.s32 %s70, 1
    %p74 = scmp.eq.s32.totalorder %s15, 1
    %p75 = scmp.ne.s32.totalorder %s70, %s72
    %p76 = scmp.eq.s32.totalorder %s15, 0
    %p77 = por %p75, %p76
    %p78 = scmp.ne.s32.totalorder %s70, %s72
    %p79 = scmp.eq.s32.totalorder %s20, 1
    %p80 = por %p78, %p79
    %p81 = scmp.ne.s32.totalorder %s72, %s73
    %p82 = scmp.eq.s32.totalorder %s20, 0
    %p83 = por %p81, %p82
    %p84 = scmp.ne.s32.totalorder %s72, %s73
    %p85 = scmp.eq.s32.totalorder %s21, 1
    %p86 = por %p84, %p85
    %p88 = scmp.ne.s32.totalorder %s73, %s87
    %p89 = scmp.eq.s32.totalorder %s21, 0
    %p90 = por %p88, %p89
    %s92 = sadd.s32 %s91, 1
    %p95 = scmp.eq.s32.totalorder %s15, 1
    %p96 = scmp.ne.s32.totalorder %s91, %s93
    %p97 = scmp.eq.s32.totalorder %s15, 0
    %p98 = por %p96, %p97
    %p99 = scmp.ne.s32.totalorder %s91, %s93
    %p100 = scmp.eq.s32.totalorder %s20, 1
    %p101 = por %p99, %p100
    %p102 = scmp.ne.s32.totalorder %s93, %s94
    %p103 = scmp.eq.s32.totalorder %s20, 0
    %p104 = por %p102, %p103
    %p105 = scmp.ne.s32.totalorder %s93, %s94
    %p106 = scmp.eq.s32.totalorder %s21, 1
    %p107 = por %p105, %p106
    %p109 = scmp.ne.s32.totalorder %s94, %s108
    %p110 = scmp.eq.s32.totalorder %s21, 0
    %p111 = por %p109, %p110
    %s113 = sadd.s32 %s112, 1
    %p116 = scmp.eq.s32.totalorder %s15, 1
    %p117 = scmp.ne.s32.totalorder %s112, %s114
    %p118 = scmp.eq.s32.totalorder %s15, 0
    %p119 = por %p117, %p118
    %p120 = scmp.ne.s32.totalorder %s112, %s114
    %p121 = scmp.eq.s32.totalorder %s20, 1
    %p122 = por %p120, %p121
    %p123 = scmp.ne.s32.totalorder %s114, %s115
    %p124 = scmp.eq.s32.totalorder %s20, 0
    %p125 = por %p123, %p124
    %p126 = scmp.ne.s32.totalorder %s114, %s115
    %p127 = scmp.eq.s32.totalorder %s21, 1
    %p128 = por %p126, %p127
    %p130 = scmp.ne.s32.totalorder %s115, %s129
    %p131 = scmp.eq.s32.totalorder %s21, 0
    %p132 = por %p130, %p131
    %s134 = sadd.s32 %s133, 1
    %p137 = scmp.eq.s32.totalorder %s15, 1
    %p138 = scmp.ne.s32.totalorder %s133, %s135
    %p139 = scmp.eq.s32.totalorder %s15, 0
    %p140 = por %p138, %p139
    %p141 = scmp.ne.s32.totalorder %s133, %s135
    %p142 = scmp.eq.s32.totalorder %s20, 1
    %p143 = por %p141, %p142
    %p144 = scmp.ne.s32.totalorder %s135, %s136
    %p145 = scmp.eq.s32.totalorder %s20, 0
    %p146 = por %p144, %p145
    %p147 = scmp.ne.s32.totalorder %s135, %s136
    %p148 = scmp.eq.s32.totalorder %s21, 1
    %p149 = por %p147, %p148
    %p151 = scmp.ne.s32.totalorder %s136, %s150
    %p152 = scmp.eq.s32.totalorder %s21, 0
    %p153 = por %p151, %p152
    %s155 = sadd.s32 %s154, 1
    %p158 = scmp.eq.s32.totalorder %s15, 1
    %p159 = scmp.ne.s32.totalorder %s154, %s156
    %p160 = scmp.eq.s32.totalorder %s15, 0
    %p161 = por %p159, %p160
    %p162 = scmp.ne.s32.totalorder %s154, %s156
    %p163 = scmp.eq.s32.totalorder %s20, 1
    %p164 = por %p162, %p163
    %p165 = scmp.ne.s32.totalorder %s156, %s157
    %p166 = scmp.eq.s32.totalorder %s20, 0
    %p167 = por %p165, %p166
    %p168 = scmp.ne.s32.totalorder %s156, %s157
    %p169 = scmp.eq.s32.totalorder %s21, 1
    %p170 = por %p168, %p169
    %p172 = scmp.ne.s32.totalorder %s157, %s171
    %p173 = scmp.eq.s32.totalorder %s21, 0
    %p174 = por %p172, %p173
    %s176 = sadd.s32 %s175, 1
    %p179 = scmp.eq.s32.totalorder %s15, 1
    %p180 = scmp.ne.s32.totalorder %s175, %s177
    %p181 = scmp.eq.s32.totalorder %s15, 0
    %p182 = por %p180, %p181
    %p183 = scmp.ne.s32.totalorder %s175, %s177
    %p184 = scmp.eq.s32.totalorder %s20, 1
    %p185 = por %p183, %p184
    %p186 = scmp.ne.s32.totalorder %s177, %s178
    %p187 = scmp.eq.s32.totalorder %s20, 0
    %p188 = por %p186, %p187
    %p189 = scmp.ne.s32.totalorder %s177, %s178
    %p190 = scmp.eq.s32.totalorder %s21, 1
    %p191 = por %p189, %p190
    %p193 = scmp.ne.s32.totalorder %s178, %s192
    %p194 = scmp.eq.s32.totalorder %s21, 0
    %p195 = por %p193, %p194
    %s196 = ssub.s32 %s15, %s22
    %p197 = scmp.eq.s32.totalorder %s196, 0
    %s199 = sadd.s32 %s198, 1
    %s200 = scalar_select %p197, %s198, %s199
    %p203 = pneg %p197
    %p204 = scmp.eq.s32.totalorder %s15, 1
    %p205 = por %p203, %p204
    %p206 = scmp.ne.s32.totalorder %s198, %s201
    %p207 = scmp.eq.s32.totalorder %s15, 0
    %p208 = por %p206, %p207
    %p209 = scmp.ne.s32.totalorder %s198, %s201
    %p210 = scmp.eq.s32.totalorder %s20, 1
    %p211 = por %p209, %p210
    %p212 = scmp.ne.s32.totalorder %s201, %s202
    %p213 = scmp.eq.s32.totalorder %s20, 0
    %p214 = por %p212, %p213
    %p215 = scmp.ne.s32.totalorder %s201, %s202
    %p216 = scmp.eq.s32.totalorder %s21, 1
    %p217 = por %p215, %p216
    %p219 = scmp.ne.s32.totalorder %s202, %s218
    %p220 = scmp.eq.s32.totalorder %s21, 0
    %p221 = por %p219, %p220
    %p222 = scmp.le.s32.totalorder 1, %s15
    %p223 = scmp.lt.s32.totalorder %s15, 3
    %p224 = pnand %p222, %p223
    %p225 = pneg %p224
    // Predicated region
    $region9: #{srcnn_forward.1} parent=5 // pred_check
      _
    $region10: #{srcnn_forward.1} parent=5 // pred_check_branch
      %227 = sbr.rel (%p224) target = $region12
    $region11: #{srcnn_forward.1} parent=5 // pred_region
      %s228 = ssub.s32 %s15, 1
      // Predicated region
      $region13: #{srcnn_forward.1} parent=11 // pred_check
        %p229 = pneg %p62
      $region14: #{srcnn_forward.1} parent=11 // pred_check_branch
        %231 = sbr.rel (%p229) target = $region16
      $region15: #{srcnn_forward.1} parent=11 // pred_region
        _
      $region16: #{srcnn_forward.1} parent=11 // pred_fallthru
        _
      // Predicated region
      $region17: #{srcnn_forward.1} parent=11 // pred_check
        %p232 = pneg %p83
      $region18: #{srcnn_forward.1} parent=11 // pred_check_branch
        %234 = sbr.rel (%p232) target = $region20
      $region19: #{srcnn_forward.1} parent=11 // pred_region
        _
      $region20: #{srcnn_forward.1} parent=11 // pred_fallthru
        _
      // Predicated region
      $region21: #{srcnn_forward.1} parent=11 // pred_check
        %p235 = pneg %p104
      $region22: #{srcnn_forward.1} parent=11 // pred_check_branch
        %237 = sbr.rel (%p235) target = $region24
      $region23: #{srcnn_forward.1} parent=11 // pred_region
        _
      $region24: #{srcnn_forward.1} parent=11 // pred_fallthru
        _
      // Predicated region
      $region25: #{srcnn_forward.1} parent=11 // pred_check
        %p238 = pneg %p125
      $region26: #{srcnn_forward.1} parent=11 // pred_check_branch
        %240 = sbr.rel (%p238) target = $region28
      $region27: #{srcnn_forward.1} parent=11 // pred_region
        _
      $region28: #{srcnn_forward.1} parent=11 // pred_fallthru
        _
      // Predicated region
      $region29: #{srcnn_forward.1} parent=11 // pred_check
        %p241 = pneg %p146
      $region30: #{srcnn_forward.1} parent=11 // pred_check_branch
        %243 = sbr.rel (%p241) target = $region32
      $region31: #{srcnn_forward.1} parent=11 // pred_region
        _
      $region32: #{srcnn_forward.1} parent=11 // pred_fallthru
        _
      // Predicated region
      $region33: #{srcnn_forward.1} parent=11 // pred_check
        %p244 = pneg %p167
      $region34: #{srcnn_forward.1} parent=11 // pred_check_branch
        %246 = sbr.rel (%p244) target = $region36
      $region35: #{srcnn_forward.1} parent=11 // pred_region
        _
      $region36: #{srcnn_forward.1} parent=11 // pred_fallthru
        _
      // Predicated region
      $region37: #{srcnn_forward.1} parent=11 // pred_check
        %p247 = pneg %p188
      $region38: #{srcnn_forward.1} parent=11 // pred_check_branch
        %249 = sbr.rel (%p247) target = $region40
      $region39: #{srcnn_forward.1} parent=11 // pred_region
        _
      $region40: #{srcnn_forward.1} parent=11 // pred_fallthru
        _
    $region12: #{srcnn_forward.1} parent=5 // pred_fallthru
      _
    %p250 = scmp.lt.s32.totalorder %s15, 2
    // Predicated region
    $region41: #{srcnn_forward.1} parent=5 // pred_check
      %p251 = pneg %p250
    $region42: #{srcnn_forward.1} parent=5 // pred_check_branch
      %253 = sbr.rel (%p251) target = $region44
    $region43: #{srcnn_forward.1} parent=5 // pred_region
      // Predicated region
      $region45: #{srcnn_forward.1} parent=43 // pred_check
        %p254 = pneg %p35
      $region46: #{srcnn_forward.1} parent=43 // pred_check_branch
        %256 = sbr.rel (%p254) target = $region48
      $region47: #{srcnn_forward.1} parent=43 // pred_region
        %p257 = scmp.lt.s32.totalorder %s15, 1
        %s258 = scalar_select %p257, %s15, 1
        %s259 = smul.addr %s258, 8
        %s260 = scalar_lea.vmem %s0, %s259
      $region48: #{srcnn_forward.1} parent=43 // pred_fallthru
        _
    $region44: #{srcnn_forward.1} parent=5 // pred_fallthru
      _
    %p261 = scmp.le.s32.totalorder 1, %s15
    %p262 = scmp.lt.s32.totalorder %s15, 3
    %p263 = pnand %p261, %p262
    %p264 = pneg %p263
    // Predicated region
    $region49: #{srcnn_forward.1} parent=5 // pred_check
      _
    $region50: #{srcnn_forward.1} parent=5 // pred_check_branch
      %266 = sbr.rel (%p263) target = $region52
    $region51: #{srcnn_forward.1} parent=5 // pred_region
      %s267 = ssub.s32 %s15, 1
      %p268 = scmp.lt.s32.totalorder %s20, 1
      %s269 = scalar_select %p268, %s20, 1
      %s270 = smul.addr %s269, 8
      %s271 = scalar_lea.vmem %s0, %s270
      %p272 = pneg %p41
      %p273 = pneg %p38
      %p274 = pneg %p62
      %p275 = pneg %p59
      %p276 = pneg %p83
      %p277 = pneg %p80
      %p278 = pneg %p104
      %p279 = pneg %p101
      %p280 = pneg %p125
      %p281 = pneg %p122
      %p282 = pneg %p146
      %p283 = pneg %p143
      %p284 = pneg %p167
      %p285 = pneg %p164
      %p286 = pneg %p188
      %p287 = pneg %p185
      %p288 = pneg %p214
      %p289 = pneg %p211
      %p290 = scmp.lt.s32.totalorder %s20, 1
      %s291 = scalar_select %p290, %s20, 1
      %s292 = smul.addr %s291, 4
      %s293 = scalar_lea.vmem %s8, %s292
      %p294 = scmp.lt.s32.totalorder %s20, 1
      %s295 = scalar_select %p294, %s20, 1
      %s296 = smul.addr %s295, 8
      %s297 = scalar_lea.vmem %s0, %s296
      %p298 = scmp.lt.s32.totalorder %s20, 1
      %s299 = scalar_select %p298, %s20, 1
      %s300 = smul.addr %s299, 4
      %s301 = scalar_lea.vmem %s8, %s300
      %302 = vst [vmem:[#allocation2 + $0x190] sm:$0xff] 0.0
      %303 = vst [vmem:[#allocation2 + $0x198] sm:$0xff] 0.0
      %304 = vst [vmem:[#allocation2 + $0x1a0] sm:$0xff] 0.0
      %305 = vst [vmem:[#allocation2 + $0x1a8] sm:$0xff] 0.0
      %306 = vst [vmem:[#allocation2 + $0x1b0] sm:$0xff] 0.0
      %307 = vst [vmem:[#allocation2 + $0x1b8] sm:$0xff] 0.0
      %308 = vst [vmem:[#allocation2 + $0x1c0] sm:$0xff] 0.0
      %309 = vst [vmem:[#allocation2 + $0x1c8] sm:$0xff] 0.0
      %310 = vst [vmem:[#allocation2 + $0x1d0] sm:$0xff] 0.0
      %311 = vst [vmem:[#allocation2 + $0x1d8] sm:$0xff] 0.0
      %312 = vst [vmem:[#allocation2 + $0x1e0] sm:$0xff] 0.0
      %313 = vst [vmem:[#allocation2 + $0x1e8] sm:$0xff] 0.0
      %314 = vst [vmem:[#allocation2 + $0x1f0] sm:$0xff] 0.0
      %315 = vst [vmem:[#allocation2 + $0x1f8] sm:$0xff] 0.0
      %316 = vst [vmem:[#allocation2 + $0x200] sm:$0xff] 0.0
      %317 = vst [vmem:[#allocation2 + $0x208] sm:$0xff] 0.0
      %318 = vst [vmem:[#allocation2 + $0x210] sm:$0xff] 0.0
      %319 = vst [vmem:[#allocation2 + $0x218] sm:$0xff] 0.0
      %320 = vst [vmem:[#allocation2 + $0x220] sm:$0xff] 0.0
      %321 = vst [vmem:[#allocation2 + $0x228] sm:$0xff] 0.0
      %322 = vst [vmem:[#allocation2 + $0x230] sm:$0xff] 0.0
      %323 = vst [vmem:[#allocation2 + $0x238] sm:$0xff] 0.0
      %324 = vst [vmem:[#allocation2 + $0x240] sm:$0xff] 0.0
      %325 = vst [vmem:[#allocation2 + $0x248] sm:$0xff] 0.0
      %326 = vst [vmem:[#allocation2 + $0x250] sm:$0xff] 0.0
      %327 = vst [vmem:[#allocation2 + $0x258] sm:$0xff] 0.0
      %328 = vst [vmem:[#allocation2 + $0x260] sm:$0xff] 0.0
      %329 = vst [vmem:[#allocation2 + $0x268] sm:$0xff] 0.0
      %330 = vst [vmem:[#allocation2 + $0x270] sm:$0xff] 0.0
      %331 = vst [vmem:[#allocation2 + $0x278] sm:$0xff] 0.0
      %v332 = vld [vmem:[%s297] sm:$0x1f]
      %v333 = vlaneseq
      %vm334 = vcmp.ge.s32.totalorder %v333, 0
      %vm335 = vcmp.lt.s32.totalorder %v333, 640
      %vm336 = vmand %vm334, %vm335
      %337 = vst.msk [vmem:[#allocation2] ss:$8 sm:$0xf] %vm336, %v332
      %338 = vst.msk [vmem:[#allocation2] ss:$8 sm:$0x10] %vm336, %v332
      %v339 = vld [vmem:[%s297] sm:$0x3f]
      %341 = vrot.lane.b32.xlu0 %v339, 127
      %v342 = vpop.permute.xlu0 %341
      %v343 = vrot.slane %v342, 1
      %vm344 = vcmask 1039360
      %v345 = vsel %vm344, %v342, %v343
      %s347 = scalar_lea.vmem [#allocation2], 1
      %348 = vst.msk [vmem:[%s347] ss:$8 sm:$0xf] %vm336, %v345
      %349 = vst.msk [vmem:[%s347] ss:$8 sm:$0x10] %vm336, %v345
      %v350 = vld [vmem:[%s297] sm:$0x3f]
      %352 = vrot.lane.b32.xlu0 %v350, 126
      %v353 = vpop.permute.xlu0 %352
      %v354 = vrot.slane %v353, 1
      %vm355 = vcmask 1031168
      %v356 = vsel %vm355, %v353, %v354
      %s358 = scalar_lea.vmem [#allocation2], 2
      %359 = vst.msk [vmem:[%s358] ss:$8 sm:$0xf] %vm336, %v356
      %360 = vst.msk [vmem:[%s358] ss:$8 sm:$0x10] %vm336, %v356
      %v361 = vld [vmem:[%s297] sm:$0x3f]
      %363 = vrot.lane.b32.xlu0 %v361, 125
      %v364 = vpop.permute.xlu0 %363
      %v365 = vrot.slane %v364, 1
      %vm366 = vcmask 1022976
      %v367 = vsel %vm366, %v364, %v365
      %s369 = scalar_lea.vmem [#allocation2], 3
      %370 = vst.msk [vmem:[%s369] ss:$8 sm:$0xf] %vm336, %v367
      %371 = vst.msk [vmem:[%s369] ss:$8 sm:$0x10] %vm336, %v367
      %v372 = vld [vmem:[%s297] sm:$0x3f]
      %374 = vrot.lane.b32.xlu0 %v372, 124
      %v375 = vpop.permute.xlu0 %374
      %v376 = vrot.slane %v375, 1
      %vm377 = vcmask 1014784
      %v378 = vsel %vm377, %v375, %v376
      %s380 = scalar_lea.vmem [#allocation2], 4
      %381 = vst.msk [vmem:[%s380] ss:$8 sm:$0xf] %vm336, %v378
      %382 = vst.msk [vmem:[%s380] ss:$8 sm:$0x10] %vm336, %v378
      %v383 = vld [vmem:[%s297] sm:$0x3f]
      %385 = vrot.lane.b32.xlu0 %v383, 123
      %v386 = vpop.permute.xlu0 %385
      %v387 = vrot.slane %v386, 1
      %vm388 = vcmask 1006592
      %v389 = vsel %vm388, %v386, %v387
      %s391 = scalar_lea.vmem [#allocation2], 5
      %392 = vst.msk [vmem:[%s391] ss:$8 sm:$0xf] %vm336, %v389
      %393 = vst.msk [vmem:[%s391] ss:$8 sm:$0x10] %vm336, %v389
      %v394 = vld [vmem:[%s297] sm:$0x3f]
      %396 = vrot.lane.b32.xlu0 %v394, 122
      %v397 = vpop.permute.xlu0 %396
      %v398 = vrot.slane %v397, 1
      %vm399 = vcmask 998400
      %v400 = vsel %vm399, %v397, %v398
      %s402 = scalar_lea.vmem [#allocation2], 6
      %403 = vst.msk [vmem:[%s402] ss:$8 sm:$0xf] %vm336, %v400
      %404 = vst.msk [vmem:[%s402] ss:$8 sm:$0x10] %vm336, %v400
      %v405 = vld [vmem:[%s297] sm:$0x3f]
      %407 = vrot.lane.b32.xlu0 %v405, 121
      %v408 = vpop.permute.xlu0 %407
      %v409 = vrot.slane %v408, 1
      %vm410 = vcmask 990208
      %v411 = vsel %vm410, %v408, %v409
      %s413 = scalar_lea.vmem [#allocation2], 7
      %414 = vst.msk [vmem:[%s413] ss:$8 sm:$0xf] %vm336, %v411
      %415 = vst.msk [vmem:[%s413] ss:$8 sm:$0x10] %vm336, %v411
      %v416 = vld [vmem:[%s297] sm:$0x3f]
      %418 = vrot.lane.b32.xlu0 %v416, 120
      %v419 = vpop.permute.xlu0 %418
      %v420 = vrot.slane %v419, 1
      %vm421 = vcmask 982016
      %v422 = vsel %vm421, %v419, %v420
      %s424 = scalar_lea.vmem [#allocation2], 40
      %425 = vst.msk [vmem:[%s424] ss:$8 sm:$0xf] %vm336, %v422
      %426 = vst.msk [vmem:[%s424] ss:$8 sm:$0x10] %vm336, %v422
      %v427 = vld [vmem:[%s297] sm:$0x3f]
      %429 = vrot.lane.b32.xlu0 %v427, 96
      %v430 = vpop.permute.xlu0 %429
      %v431 = vrot.slane %v430, 1
      %vm432 = vcmask 785408
      %v433 = vsel %vm432, %v430, %v431
      %s435 = scalar_lea.vmem [#allocation2], 41
      %436 = vst.msk [vmem:[%s435] ss:$8 sm:$0xf] %vm336, %v433
      %437 = vst.msk [vmem:[%s435] ss:$8 sm:$0x10] %vm336, %v433
      %v438 = vld [vmem:[%s297] sm:$0x3f]
      %440 = vrot.lane.b32.xlu0 %v438, 95
      %v441 = vpop.permute.xlu0 %440
      %v442 = vrot.slane %v441, 1
      %vm443 = vcmask 777216
      %v444 = vsel %vm443, %v441, %v442
      %s446 = scalar_lea.vmem [#allocation2], 42
      %447 = vst.msk [vmem:[%s446] ss:$8 sm:$0xf] %vm336, %v444
      %448 = vst.msk [vmem:[%s446] ss:$8 sm:$0x10] %vm336, %v444
      %v449 = vld [vmem:[%s297] sm:$0x3f]
      %451 = vrot.lane.b32.xlu0 %v449, 94
      %v452 = vpop.permute.xlu0 %451
      %v453 = vrot.slane %v452, 1
      %vm454 = vcmask 769024
      %v455 = vsel %vm454, %v452, %v453
      %s457 = scalar_lea.vmem [#allocation2], 43
      %458 = vst.msk [vmem:[%s457] ss:$8 sm:$0xf] %vm336, %v455
      %459 = vst.msk [vmem:[%s457] ss:$8 sm:$0x10] %vm336, %v455
      %v460 = vld [vmem:[%s297] sm:$0x3f]
      %462 = vrot.lane.b32.xlu0 %v460, 93
      %v463 = vpop.permute.xlu0 %462
      %v464 = vrot.slane %v463, 1
      %vm465 = vcmask 760832
      %v466 = vsel %vm465, %v463, %v464
      %s468 = scalar_lea.vmem [#allocation2], 44
      %469 = vst.msk [vmem:[%s468] ss:$8 sm:$0xf] %vm336, %v466
      %470 = vst.msk [vmem:[%s468] ss:$8 sm:$0x10] %vm336, %v466
      %v471 = vld [vmem:[%s297] sm:$0x3f]
      %473 = vrot.lane.b32.xlu0 %v471, 92
      %v474 = vpop.permute.xlu0 %473
      %v475 = vrot.slane %v474, 1
      %vm476 = vcmask 752640
      %v477 = vsel %vm476, %v474, %v475
      %s479 = scalar_lea.vmem [#allocation2], 45
      %480 = vst.msk [vmem:[%s479] ss:$8 sm:$0xf] %vm336, %v477
      %481 = vst.msk [vmem:[%s479] ss:$8 sm:$0x10] %vm336, %v477
      %v482 = vld [vmem:[%s297] sm:$0x3f]
      %484 = vrot.lane.b32.xlu0 %v482, 91
      %v485 = vpop.permute.xlu0 %484
      %v486 = vrot.slane %v485, 1
      %vm487 = vcmask 744448
      %v488 = vsel %vm487, %v485, %v486
      %s490 = scalar_lea.vmem [#allocation2], 46
      %491 = vst.msk [vmem:[%s490] ss:$8 sm:$0xf] %vm336, %v488
      %492 = vst.msk [vmem:[%s490] ss:$8 sm:$0x10] %vm336, %v488
      %v493 = vld [vmem:[%s297] sm:$0x3f]
      %495 = vrot.lane.b32.xlu0 %v493, 90
      %v496 = vpop.permute.xlu0 %495
      %v497 = vrot.slane %v496, 1
      %vm498 = vcmask 736256
      %v499 = vsel %vm498, %v496, %v497
      %s501 = scalar_lea.vmem [#allocation2], 47
      %502 = vst.msk [vmem:[%s501] ss:$8 sm:$0xf] %vm336, %v499
      %503 = vst.msk [vmem:[%s501] ss:$8 sm:$0x10] %vm336, %v499
      %v504 = vld [vmem:[%s297] sm:$0x3f]
      %506 = vrot.lane.b32.xlu0 %v504, 89
      %v507 = vpop.permute.xlu0 %506
      %v508 = vrot.slane %v507, 1
      %vm509 = vcmask 728064
      %v510 = vsel %vm509, %v507, %v508
      %s512 = scalar_lea.vmem [#allocation2], 80
      %513 = vst.msk [vmem:[%s512] ss:$8 sm:$0xf] %vm336, %v510
      %514 = vst.msk [vmem:[%s512] ss:$8 sm:$0x10] %vm336, %v510
      %v515 = vld [vmem:[%s297] sm:$0x3f]
      %517 = vrot.lane.b32.xlu0 %v515, 88
      %v518 = vpop.permute.xlu0 %517
      %v519 = vrot.slane %v518, 1
      %vm520 = vcmask 719872
      %v521 = vsel %vm520, %v518, %v519
      %s523 = scalar_lea.vmem [#allocation2], 81
      %524 = vst.msk [vmem:[%s523] ss:$8 sm:$0xf] %vm336, %v521
      %525 = vst.msk [vmem:[%s523] ss:$8 sm:$0x10] %vm336, %v521
      %v526 = vld [vmem:[%s297] sm:$0x3f]
      %528 = vrot.lane.b32.xlu0 %v526, 64
      %v529 = vpop.permute.xlu0 %528
      %v530 = vrot.slane %v529, 1
      %vm531 = vcmask 523264
      %v532 = vsel %vm531, %v529, %v530
      %s534 = scalar_lea.vmem [#allocation2], 82
      %535 = vst.msk [vmem:[%s534] ss:$8 sm:$0xf] %vm336, %v532
      %536 = vst.msk [vmem:[%s534] ss:$8 sm:$0x10] %vm336, %v532
      %v537 = vld [vmem:[%s297] sm:$0x3f]
      %539 = vrot.lane.b32.xlu0 %v537, 63
      %v540 = vpop.permute.xlu0 %539
      %v541 = vrot.slane %v540, 1
      %vm542 = vcmask 515072
      %v543 = vsel %vm542, %v540, %v541
      %s545 = scalar_lea.vmem [#allocation2], 83
      %546 = vst.msk [vmem:[%s545] ss:$8 sm:$0xf] %vm336, %v543
      %547 = vst.msk [vmem:[%s545] ss:$8 sm:$0x10] %vm336, %v543
      %v548 = vld [vmem:[%s297] sm:$0x3f]
      %550 = vrot.lane.b32.xlu0 %v548, 62
      %v551 = vpop.permute.xlu0 %550
      %v552 = vrot.slane %v551, 1
      %vm553 = vcmask 506880
      %v554 = vsel %vm553, %v551, %v552
      %s556 = scalar_lea.vmem [#allocation2], 84
      %557 = vst.msk [vmem:[%s556] ss:$8 sm:$0xf] %vm336, %v554
      %558 = vst.msk [vmem:[%s556] ss:$8 sm:$0x10] %vm336, %v554
      %v559 = vld [vmem:[%s297] sm:$0x3f]
      %561 = vrot.lane.b32.xlu0 %v559, 61
      %v562 = vpop.permute.xlu0 %561
      %v563 = vrot.slane %v562, 1
      %vm564 = vcmask 498688
      %v565 = vsel %vm564, %v562, %v563
      %s567 = scalar_lea.vmem [#allocation2], 85
      %568 = vst.msk [vmem:[%s567] ss:$8 sm:$0xf] %vm336, %v565
      %569 = vst.msk [vmem:[%s567] ss:$8 sm:$0x10] %vm336, %v565
      %v570 = vld [vmem:[%s297] sm:$0x3f]
      %572 = vrot.lane.b32.xlu0 %v570, 60
      %v573 = vpop.permute.xlu0 %572
      %v574 = vrot.slane %v573, 1
      %vm575 = vcmask 490496
      %v576 = vsel %vm575, %v573, %v574
      %s578 = scalar_lea.vmem [#allocation2], 86
      %579 = vst.msk [vmem:[%s578] ss:$8 sm:$0xf] %vm336, %v576
      %580 = vst.msk [vmem:[%s578] ss:$8 sm:$0x10] %vm336, %v576
      %v581 = vld [vmem:[%s297] sm:$0x3f]
      %583 = vrot.lane.b32.xlu0 %v581, 59
      %v584 = vpop.permute.xlu0 %583
      %v585 = vrot.slane %v584, 1
      %vm586 = vcmask 482304
      %v587 = vsel %vm586, %v584, %v585
      %s589 = scalar_lea.vmem [#allocation2], 87
      %590 = vst.msk [vmem:[%s589] ss:$8 sm:$0xf] %vm336, %v587
      %591 = vst.msk [vmem:[%s589] ss:$8 sm:$0x10] %vm336, %v587
      %v592 = vld [vmem:[%s297] sm:$0x3f]
      %594 = vrot.lane.b32.xlu0 %v592, 58
      %v595 = vpop.permute.xlu0 %594
      %v596 = vrot.slane %v595, 1
      %vm597 = vcmask 474112
      %v598 = vsel %vm597, %v595, %v596
      %s600 = scalar_lea.vmem [#allocation2], 120
      %601 = vst.msk [vmem:[%s600] ss:$8 sm:$0xf] %vm336, %v598
      %602 = vst.msk [vmem:[%s600] ss:$8 sm:$0x10] %vm336, %v598
      %v603 = vld [vmem:[%s297] sm:$0x3f]
      %605 = vrot.lane.b32.xlu0 %v603, 57
      %v606 = vpop.permute.xlu0 %605
      %v607 = vrot.slane %v606, 1
      %vm608 = vcmask 465920
      %v609 = vsel %vm608, %v606, %v607
      %s611 = scalar_lea.vmem [#allocation2], 121
      %612 = vst.msk [vmem:[%s611] ss:$8 sm:$0xf] %vm336, %v609
      %613 = vst.msk [vmem:[%s611] ss:$8 sm:$0x10] %vm336, %v609
      %v614 = vld [vmem:[%s297] sm:$0x3f]
      %616 = vrot.lane.b32.xlu0 %v614, 56
      %v617 = vpop.permute.xlu0 %616
      %v618 = vrot.slane %v617, 1
      %vm619 = vcmask 457728
      %v620 = vsel %vm619, %v617, %v618
      %s622 = scalar_lea.vmem [#allocation2], 122
      %623 = vst.msk [vmem:[%s622] ss:$8 sm:$0xf] %vm336, %v620
      %624 = vst.msk [vmem:[%s622] ss:$8 sm:$0x10] %vm336, %v620
      %v625 = vld [vmem:[%s297] sm:$0x3f]
      %627 = vrot.lane.b32.xlu0 %v625, 32
      %v628 = vpop.permute.xlu0 %627
      %v629 = vrot.slane %v628, 1
      %vm630 = vcmask 261120
      %v631 = vsel %vm630, %v628, %v629
      %s633 = scalar_lea.vmem [#allocation2], 123
      %634 = vst.msk [vmem:[%s633] ss:$8 sm:$0xf] %vm336, %v631
      %635 = vst.msk [vmem:[%s633] ss:$8 sm:$0x10] %vm336, %v631
      %v636 = vld [vmem:[%s297] sm:$0x3f]
      %638 = vrot.lane.b32.xlu0 %v636, 31
      %v639 = vpop.permute.xlu0 %638
      %v640 = vrot.slane %v639, 1
      %vm641 = vcmask 252928
      %v642 = vsel %vm641, %v639, %v640
      %s644 = scalar_lea.vmem [#allocation2], 124
      %645 = vst.msk [vmem:[%s644] ss:$8 sm:$0xf] %vm336, %v642
      %646 = vst.msk [vmem:[%s644] ss:$8 sm:$0x10] %vm336, %v642
      %v647 = vld [vmem:[%s297] sm:$0x3f]
      %649 = vrot.lane.b32.xlu0 %v647, 30
      %v650 = vpop.permute.xlu0 %649
      %v651 = vrot.slane %v650, 1
      %vm652 = vcmask 244736
      %v653 = vsel %vm652, %v650, %v651
      %s655 = scalar_lea.vmem [#allocation2], 125
      %656 = vst.msk [vmem:[%s655] ss:$8 sm:$0xf] %vm336, %v653
      %657 = vst.msk [vmem:[%s655] ss:$8 sm:$0x10] %vm336, %v653
      %v658 = vld [vmem:[%s297] sm:$0x3f]
      %660 = vrot.lane.b32.xlu0 %v658, 29
      %v661 = vpop.permute.xlu0 %660
      %v662 = vrot.slane %v661, 1
      %vm663 = vcmask 236544
      %v664 = vsel %vm663, %v661, %v662
      %s666 = scalar_lea.vmem [#allocation2], 126
      %667 = vst.msk [vmem:[%s666] ss:$8 sm:$0xf] %vm336, %v664
      %668 = vst.msk [vmem:[%s666] ss:$8 sm:$0x10] %vm336, %v664
      %v669 = vld [vmem:[%s297] sm:$0x3f]
      %671 = vrot.lane.b32.xlu0 %v669, 28
      %v672 = vpop.permute.xlu0 %671
      %v673 = vrot.slane %v672, 1
      %vm674 = vcmask 228352
      %v675 = vsel %vm674, %v672, %v673
      %s677 = scalar_lea.vmem [#allocation2], 127
      %678 = vst.msk [vmem:[%s677] ss:$8 sm:$0xf] %vm336, %v675
      %679 = vst.msk [vmem:[%s677] ss:$8 sm:$0x10] %vm336, %v675
      %v680 = vld [vmem:[%s297] sm:$0x3f]
      %682 = vrot.lane.b32.xlu0 %v680, 27
      %v683 = vpop.permute.xlu0 %682
      %v684 = vrot.slane %v683, 1
      %vm685 = vcmask 220160
      %v686 = vsel %vm685, %v683, %v684
      %s688 = scalar_lea.vmem [#allocation2], 160
      %689 = vst.msk [vmem:[%s688] ss:$8 sm:$0xf] %vm336, %v686
      %690 = vst.msk [vmem:[%s688] ss:$8 sm:$0x10] %vm336, %v686
      %v691 = vld [vmem:[%s297] sm:$0x3f]
      %693 = vrot.lane.b32.xlu0 %v691, 26
      %v694 = vpop.permute.xlu0 %693
      %v695 = vrot.slane %v694, 1
      %vm696 = vcmask 211968
      %v697 = vsel %vm696, %v694, %v695
      %s699 = scalar_lea.vmem [#allocation2], 161
      %700 = vst.msk [vmem:[%s699] ss:$8 sm:$0xf] %vm336, %v697
      %701 = vst.msk [vmem:[%s699] ss:$8 sm:$0x10] %vm336, %v697
      %v702 = vld [vmem:[%s297] sm:$0x3f]
      %704 = vrot.lane.b32.xlu0 %v702, 25
      %v705 = vpop.permute.xlu0 %704
      %v706 = vrot.slane %v705, 1
      %vm707 = vcmask 203776
      %v708 = vsel %vm707, %v705, %v706
      %s710 = scalar_lea.vmem [#allocation2], 162
      %711 = vst.msk [vmem:[%s710] ss:$8 sm:$0xf] %vm336, %v708
      %712 = vst.msk [vmem:[%s710] ss:$8 sm:$0x10] %vm336, %v708
      %v713 = vld [vmem:[%s297] sm:$0x3f]
      %715 = vrot.lane.b32.xlu0 %v713, 24
      %v716 = vpop.permute.xlu0 %715
      %v717 = vrot.slane %v716, 1
      %vm718 = vcmask 195584
      %v719 = vsel %vm718, %v716, %v717
      %s721 = scalar_lea.vmem [#allocation2], 163
      %722 = vst.msk [vmem:[%s721] ss:$8 sm:$0xf] %vm336, %v719
      %723 = vst.msk [vmem:[%s721] ss:$8 sm:$0x10] %vm336, %v719
      %v724 = vld [vmem:[%s297 + $0x1] sm:$0x1f]
      %s725 = scalar_lea.vmem [#allocation2], 164
      %726 = vst.msk [vmem:[%s725] ss:$8 sm:$0xf] %vm336, %v724
      %727 = vst.msk [vmem:[%s725] ss:$8 sm:$0x10] %vm336, %v724
      %v728 = vld [vmem:[%s297 + $0x1] sm:$0x3f]
      %730 = vrot.lane.b32.xlu0 %v728, 127
      %v731 = vpop.permute.xlu0 %730
      %v732 = vrot.slane %v731, 1
      %v733 = vsel %vm344, %v731, %v732
      %s735 = scalar_lea.vmem [#allocation2], 165
      %736 = vst.msk [vmem:[%s735] ss:$8 sm:$0xf] %vm336, %v733
      %737 = vst.msk [vmem:[%s735] ss:$8 sm:$0x10] %vm336, %v733
      %v738 = vld [vmem:[%s297 + $0x1] sm:$0x3f]
      %740 = vrot.lane.b32.xlu0 %v738, 126
      %v741 = vpop.permute.xlu0 %740
      %v742 = vrot.slane %v741, 1
      %v743 = vsel %vm355, %v741, %v742
      %s745 = scalar_lea.vmem [#allocation2], 166
      %746 = vst.msk [vmem:[%s745] ss:$8 sm:$0xf] %vm336, %v743
      %747 = vst.msk [vmem:[%s745] ss:$8 sm:$0x10] %vm336, %v743
      %v748 = vld [vmem:[%s297 + $0x1] sm:$0x3f]
      %750 = vrot.lane.b32.xlu0 %v748, 125
      %v751 = vpop.permute.xlu0 %750
      %v752 = vrot.slane %v751, 1
      %v753 = vsel %vm366, %v751, %v752
      %s755 = scalar_lea.vmem [#allocation2], 167
      %756 = vst.msk [vmem:[%s755] ss:$8 sm:$0xf] %vm336, %v753
      %757 = vst.msk [vmem:[%s755] ss:$8 sm:$0x10] %vm336, %v753
      %v758 = vld [vmem:[%s297 + $0x1] sm:$0x3f]
      %760 = vrot.lane.b32.xlu0 %v758, 124
      %v761 = vpop.permute.xlu0 %760
      %v762 = vrot.slane %v761, 1
      %v763 = vsel %vm377, %v761, %v762
      %s765 = scalar_lea.vmem [#allocation2], 200
      %766 = vst.msk [vmem:[%s765] ss:$8 sm:$0xf] %vm336, %v763
      %767 = vst.msk [vmem:[%s765] ss:$8 sm:$0x10] %vm336, %v763
      %v768 = vld [vmem:[%s297 + $0x1] sm:$0x3f]
      %770 = vrot.lane.b32.xlu0 %v768, 123
      %v771 = vpop.permute.xlu0 %770
      %v772 = vrot.slane %v771, 1
      %v773 = vsel %vm388, %v771, %v772
      %s775 = scalar_lea.vmem [#allocation2], 201
      %776 = vst.msk [vmem:[%s775] ss:$8 sm:$0xf] %vm336, %v773
      %777 = vst.msk [vmem:[%s775] ss:$8 sm:$0x10] %vm336, %v773
      %v778 = vld [vmem:[%s297 + $0x1] sm:$0x3f]
      %780 = vrot.lane.b32.xlu0 %v778, 122
      %v781 = vpop.permute.xlu0 %780
      %v782 = vrot.slane %v781, 1
      %v783 = vsel %vm399, %v781, %v782
      %s785 = scalar_lea.vmem [#allocation2], 202
      %786 = vst.msk [vmem:[%s785] ss:$8 sm:$0xf] %vm336, %v783
      %787 = vst.msk [vmem:[%s785] ss:$8 sm:$0x10] %vm336, %v783
      %v788 = vld [vmem:[%s297 + $0x1] sm:$0x3f]
      %790 = vrot.lane.b32.xlu0 %v788, 121
      %v791 = vpop.permute.xlu0 %790
      %v792 = vrot.slane %v791, 1
      %v793 = vsel %vm410, %v791, %v792
      %s795 = scalar_lea.vmem [#allocation2], 203
      %796 = vst.msk [vmem:[%s795] ss:$8 sm:$0xf] %vm336, %v793
      %797 = vst.msk [vmem:[%s795] ss:$8 sm:$0x10] %vm336, %v793
      %v798 = vld [vmem:[%s297 + $0x1] sm:$0x3f]
      %800 = vrot.lane.b32.xlu0 %v798, 120
      %v801 = vpop.permute.xlu0 %800
      %v802 = vrot.slane %v801, 1
      %v803 = vsel %vm421, %v801, %v802
      %s805 = scalar_lea.vmem [#allocation2], 204
      %806 = vst.msk [vmem:[%s805] ss:$8 sm:$0xf] %vm336, %v803
      %807 = vst.msk [vmem:[%s805] ss:$8 sm:$0x10] %vm336, %v803
      %v808 = vld [vmem:[%s297 + $0x1] sm:$0x3f]
      %810 = vrot.lane.b32.xlu0 %v808, 96
      %v811 = vpop.permute.xlu0 %810
      %v812 = vrot.slane %v811, 1
      %v813 = vsel %vm432, %v811, %v812
      %s815 = scalar_lea.vmem [#allocation2], 205
      %816 = vst.msk [vmem:[%s815] ss:$8 sm:$0xf] %vm336, %v813
      %817 = vst.msk [vmem:[%s815] ss:$8 sm:$0x10] %vm336, %v813
      %v818 = vld [vmem:[%s297 + $0x1] sm:$0x3f]
      %820 = vrot.lane.b32.xlu0 %v818, 95
      %v821 = vpop.permute.xlu0 %820
      %v822 = vrot.slane %v821, 1
      %v823 = vsel %vm443, %v821, %v822
      %s825 = scalar_lea.vmem [#allocation2], 206
      %826 = vst.msk [vmem:[%s825] ss:$8 sm:$0xf] %vm336, %v823
      %827 = vst.msk [vmem:[%s825] ss:$8 sm:$0x10] %vm336, %v823
      %v828 = vld [vmem:[%s297 + $0x1] sm:$0x3f]
      %830 = vrot.lane.b32.xlu0 %v828, 94
      %v831 = vpop.permute.xlu0 %830
      %v832 = vrot.slane %v831, 1
      %v833 = vsel %vm454, %v831, %v832
      %s835 = scalar_lea.vmem [#allocation2], 207
      %836 = vst.msk [vmem:[%s835] ss:$8 sm:$0xf] %vm336, %v833
      %837 = vst.msk [vmem:[%s835] ss:$8 sm:$0x10] %vm336, %v833
      %v838 = vld [vmem:[%s297 + $0x1] sm:$0x3f]
      %840 = vrot.lane.b32.xlu0 %v838, 93
      %v841 = vpop.permute.xlu0 %840
      %v842 = vrot.slane %v841, 1
      %v843 = vsel %vm465, %v841, %v842
      %s845 = scalar_lea.vmem [#allocation2], 240
      %846 = vst.msk [vmem:[%s845] ss:$8 sm:$0xf] %vm336, %v843
      %847 = vst.msk [vmem:[%s845] ss:$8 sm:$0x10] %vm336, %v843
      %v848 = vld [vmem:[%s297 + $0x1] sm:$0x3f]
      %850 = vrot.lane.b32.xlu0 %v848, 92
      %v851 = vpop.permute.xlu0 %850
      %v852 = vrot.slane %v851, 1
      %v853 = vsel %vm476, %v851, %v852
      %s855 = scalar_lea.vmem [#allocation2], 241
      %856 = vst.msk [vmem:[%s855] ss:$8 sm:$0xf] %vm336, %v853
      %857 = vst.msk [vmem:[%s855] ss:$8 sm:$0x10] %vm336, %v853
      %v858 = vld [vmem:[%s297 + $0x1] sm:$0x3f]
      %860 = vrot.lane.b32.xlu0 %v858, 91
      %v861 = vpop.permute.xlu0 %860
      %v862 = vrot.slane %v861, 1
      %v863 = vsel %vm487, %v861, %v862
      %s865 = scalar_lea.vmem [#allocation2], 242
      %866 = vst.msk [vmem:[%s865] ss:$8 sm:$0xf] %vm336, %v863
      %867 = vst.msk [vmem:[%s865] ss:$8 sm:$0x10] %vm336, %v863
      %v868 = vld [vmem:[%s297 + $0x1] sm:$0x3f]
      %870 = vrot.lane.b32.xlu0 %v868, 90
      %v871 = vpop.permute.xlu0 %870
      %v872 = vrot.slane %v871, 1
      %v873 = vsel %vm498, %v871, %v872
      %s875 = scalar_lea.vmem [#allocation2], 243
      %876 = vst.msk [vmem:[%s875] ss:$8 sm:$0xf] %vm336, %v873
      %877 = vst.msk [vmem:[%s875] ss:$8 sm:$0x10] %vm336, %v873
      %v878 = vld [vmem:[%s297 + $0x1] sm:$0x3f]
      %880 = vrot.lane.b32.xlu0 %v878, 89
      %v881 = vpop.permute.xlu0 %880
      %v882 = vrot.slane %v881, 1
      %v883 = vsel %vm509, %v881, %v882
      %s885 = scalar_lea.vmem [#allocation2], 244
      %886 = vst.msk [vmem:[%s885] ss:$8 sm:$0xf] %vm336, %v883
      %887 = vst.msk [vmem:[%s885] ss:$8 sm:$0x10] %vm336, %v883
      %v888 = vld [vmem:[%s297 + $0x1] sm:$0x3f]
      %890 = vrot.lane.b32.xlu0 %v888, 88
      %v891 = vpop.permute.xlu0 %890
      %v892 = vrot.slane %v891, 1
      %v893 = vsel %vm520, %v891, %v892
      %s895 = scalar_lea.vmem [#allocation2], 245
      %896 = vst.msk [vmem:[%s895] ss:$8 sm:$0xf] %vm336, %v893
      %897 = vst.msk [vmem:[%s895] ss:$8 sm:$0x10] %vm336, %v893
      %v898 = vld [vmem:[%s297 + $0x1] sm:$0x3f]
      %900 = vrot.lane.b32.xlu0 %v898, 64
      %v901 = vpop.permute.xlu0 %900
      %v902 = vrot.slane %v901, 1
      %v903 = vsel %vm531, %v901, %v902
      %s905 = scalar_lea.vmem [#allocation2], 246
      %906 = vst.msk [vmem:[%s905] ss:$8 sm:$0xf] %vm336, %v903
      %907 = vst.msk [vmem:[%s905] ss:$8 sm:$0x10] %vm336, %v903
      %v908 = vld [vmem:[%s297 + $0x1] sm:$0x3f]
      %910 = vrot.lane.b32.xlu0 %v908, 63
      %v911 = vpop.permute.xlu0 %910
      %v912 = vrot.slane %v911, 1
      %v913 = vsel %vm542, %v911, %v912
      %s915 = scalar_lea.vmem [#allocation2], 247
      %916 = vst.msk [vmem:[%s915] ss:$8 sm:$0xf] %vm336, %v913
      %917 = vst.msk [vmem:[%s915] ss:$8 sm:$0x10] %vm336, %v913
      %v918 = vld [vmem:[%s297 + $0x1] sm:$0x3f]
      %920 = vrot.lane.b32.xlu0 %v918, 62
      %v921 = vpop.permute.xlu0 %920
      %v922 = vrot.slane %v921, 1
      %v923 = vsel %vm553, %v921, %v922
      %s925 = scalar_lea.vmem [#allocation2], 280
      %926 = vst.msk [vmem:[%s925] ss:$8 sm:$0xf] %vm336, %v923
      %927 = vst.msk [vmem:[%s925] ss:$8 sm:$0x10] %vm336, %v923
      %v928 = vld [vmem:[%s297 + $0x1] sm:$0x3f]
      %930 = vrot.lane.b32.xlu0 %v928, 61
      %v931 = vpop.permute.xlu0 %930
      %v932 = vrot.slane %v931, 1
      %v933 = vsel %vm564, %v931, %v932
      %s935 = scalar_lea.vmem [#allocation2], 281
      %936 = vst.msk [vmem:[%s935] ss:$8 sm:$0xf] %vm336, %v933
      %937 = vst.msk [vmem:[%s935] ss:$8 sm:$0x10] %vm336, %v933
      %v938 = vld [vmem:[%s297 + $0x1] sm:$0x3f]
      %940 = vrot.lane.b32.xlu0 %v938, 60
      %v941 = vpop.permute.xlu0 %940
      %v942 = vrot.slane %v941, 1
      %v943 = vsel %vm575, %v941, %v942
      %s945 = scalar_lea.vmem [#allocation2], 282
      %946 = vst.msk [vmem:[%s945] ss:$8 sm:$0xf] %vm336, %v943
      %947 = vst.msk [vmem:[%s945] ss:$8 sm:$0x10] %vm336, %v943
      %v948 = vld [vmem:[%s297 + $0x1] sm:$0x3f]
      %950 = vrot.lane.b32.xlu0 %v948, 59
      %v951 = vpop.permute.xlu0 %950
      %v952 = vrot.slane %v951, 1
      %v953 = vsel %vm586, %v951, %v952
      %s955 = scalar_lea.vmem [#allocation2], 283
      %956 = vst.msk [vmem:[%s955] ss:$8 sm:$0xf] %vm336, %v953
      %957 = vst.msk [vmem:[%s955] ss:$8 sm:$0x10] %vm336, %v953
      %v958 = vld [vmem:[%s297 + $0x1] sm:$0x3f]
      %960 = vrot.lane.b32.xlu0 %v958, 58
      %v961 = vpop.permute.xlu0 %960
      %v962 = vrot.slane %v961, 1
      %v963 = vsel %vm597, %v961, %v962
      %s965 = scalar_lea.vmem [#allocation2], 284
      %966 = vst.msk [vmem:[%s965] ss:$8 sm:$0xf] %vm336, %v963
      %967 = vst.msk [vmem:[%s965] ss:$8 sm:$0x10] %vm336, %v963
      %v968 = vld [vmem:[%s297 + $0x1] sm:$0x3f]
      %970 = vrot.lane.b32.xlu0 %v968, 57
      %v971 = vpop.permute.xlu0 %970
      %v972 = vrot.slane %v971, 1
      %v973 = vsel %vm608, %v971, %v972
      %s975 = scalar_lea.vmem [#allocation2], 285
      %976 = vst.msk [vmem:[%s975] ss:$8 sm:$0xf] %vm336, %v973
      %977 = vst.msk [vmem:[%s975] ss:$8 sm:$0x10] %vm336, %v973
      %v978 = vld [vmem:[%s297 + $0x1] sm:$0x3f]
      %980 = vrot.lane.b32.xlu0 %v978, 56
      %v981 = vpop.permute.xlu0 %980
      %v982 = vrot.slane %v981, 1
      %v983 = vsel %vm619, %v981, %v982
      %s985 = scalar_lea.vmem [#allocation2], 286
      %986 = vst.msk [vmem:[%s985] ss:$8 sm:$0xf] %vm336, %v983
      %987 = vst.msk [vmem:[%s985] ss:$8 sm:$0x10] %vm336, %v983
      %v988 = vld [vmem:[%s297 + $0x1] sm:$0x3f]
      %990 = vrot.lane.b32.xlu0 %v988, 32
      %v991 = vpop.permute.xlu0 %990
      %v992 = vrot.slane %v991, 1
      %v993 = vsel %vm630, %v991, %v992
      %s995 = scalar_lea.vmem [#allocation2], 287
      %996 = vst.msk [vmem:[%s995] ss:$8 sm:$0xf] %vm336, %v993
      %997 = vst.msk [vmem:[%s995] ss:$8 sm:$0x10] %vm336, %v993
      %v998 = vld [vmem:[%s297 + $0x1] sm:$0x3f]
      %1000 = vrot.lane.b32.xlu0 %v998, 31
      %v1001 = vpop.permute.xlu0 %1000
      %v1002 = vrot.slane %v1001, 1
      %v1003 = vsel %vm641, %v1001, %v1002
      %s1005 = scalar_lea.vmem [#allocation2], 320
      %1006 = vst.msk [vmem:[%s1005] ss:$8 sm:$0xf] %vm336, %v1003
      %1007 = vst.msk [vmem:[%s1005] ss:$8 sm:$0x10] %vm336, %v1003
      %v1008 = vld [vmem:[%s297 + $0x1] sm:$0x3f]
      %1010 = vrot.lane.b32.xlu0 %v1008, 30
      %v1011 = vpop.permute.xlu0 %1010
      %v1012 = vrot.slane %v1011, 1
      %v1013 = vsel %vm652, %v1011, %v1012
      %s1015 = scalar_lea.vmem [#allocation2], 321
      %1016 = vst.msk [vmem:[%s1015] ss:$8 sm:$0xf] %vm336, %v1013
      %1017 = vst.msk [vmem:[%s1015] ss:$8 sm:$0x10] %vm336, %v1013
      %v1018 = vld [vmem:[%s297 + $0x1] sm:$0x3f]
      %1020 = vrot.lane.b32.xlu0 %v1018, 29
      %v1021 = vpop.permute.xlu0 %1020
      %v1022 = vrot.slane %v1021, 1
      %v1023 = vsel %vm663, %v1021, %v1022
      %s1025 = scalar_lea.vmem [#allocation2], 322
      %1026 = vst.msk [vmem:[%s1025] ss:$8 sm:$0xf] %vm336, %v1023
      %1027 = vst.msk [vmem:[%s1025] ss:$8 sm:$0x10] %vm336, %v1023
      %v1028 = vld [vmem:[%s297 + $0x1] sm:$0x3f]
      %1030 = vrot.lane.b32.xlu0 %v1028, 28
      %v1031 = vpop.permute.xlu0 %1030
      %v1032 = vrot.slane %v1031, 1
      %v1033 = vsel %vm674, %v1031, %v1032
      %s1035 = scalar_lea.vmem [#allocation2], 323
      %1036 = vst.msk [vmem:[%s1035] ss:$8 sm:$0xf] %vm336, %v1033
      %1037 = vst.msk [vmem:[%s1035] ss:$8 sm:$0x10] %vm336, %v1033
      %v1038 = vld [vmem:[%s297 + $0x1] sm:$0x3f]
      %1040 = vrot.lane.b32.xlu0 %v1038, 27
      %v1041 = vpop.permute.xlu0 %1040
      %v1042 = vrot.slane %v1041, 1
      %v1043 = vsel %vm685, %v1041, %v1042
      %s1045 = scalar_lea.vmem [#allocation2], 324
      %1046 = vst.msk [vmem:[%s1045] ss:$8 sm:$0xf] %vm336, %v1043
      %1047 = vst.msk [vmem:[%s1045] ss:$8 sm:$0x10] %vm336, %v1043
      %v1048 = vld [vmem:[%s297 + $0x1] sm:$0x3f]
      %1050 = vrot.lane.b32.xlu0 %v1048, 26
      %v1051 = vpop.permute.xlu0 %1050
      %v1052 = vrot.slane %v1051, 1
      %v1053 = vsel %vm696, %v1051, %v1052
      %s1055 = scalar_lea.vmem [#allocation2], 325
      %1056 = vst.msk [vmem:[%s1055] ss:$8 sm:$0xf] %vm336, %v1053
      %1057 = vst.msk [vmem:[%s1055] ss:$8 sm:$0x10] %vm336, %v1053
      %v1058 = vld [vmem:[%s297 + $0x1] sm:$0x3f]
      %1060 = vrot.lane.b32.xlu0 %v1058, 25
      %v1061 = vpop.permute.xlu0 %1060
      %v1062 = vrot.slane %v1061, 1
      %v1063 = vsel %vm707, %v1061, %v1062
      %s1065 = scalar_lea.vmem [#allocation2], 326
      %1066 = vst.msk [vmem:[%s1065] ss:$8 sm:$0xf] %vm336, %v1063
      %1067 = vst.msk [vmem:[%s1065] ss:$8 sm:$0x10] %vm336, %v1063
      %v1068 = vld [vmem:[%s297 + $0x1] sm:$0x3f]
      %1070 = vrot.lane.b32.xlu0 %v1068, 24
      %v1071 = vpop.permute.xlu0 %1070
      %v1072 = vrot.slane %v1071, 1
      %v1073 = vsel %vm718, %v1071, %v1072
      %s1075 = scalar_lea.vmem [#allocation2], 327
      %1076 = vst.msk [vmem:[%s1075] ss:$8 sm:$0xf] %vm336, %v1073
      %1077 = vst.msk [vmem:[%s1075] ss:$8 sm:$0x10] %vm336, %v1073
      %v1078 = vld [vmem:[%s297 + $0x2] sm:$0x1f]
      %s1079 = scalar_lea.vmem [#allocation2], 360
      %1080 = vst.msk [vmem:[%s1079] ss:$8 sm:$0xf] %vm336, %v1078
      %1081 = vst.msk [vmem:[%s1079] ss:$8 sm:$0x10] %vm336, %v1078
      %v1082 = vld [vmem:[%s297 + $0x2] sm:$0x3f]
      %1084 = vrot.lane.b32.xlu0 %v1082, 127
      %v1085 = vpop.permute.xlu0 %1084
      %v1086 = vrot.slane %v1085, 1
      %v1087 = vsel %vm344, %v1085, %v1086
      %s1089 = scalar_lea.vmem [#allocation2], 361
      %1090 = vst.msk [vmem:[%s1089] ss:$8 sm:$0xf] %vm336, %v1087
      %1091 = vst.msk [vmem:[%s1089] ss:$8 sm:$0x10] %vm336, %v1087
      %v1092 = vld [vmem:[%s297 + $0x2] sm:$0x3f]
      %1094 = vrot.lane.b32.xlu0 %v1092, 126
      %v1095 = vpop.permute.xlu0 %1094
      %v1096 = vrot.slane %v1095, 1
      %v1097 = vsel %vm355, %v1095, %v1096
      %s1099 = scalar_lea.vmem [#allocation2], 362
      %1100 = vst.msk [vmem:[%s1099] ss:$8 sm:$0xf] %vm336, %v1097
      %1101 = vst.msk [vmem:[%s1099] ss:$8 sm:$0x10] %vm336, %v1097
      %v1102 = vld [vmem:[%s297 + $0x2] sm:$0x3f]
      %1104 = vrot.lane.b32.xlu0 %v1102, 125
      %v1105 = vpop.permute.xlu0 %1104
      %v1106 = vrot.slane %v1105, 1
      %v1107 = vsel %vm366, %v1105, %v1106
      %s1109 = scalar_lea.vmem [#allocation2], 363
      %1110 = vst.msk [vmem:[%s1109] ss:$8 sm:$0xf] %vm336, %v1107
      %1111 = vst.msk [vmem:[%s1109] ss:$8 sm:$0x10] %vm336, %v1107
      %v1112 = vld [vmem:[%s297 + $0x2] sm:$0x3f]
      %1114 = vrot.lane.b32.xlu0 %v1112, 124
      %v1115 = vpop.permute.xlu0 %1114
      %v1116 = vrot.slane %v1115, 1
      %v1117 = vsel %vm377, %v1115, %v1116
      %s1119 = scalar_lea.vmem [#allocation2], 364
      %1120 = vst.msk [vmem:[%s1119] ss:$8 sm:$0xf] %vm336, %v1117
      %1121 = vst.msk [vmem:[%s1119] ss:$8 sm:$0x10] %vm336, %v1117
      %v1122 = vld [vmem:[%s297 + $0x2] sm:$0x3f]
      %1124 = vrot.lane.b32.xlu0 %v1122, 123
      %v1125 = vpop.permute.xlu0 %1124
      %v1126 = vrot.slane %v1125, 1
      %v1127 = vsel %vm388, %v1125, %v1126
      %s1129 = scalar_lea.vmem [#allocation2], 365
      %1130 = vst.msk [vmem:[%s1129] ss:$8 sm:$0xf] %vm336, %v1127
      %1131 = vst.msk [vmem:[%s1129] ss:$8 sm:$0x10] %vm336, %v1127
      %v1132 = vld [vmem:[%s297 + $0x2] sm:$0x3f]
      %1134 = vrot.lane.b32.xlu0 %v1132, 122
      %v1135 = vpop.permute.xlu0 %1134
      %v1136 = vrot.slane %v1135, 1
      %v1137 = vsel %vm399, %v1135, %v1136
      %s1139 = scalar_lea.vmem [#allocation2], 366
      %1140 = vst.msk [vmem:[%s1139] ss:$8 sm:$0xf] %vm336, %v1137
      %1141 = vst.msk [vmem:[%s1139] ss:$8 sm:$0x10] %vm336, %v1137
      %v1142 = vld [vmem:[%s297 + $0x2] sm:$0x3f]
      %1144 = vrot.lane.b32.xlu0 %v1142, 121
      %v1145 = vpop.permute.xlu0 %1144
      %v1146 = vrot.slane %v1145, 1
      %v1147 = vsel %vm410, %v1145, %v1146
      %s1149 = scalar_lea.vmem [#allocation2], 367
      %1150 = vst.msk [vmem:[%s1149] ss:$8 sm:$0xf] %vm336, %v1147
      %1151 = vst.msk [vmem:[%s1149] ss:$8 sm:$0x10] %vm336, %v1147
      %v1152 = vld [vmem:[%s297 + $0x2] sm:$0x3f]
      %1154 = vrot.lane.b32.xlu0 %v1152, 120
      %v1155 = vpop.permute.xlu0 %1154
      %v1156 = vrot.slane %v1155, 1
      %v1157 = vsel %vm421, %v1155, %v1156
      %s1159 = scalar_lea.vmem [#allocation2], 400
      %1160 = vst.msk [vmem:[%s1159] ss:$8 sm:$0xf] %vm336, %v1157
      %1161 = vst.msk [vmem:[%s1159] ss:$8 sm:$0x10] %vm336, %v1157
      %v1162 = vld [vmem:[%s2] sm:$0xff]
      %v1163 = vld [vmem:[%s2 + $0x8] sm:$0xff]
      %v1164 = vld [vmem:[%s2 + $0x10] sm:$0xff]
      %v1165 = vld [vmem:[%s2 + $0x18] sm:$0xff]
      %v1166 = vld [vmem:[%s2 + $0x20] sm:$0xff]
      %v1167 = vld [vmem:[%s2 + $0x28] sm:$0xff]
      %v1168 = vld [vmem:[%s2 + $0x30] sm:$0xff]
      %v1169 = vld [vmem:[%s2 + $0x38] sm:$0xff]
      %v1170 = vld [vmem:[#allocation2] sm:$0xff]
      %v1171 = vld [vmem:[#allocation2 + $0x8] sm:$0xff]
      %v1172 = vld [vmem:[#allocation2 + $0x10] sm:$0xff]
      %v1173 = vld [vmem:[#allocation2 + $0x18] sm:$0xff]
      %v1174 = vld [vmem:[#allocation2 + $0x20] sm:$0xff]
      %v1175 = vld [vmem:[#allocation2 + $0x28] sm:$0xff]
      %v1176 = vld [vmem:[#allocation2 + $0x30] sm:$0xff]
      %v1177 = vld [vmem:[#allocation2 + $0x38] sm:$0xff]
      %v1178 = vld [vmem:[#allocation2 + $0x40] sm:$0xff]
      %v1179 = vld [vmem:[#allocation2 + $0x48] sm:$0xff]
      %v1180 = vld [vmem:[#allocation2 + $0x50] sm:$0xff]
      %v1181 = vld [vmem:[#allocation2 + $0x58] sm:$0xff]
      %v1182 = vld [vmem:[#allocation2 + $0x60] sm:$0xff]
      %v1183 = vld [vmem:[#allocation2 + $0x68] sm:$0xff]
      %v1184 = vld [vmem:[#allocation2 + $0x70] sm:$0xff]
      %v1185 = vld [vmem:[#allocation2 + $0x78] sm:$0xff]
      %v1186 = vld [vmem:[#allocation2 + $0x80] sm:$0xff]
      %v1187 = vld [vmem:[#allocation2 + $0x88] sm:$0xff]
      %v1188 = vld [vmem:[#allocation2 + $0x90] sm:$0xff]
      %v1189 = vld [vmem:[#allocation2 + $0x98] sm:$0xff]
      %v1190 = vld [vmem:[#allocation2 + $0xa0] sm:$0xff]
      %v1191 = vld [vmem:[#allocation2 + $0xa8] sm:$0xff]
      %v1192 = vld [vmem:[#allocation2 + $0xb0] sm:$0xff]
      %v1193 = vld [vmem:[#allocation2 + $0xb8] sm:$0xff]
      %v1194 = vld [vmem:[#allocation2 + $0xc0] sm:$0xff]
      %v1195 = vld [vmem:[#allocation2 + $0xc8] sm:$0xff]
      %v1196 = vld [vmem:[#allocation2 + $0xd0] sm:$0xff]
      %v1197 = vld [vmem:[#allocation2 + $0xd8] sm:$0xff]
      %v1198 = vld [vmem:[#allocation2 + $0xe0] sm:$0xff]
      %v1199 = vld [vmem:[#allocation2 + $0xe8] sm:$0xff]
      %v1200 = vld [vmem:[#allocation2 + $0xf0] sm:$0xff]
      %v1201 = vld [vmem:[#allocation2 + $0xf8] sm:$0xff]
      %v1202 = vld [vmem:[#allocation2 + $0x100] sm:$0xff]
      %v1203 = vld [vmem:[#allocation2 + $0x108] sm:$0xff]
      %v1204 = vld [vmem:[#allocation2 + $0x110] sm:$0xff]
      %v1205 = vld [vmem:[#allocation2 + $0x118] sm:$0xff]
      %v1206 = vld [vmem:[#allocation2 + $0x120] sm:$0xff]
      %v1207 = vld [vmem:[#allocation2 + $0x128] sm:$0xff]
      %v1208 = vld [vmem:[#allocation2 + $0x130] sm:$0xff]
      %v1209 = vld [vmem:[#allocation2 + $0x138] sm:$0xff]
      %v1210 = vld [vmem:[#allocation2 + $0x140] sm:$0xff]
      %v1211 = vld [vmem:[#allocation2 + $0x148] sm:$0xff]
      %v1212 = vld [vmem:[#allocation2 + $0x150] sm:$0xff]
      %v1213 = vld [vmem:[#allocation2 + $0x158] sm:$0xff]
      %v1214 = vld [vmem:[#allocation2 + $0x160] sm:$0xff]
      %v1215 = vld [vmem:[#allocation2 + $0x168] sm:$0xff]
      %v1216 = vld [vmem:[#allocation2 + $0x170] sm:$0xff]
      %v1217 = vld [vmem:[#allocation2 + $0x178] sm:$0xff]
      %v1218 = vld [vmem:[#allocation2 + $0x180] sm:$0xff]
      %v1219 = vld [vmem:[#allocation2 + $0x188] sm:$0xff]
      %v1220 = vld [vmem:[#allocation2 + $0x190] sm:$0xff]
      %v1221 = vld [vmem:[#allocation2 + $0x198] sm:$0xff]
      %v1222 = vld [vmem:[#allocation2 + $0x1a0] sm:$0xff]
      %v1223 = vld [vmem:[#allocation2 + $0x1a8] sm:$0xff]
      %v1224 = vld [vmem:[#allocation2 + $0x1b0] sm:$0xff]
      %v1225 = vld [vmem:[#allocation2 + $0x1b8] sm:$0xff]
      %v1226 = vld [vmem:[#allocation2 + $0x1c0] sm:$0xff]
      %v1227 = vld [vmem:[#allocation2 + $0x1c8] sm:$0xff]
      %v1228 = vld [vmem:[#allocation2 + $0x1d0] sm:$0xff]
      %v1229 = vld [vmem:[#allocation2 + $0x1d8] sm:$0xff]
      %v1230 = vld [vmem:[#allocation2 + $0x1e0] sm:$0xff]
      %v1231 = vld [vmem:[#allocation2 + $0x1e8] sm:$0xff]
      %v1232 = vld [vmem:[#allocation2 + $0x1f0] sm:$0xff]
      %v1233 = vld [vmem:[#allocation2 + $0x1f8] sm:$0xff]
      %v1234 = vld [vmem:[#allocation2 + $0x200] sm:$0xff]
      %v1235 = vld [vmem:[#allocation2 + $0x208] sm:$0xff]
      %v1236 = vld [vmem:[#allocation2 + $0x210] sm:$0xff]
      %v1237 = vld [vmem:[#allocation2 + $0x218] sm:$0xff]
      %v1238 = vld [vmem:[#allocation2 + $0x220] sm:$0xff]
      %v1239 = vld [vmem:[#allocation2 + $0x228] sm:$0xff]
      %v1240 = vld [vmem:[#allocation2 + $0x230] sm:$0xff]
      %v1241 = vld [vmem:[#allocation2 + $0x238] sm:$0xff]
      %v1242 = vld [vmem:[#allocation2 + $0x240] sm:$0xff]
      %v1243 = vld [vmem:[#allocation2 + $0x248] sm:$0xff]
      %v1244 = vld [vmem:[#allocation2 + $0x250] sm:$0xff]
      %v1245 = vld [vmem:[#allocation2 + $0x258] sm:$0xff]
      %v1246 = vld [vmem:[#allocation2 + $0x260] sm:$0xff]
      %v1247 = vld [vmem:[#allocation2 + $0x268] sm:$0xff]
      %v1248 = vld [vmem:[#allocation2 + $0x270] sm:$0xff]
      %v1249 = vld [vmem:[#allocation2 + $0x278] sm:$0xff]
      %v1250 = vld [vmem:[%s3] sm:$0xff]
      %v1251 = vld [vmem:[%s3 + $0x8] sm:$0xff]
      %v1252 = vld [vmem:[%s3 + $0x10] sm:$0xff]
      %v1253 = vld [vmem:[%s3 + $0x18] sm:$0xff]
      %v1254 = vld [vmem:[%s3 + $0x20] sm:$0xff]
      %v1255 = vld [vmem:[%s3 + $0x28] sm:$0xff]
      %v1256 = vld [vmem:[%s3 + $0x30] sm:$0xff]
      %v1257 = vld [vmem:[%s3 + $0x38] sm:$0xff]
      %1259 = vset.pattern.permute.xlu0 0
      %1260 = vperm.xlu0 %1259, %v1250
      %v1261 = vpop.permute.xlu0 %1260
      %1264 = vset.pattern.permute.xlu0 0
      %1265 = vperm.xlu0 %1264, %v1251
      %v1266 = vpop.permute.xlu0 %1265
      %1269 = vset.pattern.permute.xlu0 0
      %1270 = vperm.xlu0 %1269, %v1252
      %v1271 = vpop.permute.xlu0 %1270
      %1274 = vset.pattern.permute.xlu0 0
      %1275 = vperm.xlu0 %1274, %v1253
      %v1276 = vpop.permute.xlu0 %1275
      %1279 = vset.pattern.permute.xlu0 0
      %1280 = vperm.xlu0 %1279, %v1254
      %v1281 = vpop.permute.xlu0 %1280
      %1284 = vset.pattern.permute.xlu0 0
      %1285 = vperm.xlu0 %1284, %v1255
      %v1286 = vpop.permute.xlu0 %1285
      %1289 = vset.pattern.permute.xlu0 0
      %1290 = vperm.xlu0 %1289, %v1256
      %v1291 = vpop.permute.xlu0 %1290
      %1294 = vset.pattern.permute.xlu0 0
      %1295 = vperm.xlu0 %1294, %v1257
      %v1296 = vpop.permute.xlu0 %1295
      %1298 = vmatprep.subr.mxu0 %v1246
      %1299 = vmatpush1.msra.mxu0 %v1245
      %1300 = vmatprep.subr.mxu0 %v1241
      %1301 = vmatpush1.msra.mxu0 %v1240
      %1302 = vmatprep.subr.mxu0 %v1236
      %1303 = vmatpush1.msra.mxu0 %v1235
      %1304 = vmatprep.subr.mxu0 %v1231
      %1305 = vmatpush1.msra.mxu0 %v1230
      %1306 = vmatprep.subr.mxu0 %v1226
      %1307 = vmatpush1.msra.mxu0 %v1225
      %1308 = vmatprep.subr.mxu0 %v1221
      %1309 = vmatpush1.msra.mxu0 %v1220
      %1310 = vmatprep.subr.mxu0 %v1216
      %1311 = vmatpush1.msra.mxu0 %v1215
      %1312 = vmatprep.subr.mxu0 %v1211
      %1313 = vmatpush1.msra.mxu0 %v1210
      %1314 = vmatprep.subr.mxu0 %v1206
      %1315 = vmatpush1.msra.mxu0 %v1205
      %1316 = vmatprep.subr.mxu0 %v1201
      %1317 = vmatpush1.msra.mxu0 %v1200
      %1318 = vmatprep.subr.mxu0 %v1196
      %1319 = vmatpush1.msra.mxu0 %v1195
      %1320 = vmatprep.subr.mxu0 %v1191
      %1321 = vmatpush1.msra.mxu0 %v1190
      %1322 = vmatprep.subr.mxu0 %v1186
      %1323 = vmatpush1.msra.mxu0 %v1185
      %1324 = vmatprep.subr.mxu0 %v1181
      %1325 = vmatpush1.msra.mxu0 %v1180
      %1326 = vmatprep.subr.mxu0 %v1176
      %1327 = vmatpush1.msra.mxu0 %v1175
      %1328 = vmatprep.subr.mxu0 %v1171
      %1329 = vmatpush1.msra.mxu0 %v1170
      %1330 = vmatprep.subr.mxu0 0.0
      %1331 = vmatpush2.msra.mxu0 0.0
      %1332 = vmatprep.subr.mxu0 0.0
      %1333 = vmatpush2.msra.mxu0 0.0
      %1334 = vmatprep.subr.mxu0 0.0
      %1335 = vmatpush2.msra.mxu0 0.0
      %1336 = vmatprep.subr.mxu0 0.0
      %1337 = vmatpush2.msra.mxu0 0.0
      %1338 = vmatprep.subr.mxu0 0.0
      %1339 = vmatpush2.msra.mxu0 0.0
      %1340 = vmatprep.subr.mxu0 0.0
      %1341 = vmatpush2.msra.mxu0 0.0
      %1342 = vmatprep.subr.mxu0 0.0
      %1343 = vmatpush2.msra.mxu0 0.0
      %1344 = vmatprep.subr.mxu0 0.0
      %1345 = vmatpush2.msra.mxu0 0.0
      %1346 = vmatprep.subr.mxu0 0.0
      %1347 = vmatpush2.msra.mxu0 0.0
      %1348 = vmatprep.subr.mxu0 0.0
      %1349 = vmatpush2.msra.mxu0 0.0
      %1350 = vmatprep.subr.mxu0 0.0
      %1351 = vmatpush2.msra.mxu0 0.0
      %1352 = vmatprep.subr.mxu0 0.0
      %1353 = vmatpush2.msra.mxu0 0.0
      %1354 = vmatprep.subr.mxu0 0.0
      %1355 = vmatpush2.msra.mxu0 0.0
      %1356 = vmatprep.subr.mxu0 0.0
      %1357 = vmatpush2.msra.mxu0 0.0
      %1358 = vmatprep.subr.mxu0 0.0
      %1359 = vmatpush2.msra.mxu0 0.0
      %1360 = vmatprep.subr.mxu0 0.0
      %1361 = vmatpush2.msra.mxu0 0.0
      %1362 = vmatprep.mubr.f32.mxu0 0.0
      %1363 = vmatmul.mubr.f32.gmra.mxu0 %v1162
      %v1364 = vpop.f32.mrf.mxu0
      %v1365 = vadd.f32 %v1261, %v1364
      %v1366 = vpop.f32.mrf.mxu0
      %v1367 = vadd.f32 %v1261, %v1366
      %1368 = vmatprep.mubr.f32.mxu0 0.0
      %1369 = vmatmul.mubr.f32.gmra.mxu0 %v1163
      %v1370 = vpop.f32.mrf.mxu0
      %v1371 = vadd.f32 %v1266, %v1370
      %v1372 = vpop.f32.mrf.mxu0
      %v1373 = vadd.f32 %v1266, %v1372
      %1374 = vmatprep.mubr.f32.mxu0 0.0
      %1375 = vmatmul.mubr.f32.gmra.mxu0 %v1164
      %v1376 = vpop.f32.mrf.mxu0
      %v1377 = vadd.f32 %v1271, %v1376
      %v1378 = vpop.f32.mrf.mxu0
      %v1379 = vadd.f32 %v1271, %v1378
      %1380 = vmatprep.mubr.f32.mxu0 0.0
      %1381 = vmatmul.mubr.f32.gmra.mxu0 %v1165
      %v1382 = vpop.f32.mrf.mxu0
      %v1383 = vadd.f32 %v1276, %v1382
      %v1384 = vpop.f32.mrf.mxu0
      %v1385 = vadd.f32 %v1276, %v1384
      %1386 = vmatprep.mubr.f32.mxu0 0.0
      %1387 = vmatmul.mubr.f32.gmra.mxu0 %v1166
      %v1388 = vpop.f32.mrf.mxu0
      %v1389 = vadd.f32 %v1281, %v1388
      %v1390 = vpop.f32.mrf.mxu0
      %v1391 = vadd.f32 %v1281, %v1390
      %1392 = vmatprep.mubr.f32.mxu0 0.0
      %1393 = vmatmul.mubr.f32.gmra.mxu0 %v1167
      %v1394 = vpop.f32.mrf.mxu0
      %v1395 = vadd.f32 %v1286, %v1394
      %v1396 = vpop.f32.mrf.mxu0
      %v1397 = vadd.f32 %v1286, %v1396
      %1398 = vmatprep.mubr.f32.mxu0 0.0
      %1399 = vmatmul.mubr.f32.gmra.mxu0 %v1168
      %v1400 = vpop.f32.mrf.mxu0
      %v1401 = vadd.f32 %v1291, %v1400
      %v1402 = vpop.f32.mrf.mxu0
      %v1403 = vadd.f32 %v1291, %v1402
      %1404 = vmatprep.mubr.f32.mxu0 0.0
      %1405 = vmatmul.mubr.f32.gmra.mxu0 %v1169
      %v1406 = vpop.f32.mrf.mxu0
      %v1407 = vadd.f32 %v1296, %v1406
      %v1408 = vpop.f32.mrf.mxu0
      %v1409 = vadd.f32 %v1296, %v1408
      %1410 = vdwg.mxu0
      %1411 = vmatprep.subr.mxu0 %v1248
      %1412 = vmatpush1.msra.mxu0 %v1247
      %1413 = vmatprep.subr.mxu0 %v1243
      %1414 = vmatpush1.msra.mxu0 %v1242
      %1415 = vmatprep.subr.mxu0 %v1238
      %1416 = vmatpush1.msra.mxu0 %v1237
      %1417 = vmatprep.subr.mxu0 %v1233
      %1418 = vmatpush1.msra.mxu0 %v1232
      %1419 = vmatprep.subr.mxu0 %v1228
      %1420 = vmatpush1.msra.mxu0 %v1227
      %1421 = vmatprep.subr.mxu0 %v1223
      %1422 = vmatpush1.msra.mxu0 %v1222
      %1423 = vmatprep.subr.mxu0 %v1218
      %1424 = vmatpush1.msra.mxu0 %v1217
      %1425 = vmatprep.subr.mxu0 %v1213
      %1426 = vmatpush1.msra.mxu0 %v1212
      %1427 = vmatprep.subr.mxu0 %v1208
      %1428 = vmatpush1.msra.mxu0 %v1207
      %1429 = vmatprep.subr.mxu0 %v1203
      %1430 = vmatpush1.msra.mxu0 %v1202
      %1431 = vmatprep.subr.mxu0 %v1198
      %1432 = vmatpush1.msra.mxu0 %v1197
      %1433 = vmatprep.subr.mxu0 %v1193
      %1434 = vmatpush1.msra.mxu0 %v1192
      %1435 = vmatprep.subr.mxu0 %v1188
      %1436 = vmatpush1.msra.mxu0 %v1187
      %1437 = vmatprep.subr.mxu0 %v1183
      %1438 = vmatpush1.msra.mxu0 %v1182
      %1439 = vmatprep.subr.mxu0 %v1178
      %1440 = vmatpush1.msra.mxu0 %v1177
      %1441 = vmatprep.subr.mxu0 %v1173
      %1442 = vmatpush1.msra.mxu0 %v1172
      %1443 = vmatprep.subr.mxu0 0.0
      %1444 = vmatpush2.msra.mxu0 0.0
      %1445 = vmatprep.subr.mxu0 0.0
      %1446 = vmatpush2.msra.mxu0 0.0
      %1447 = vmatprep.subr.mxu0 0.0
      %1448 = vmatpush2.msra.mxu0 0.0
      %1449 = vmatprep.subr.mxu0 0.0
      %1450 = vmatpush2.msra.mxu0 0.0
      %1451 = vmatprep.subr.mxu0 0.0
      %1452 = vmatpush2.msra.mxu0 0.0
      %1453 = vmatprep.subr.mxu0 0.0
      %1454 = vmatpush2.msra.mxu0 0.0
      %1455 = vmatprep.subr.mxu0 0.0
      %1456 = vmatpush2.msra.mxu0 0.0
      %1457 = vmatprep.subr.mxu0 0.0
      %1458 = vmatpush2.msra.mxu0 0.0
      %1459 = vmatprep.subr.mxu0 0.0
      %1460 = vmatpush2.msra.mxu0 0.0
      %1461 = vmatprep.subr.mxu0 0.0
      %1462 = vmatpush2.msra.mxu0 0.0
      %1463 = vmatprep.subr.mxu0 0.0
      %1464 = vmatpush2.msra.mxu0 0.0
      %1465 = vmatprep.subr.mxu0 0.0
      %1466 = vmatpush2.msra.mxu0 0.0
      %1467 = vmatprep.subr.mxu0 0.0
      %1468 = vmatpush2.msra.mxu0 0.0
      %1469 = vmatprep.subr.mxu0 0.0
      %1470 = vmatpush2.msra.mxu0 0.0
      %1471 = vmatprep.subr.mxu0 0.0
      %1472 = vmatpush2.msra.mxu0 0.0
      %1473 = vmatprep.subr.mxu0 0.0
      %1474 = vmatpush2.msra.mxu0 0.0
      %1475 = vmatprep.mubr.f32.mxu0 0.0
      %1476 = vmatmul.mubr.f32.gmra.mxu0 %v1162
      %v1477 = vpop.f32.mrf.mxu0
      %v1478 = vadd.f32 %v1261, %v1477
      %v1479 = vpop.f32.mrf.mxu0
      %v1480 = vadd.f32 %v1261, %v1479
      %1481 = vmatprep.mubr.f32.mxu0 0.0
      %1482 = vmatmul.mubr.f32.gmra.mxu0 %v1163
      %v1483 = vpop.f32.mrf.mxu0
      %v1484 = vadd.f32 %v1266, %v1483
      %v1485 = vpop.f32.mrf.mxu0
      %v1486 = vadd.f32 %v1266, %v1485
      %1487 = vmatprep.mubr.f32.mxu0 0.0
      %1488 = vmatmul.mubr.f32.gmra.mxu0 %v1164
      %v1489 = vpop.f32.mrf.mxu0
      %v1490 = vadd.f32 %v1271, %v1489
      %v1491 = vpop.f32.mrf.mxu0
      %v1492 = vadd.f32 %v1271, %v1491
      %1493 = vmatprep.mubr.f32.mxu0 0.0
      %1494 = vmatmul.mubr.f32.gmra.mxu0 %v1165
      %v1495 = vpop.f32.mrf.mxu0
      %v1496 = vadd.f32 %v1276, %v1495
      %v1497 = vpop.f32.mrf.mxu0
      %v1498 = vadd.f32 %v1276, %v1497
      %1499 = vmatprep.mubr.f32.mxu0 0.0
      %1500 = vmatmul.mubr.f32.gmra.mxu0 %v1166
      %v1501 = vpop.f32.mrf.mxu0
      %v1502 = vadd.f32 %v1281, %v1501
      %v1503 = vpop.f32.mrf.mxu0
      %v1504 = vadd.f32 %v1281, %v1503
      %1505 = vmatprep.mubr.f32.mxu0 0.0
      %1506 = vmatmul.mubr.f32.gmra.mxu0 %v1167
      %v1507 = vpop.f32.mrf.mxu0
      %v1508 = vadd.f32 %v1286, %v1507
      %v1509 = vpop.f32.mrf.mxu0
      %v1510 = vadd.f32 %v1286, %v1509
      %1511 = vmatprep.mubr.f32.mxu0 0.0
      %1512 = vmatmul.mubr.f32.gmra.mxu0 %v1168
      %v1513 = vpop.f32.mrf.mxu0
      %v1514 = vadd.f32 %v1291, %v1513
      %v1515 = vpop.f32.mrf.mxu0
      %v1516 = vadd.f32 %v1291, %v1515
      %1517 = vmatprep.mubr.f32.mxu0 0.0
      %1518 = vmatmul.mubr.f32.gmra.mxu0 %v1169
      %v1519 = vpop.f32.mrf.mxu0
      %v1520 = vadd.f32 %v1296, %v1519
      %v1521 = vpop.f32.mrf.mxu0
      %v1522 = vadd.f32 %v1296, %v1521
      %1523 = vdwg.mxu0
      %1524 = vmatprep.subr.mxu0 0.0
      %1525 = vmatpush1.msra.mxu0 %v1249
      %1526 = vmatprep.subr.mxu0 0.0
      %1527 = vmatpush1.msra.mxu0 %v1244
      %1528 = vmatprep.subr.mxu0 0.0
      %1529 = vmatpush1.msra.mxu0 %v1239
      %1530 = vmatprep.subr.mxu0 0.0
      %1531 = vmatpush1.msra.mxu0 %v1234
      %1532 = vmatprep.subr.mxu0 0.0
      %1533 = vmatpush1.msra.mxu0 %v1229
      %1534 = vmatprep.subr.mxu0 0.0
      %1535 = vmatpush1.msra.mxu0 %v1224
      %1536 = vmatprep.subr.mxu0 0.0
      %1537 = vmatpush1.msra.mxu0 %v1219
      %1538 = vmatprep.subr.mxu0 0.0
      %1539 = vmatpush1.msra.mxu0 %v1214
      %1540 = vmatprep.subr.mxu0 0.0
      %1541 = vmatpush1.msra.mxu0 %v1209
      %1542 = vmatprep.subr.mxu0 0.0
      %1543 = vmatpush1.msra.mxu0 %v1204
      %1544 = vmatprep.subr.mxu0 0.0
      %1545 = vmatpush1.msra.mxu0 %v1199
      %1546 = vmatprep.subr.mxu0 0.0
      %1547 = vmatpush1.msra.mxu0 %v1194
      %1548 = vmatprep.subr.mxu0 0.0
      %1549 = vmatpush1.msra.mxu0 %v1189
      %1550 = vmatprep.subr.mxu0 0.0
      %1551 = vmatpush1.msra.mxu0 %v1184
      %1552 = vmatprep.subr.mxu0 0.0
      %1553 = vmatpush1.msra.mxu0 %v1179
      %1554 = vmatprep.subr.mxu0 0.0
      %1555 = vmatpush1.msra.mxu0 %v1174
      %1556 = vmatprep.subr.mxu0 0.0
      %1557 = vmatpush2.msra.mxu0 0.0
      %1558 = vmatprep.subr.mxu0 0.0
      %1559 = vmatpush2.msra.mxu0 0.0
      %1560 = vmatprep.subr.mxu0 0.0
      %1561 = vmatpush2.msra.mxu0 0.0
      %1562 = vmatprep.subr.mxu0 0.0
      %1563 = vmatpush2.msra.mxu0 0.0
      %1564 = vmatprep.subr.mxu0 0.0
      %1565 = vmatpush2.msra.mxu0 0.0
      %1566 = vmatprep.subr.mxu0 0.0
      %1567 = vmatpush2.msra.mxu0 0.0
      %1568 = vmatprep.subr.mxu0 0.0
      %1569 = vmatpush2.msra.mxu0 0.0
      %1570 = vmatprep.subr.mxu0 0.0
      %1571 = vmatpush2.msra.mxu0 0.0
      %1572 = vmatprep.subr.mxu0 0.0
      %1573 = vmatpush2.msra.mxu0 0.0
      %1574 = vmatprep.subr.mxu0 0.0
      %1575 = vmatpush2.msra.mxu0 0.0
      %1576 = vmatprep.subr.mxu0 0.0
      %1577 = vmatpush2.msra.mxu0 0.0
      %1578 = vmatprep.subr.mxu0 0.0
      %1579 = vmatpush2.msra.mxu0 0.0
      %1580 = vmatprep.subr.mxu0 0.0
      %1581 = vmatpush2.msra.mxu0 0.0
      %1582 = vmatprep.subr.mxu0 0.0
      %1583 = vmatpush2.msra.mxu0 0.0
      %1584 = vmatprep.subr.mxu0 0.0
      %1585 = vmatpush2.msra.mxu0 0.0
      %1586 = vmatprep.subr.mxu0 0.0
      %1587 = vmatpush2.msra.mxu0 0.0
      %1588 = vmatprep.mubr.f32.mxu0 0.0
      %1589 = vmatmul.mubr.f32.gmra.mxu0 %v1162
      %v1590 = vpop.f32.mrf.mxu0
      %v1591 = vadd.f32 %v1261, %v1590
      %v1592 = vpop.f32.mrf.mxu0
      %1593 = vmatprep.mubr.f32.mxu0 0.0
      %1594 = vmatmul.mubr.f32.gmra.mxu0 %v1163
      %v1595 = vpop.f32.mrf.mxu0
      %v1596 = vadd.f32 %v1266, %v1595
      %v1597 = vpop.f32.mrf.mxu0
      %1598 = vmatprep.mubr.f32.mxu0 0.0
      %1599 = vmatmul.mubr.f32.gmra.mxu0 %v1164
      %v1600 = vpop.f32.mrf.mxu0
      %v1601 = vadd.f32 %v1271, %v1600
      %v1602 = vpop.f32.mrf.mxu0
      %1603 = vmatprep.mubr.f32.mxu0 0.0
      %1604 = vmatmul.mubr.f32.gmra.mxu0 %v1165
      %v1605 = vpop.f32.mrf.mxu0
      %v1606 = vadd.f32 %v1276, %v1605
      %v1607 = vpop.f32.mrf.mxu0
      %1608 = vmatprep.mubr.f32.mxu0 0.0
      %1609 = vmatmul.mubr.f32.gmra.mxu0 %v1166
      %v1610 = vpop.f32.mrf.mxu0
      %v1611 = vadd.f32 %v1281, %v1610
      %v1612 = vpop.f32.mrf.mxu0
      %1613 = vmatprep.mubr.f32.mxu0 0.0
      %1614 = vmatmul.mubr.f32.gmra.mxu0 %v1167
      %v1615 = vpop.f32.mrf.mxu0
      %v1616 = vadd.f32 %v1286, %v1615
      %v1617 = vpop.f32.mrf.mxu0
      %1618 = vmatprep.mubr.f32.mxu0 0.0
      %1619 = vmatmul.mubr.f32.gmra.mxu0 %v1168
      %v1620 = vpop.f32.mrf.mxu0
      %v1621 = vadd.f32 %v1291, %v1620
      %v1622 = vpop.f32.mrf.mxu0
      %1623 = vmatprep.mubr.f32.mxu0 0.0
      %1624 = vmatmul.mubr.f32.gmra.mxu0 %v1169
      %v1625 = vpop.f32.mrf.mxu0
      %v1626 = vadd.f32 %v1296, %v1625
      %v1627 = vpop.f32.mrf.mxu0
      %1628 = vdwg.mxu0
      %v1629 = vmax.f32 %v1365, 0.0
      %v1630 = vmax.f32 %v1367, 0.0
      %v1631 = vmax.f32 %v1478, 0.0
      %v1632 = vmax.f32 %v1480, 0.0
      %v1633 = vmax.f32 %v1591, 0.0
      %v1634 = vmax.f32 %v1371, 0.0
      %v1635 = vmax.f32 %v1373, 0.0
      %v1636 = vmax.f32 %v1484, 0.0
      %v1637 = vmax.f32 %v1486, 0.0
      %v1638 = vmax.f32 %v1596, 0.0
      %v1639 = vmax.f32 %v1377, 0.0
      %v1640 = vmax.f32 %v1379, 0.0
      %v1641 = vmax.f32 %v1490, 0.0
      %v1642 = vmax.f32 %v1492, 0.0
      %v1643 = vmax.f32 %v1601, 0.0
      %v1644 = vmax.f32 %v1383, 0.0
      %v1645 = vmax.f32 %v1385, 0.0
      %v1646 = vmax.f32 %v1496, 0.0
      %v1647 = vmax.f32 %v1498, 0.0
      %v1648 = vmax.f32 %v1606, 0.0
      %v1649 = vmax.f32 %v1389, 0.0
      %v1650 = vmax.f32 %v1391, 0.0
      %v1651 = vmax.f32 %v1502, 0.0
      %v1652 = vmax.f32 %v1504, 0.0
      %v1653 = vmax.f32 %v1611, 0.0
      %v1654 = vmax.f32 %v1395, 0.0
      %v1655 = vmax.f32 %v1397, 0.0
      %v1656 = vmax.f32 %v1508, 0.0
      %v1657 = vmax.f32 %v1510, 0.0
      %v1658 = vmax.f32 %v1616, 0.0
      %v1659 = vmax.f32 %v1401, 0.0
      %v1660 = vmax.f32 %v1403, 0.0
      %v1661 = vmax.f32 %v1514, 0.0
      %v1662 = vmax.f32 %v1516, 0.0
      %v1663 = vmax.f32 %v1621, 0.0
      %v1664 = vmax.f32 %v1407, 0.0
      %v1665 = vmax.f32 %v1409, 0.0
      %v1666 = vmax.f32 %v1520, 0.0
      %v1667 = vmax.f32 %v1522, 0.0
      %v1668 = vmax.f32 %v1626, 0.0
      %v1669 = vld [vmem:[%s1] sm:$0x1f]
      %v1671 = vlaneseq
      %v1672 = vshrl.u32 %v1671, 7
      %v1673 = vsub.s32 0, %v1672
      %v1674 = vrot.slane %v1669, %v1673
      %v1675 = vlaneseq
      %v1676 = vshrl.u32 %v1675, 7
      %v1677 = vsub.s32 1, %v1676
      %v1678 = vrot.slane %v1669, %v1677
      %v1679 = vlaneseq
      %v1680 = vshrl.u32 %v1679, 7
      %v1681 = vsub.s32 2, %v1680
      %v1682 = vrot.slane %v1669, %v1681
      %v1683 = vlaneseq
      %v1684 = vshrl.u32 %v1683, 7
      %v1685 = vsub.s32 3, %v1684
      %v1686 = vrot.slane %v1669, %v1685
      %v1687 = vlaneseq
      %v1688 = vshrl.u32 %v1687, 7
      %v1689 = vsub.s32 4, %v1688
      %v1690 = vrot.slane %v1669, %v1689
      %v1696 = vmul.f32 %v1629, %v1674
      %v1697 = vmul.f32 %v1630, %v1678
      %v1698 = vmul.f32 %v1631, %v1682
      %v1699 = vmul.f32 %v1632, %v1686
      %v1700 = vmul.f32 %v1633, %v1690
      %v1701 = vmul.f32 %v1634, %v1674
      %v1702 = vmul.f32 %v1635, %v1678
      %v1703 = vmul.f32 %v1636, %v1682
      %v1704 = vmul.f32 %v1637, %v1686
      %v1705 = vmul.f32 %v1638, %v1690
      %v1706 = vmul.f32 %v1639, %v1674
      %v1707 = vmul.f32 %v1640, %v1678
      %v1708 = vmul.f32 %v1641, %v1682
      %v1709 = vmul.f32 %v1642, %v1686
      %v1710 = vmul.f32 %v1643, %v1690
      %v1711 = vmul.f32 %v1644, %v1674
      %v1712 = vmul.f32 %v1645, %v1678
      %v1713 = vmul.f32 %v1646, %v1682
      %v1714 = vmul.f32 %v1647, %v1686
      %v1715 = vmul.f32 %v1648, %v1690
      %v1716 = vmul.f32 %v1649, %v1674
      %v1717 = vmul.f32 %v1650, %v1678
      %v1718 = vmul.f32 %v1651, %v1682
      %v1719 = vmul.f32 %v1652, %v1686
      %v1720 = vmul.f32 %v1653, %v1690
      %v1721 = vmul.f32 %v1654, %v1674
      %v1722 = vmul.f32 %v1655, %v1678
      %v1723 = vmul.f32 %v1656, %v1682
      %v1724 = vmul.f32 %v1657, %v1686
      %v1725 = vmul.f32 %v1658, %v1690
      %v1726 = vmul.f32 %v1659, %v1674
      %v1727 = vmul.f32 %v1660, %v1678
      %v1728 = vmul.f32 %v1661, %v1682
      %v1729 = vmul.f32 %v1662, %v1686
      %v1730 = vmul.f32 %v1663, %v1690
      %v1731 = vmul.f32 %v1664, %v1674
      %v1732 = vmul.f32 %v1665, %v1678
      %v1733 = vmul.f32 %v1666, %v1682
      %v1734 = vmul.f32 %v1667, %v1686
      %v1735 = vmul.f32 %v1668, %v1690
      %1736 = vst [vmem:[#allocation3] sm:$0xff] %v1696
      %1737 = vst [vmem:[#allocation3 + $0x8] sm:$0xff] %v1697
      %1738 = vst [vmem:[#allocation3 + $0x10] sm:$0xff] %v1698
      %1739 = vst [vmem:[#allocation3 + $0x18] sm:$0xff] %v1699
      %1740 = vst [vmem:[#allocation3 + $0x20] sm:$0xff] %v1700
      %1741 = vst [vmem:[#allocation3 + $0x28] sm:$0xff] %v1701
      %1742 = vst [vmem:[#allocation3 + $0x30] sm:$0xff] %v1702
      %1743 = vst [vmem:[#allocation3 + $0x38] sm:$0xff] %v1703
      %1744 = vst [vmem:[#allocation3 + $0x40] sm:$0xff] %v1704
      %1745 = vst [vmem:[#allocation3 + $0x48] sm:$0xff] %v1705
      %1746 = vst [vmem:[#allocation3 + $0x50] sm:$0xff] %v1706
      %1747 = vst [vmem:[#allocation3 + $0x58] sm:$0xff] %v1707
      %1748 = vst [vmem:[#allocation3 + $0x60] sm:$0xff] %v1708
      %1749 = vst [vmem:[#allocation3 + $0x68] sm:$0xff] %v1709
      %1750 = vst [vmem:[#allocation3 + $0x70] sm:$0xff] %v1710
      %1751 = vst [vmem:[#allocation3 + $0x78] sm:$0xff] %v1711
      %1752 = vst [vmem:[#allocation3 + $0x80] sm:$0xff] %v1712
      %1753 = vst [vmem:[#allocation3 + $0x88] sm:$0xff] %v1713
      %1754 = vst [vmem:[#allocation3 + $0x90] sm:$0xff] %v1714
      %1755 = vst [vmem:[#allocation3 + $0x98] sm:$0xff] %v1715
      %1756 = vst [vmem:[#allocation3 + $0xa0] sm:$0xff] %v1716
      %1757 = vst [vmem:[#allocation3 + $0xa8] sm:$0xff] %v1717
      %1758 = vst [vmem:[#allocation3 + $0xb0] sm:$0xff] %v1718
      %1759 = vst [vmem:[#allocation3 + $0xb8] sm:$0xff] %v1719
      %1760 = vst [vmem:[#allocation3 + $0xc0] sm:$0xff] %v1720
      %1761 = vst [vmem:[#allocation3 + $0xc8] sm:$0xff] %v1721
      %1762 = vst [vmem:[#allocation3 + $0xd0] sm:$0xff] %v1722
      %1763 = vst [vmem:[#allocation3 + $0xd8] sm:$0xff] %v1723
      %1764 = vst [vmem:[#allocation3 + $0xe0] sm:$0xff] %v1724
      %1765 = vst [vmem:[#allocation3 + $0xe8] sm:$0xff] %v1725
      %1766 = vst [vmem:[#allocation3 + $0xf0] sm:$0xff] %v1726
      %1767 = vst [vmem:[#allocation3 + $0xf8] sm:$0xff] %v1727
      %1768 = vst [vmem:[#allocation3 + $0x100] sm:$0xff] %v1728
      %1769 = vst [vmem:[#allocation3 + $0x108] sm:$0xff] %v1729
      %1770 = vst [vmem:[#allocation3 + $0x110] sm:$0xff] %v1730
      %1771 = vst [vmem:[#allocation3 + $0x118] sm:$0xff] %v1731
      %1772 = vst [vmem:[#allocation3 + $0x120] sm:$0xff] %v1732
      %1773 = vst [vmem:[#allocation3 + $0x128] sm:$0xff] %v1733
      %1774 = vst [vmem:[#allocation3 + $0x130] sm:$0xff] %v1734
      %1775 = vst [vmem:[#allocation3 + $0x138] sm:$0xff] %v1735
      %v1776 = vld [vmem:[%s4] sm:$0xff]
      %v1777 = vld [vmem:[%s4 + $0x8] sm:$0xff]
      %v1778 = vld [vmem:[%s4 + $0x10] sm:$0xff]
      %v1779 = vld [vmem:[%s4 + $0x18] sm:$0xff]
      %v1780 = vld [vmem:[#allocation3] sm:$0xff]
      %v1781 = vld [vmem:[#allocation3 + $0x8] sm:$0xff]
      %v1782 = vld [vmem:[#allocation3 + $0x10] sm:$0xff]
      %v1783 = vld [vmem:[#allocation3 + $0x18] sm:$0xff]
      %v1784 = vld [vmem:[#allocation3 + $0x20] sm:$0xff]
      %v1785 = vld [vmem:[#allocation3 + $0x28] sm:$0xff]
      %v1786 = vld [vmem:[#allocation3 + $0x30] sm:$0xff]
      %v1787 = vld [vmem:[#allocation3 + $0x38] sm:$0xff]
      %v1788 = vld [vmem:[#allocation3 + $0x40] sm:$0xff]
      %v1789 = vld [vmem:[#allocation3 + $0x48] sm:$0xff]
      %v1790 = vld [vmem:[#allocation3 + $0x50] sm:$0xff]
      %v1791 = vld [vmem:[#allocation3 + $0x58] sm:$0xff]
      %v1792 = vld [vmem:[#allocation3 + $0x60] sm:$0xff]
      %v1793 = vld [vmem:[#allocation3 + $0x68] sm:$0xff]
      %v1794 = vld [vmem:[#allocation3 + $0x70] sm:$0xff]
      %v1795 = vld [vmem:[#allocation3 + $0x78] sm:$0xff]
      %v1796 = vld [vmem:[#allocation3 + $0x80] sm:$0xff]
      %v1797 = vld [vmem:[#allocation3 + $0x88] sm:$0xff]
      %v1798 = vld [vmem:[#allocation3 + $0x90] sm:$0xff]
      %v1799 = vld [vmem:[#allocation3 + $0x98] sm:$0xff]
      %v1800 = vld [vmem:[#allocation3 + $0xa0] sm:$0xff]
      %v1801 = vld [vmem:[#allocation3 + $0xa8] sm:$0xff]
      %v1802 = vld [vmem:[#allocation3 + $0xb0] sm:$0xff]
      %v1803 = vld [vmem:[#allocation3 + $0xb8] sm:$0xff]
      %v1804 = vld [vmem:[#allocation3 + $0xc0] sm:$0xff]
      %v1805 = vld [vmem:[#allocation3 + $0xc8] sm:$0xff]
      %v1806 = vld [vmem:[#allocation3 + $0xd0] sm:$0xff]
      %v1807 = vld [vmem:[#allocation3 + $0xd8] sm:$0xff]
      %v1808 = vld [vmem:[#allocation3 + $0xe0] sm:$0xff]
      %v1809 = vld [vmem:[#allocation3 + $0xe8] sm:$0xff]
      %v1810 = vld [vmem:[#allocation3 + $0xf0] sm:$0xff]
      %v1811 = vld [vmem:[#allocation3 + $0xf8] sm:$0xff]
      %v1812 = vld [vmem:[#allocation3 + $0x100] sm:$0xff]
      %v1813 = vld [vmem:[#allocation3 + $0x108] sm:$0xff]
      %v1814 = vld [vmem:[#allocation3 + $0x110] sm:$0xff]
      %v1815 = vld [vmem:[#allocation3 + $0x118] sm:$0xff]
      %v1816 = vld [vmem:[#allocation3 + $0x120] sm:$0xff]
      %v1817 = vld [vmem:[#allocation3 + $0x128] sm:$0xff]
      %v1818 = vld [vmem:[#allocation3 + $0x130] sm:$0xff]
      %v1819 = vld [vmem:[#allocation3 + $0x138] sm:$0xff]
      %v1820 = vld [vmem:[%s5] sm:$0xff]
      %v1821 = vld [vmem:[%s5 + $0x8] sm:$0xff]
      %v1822 = vld [vmem:[%s5 + $0x10] sm:$0xff]
      %v1823 = vld [vmem:[%s5 + $0x18] sm:$0xff]
      %1825 = vset.pattern.permute.xlu0 0
      %1826 = vperm.xlu0 %1825, %v1820
      %v1827 = vpop.permute.xlu0 %1826
      %1830 = vset.pattern.permute.xlu0 0
      %1831 = vperm.xlu0 %1830, %v1821
      %v1832 = vpop.permute.xlu0 %1831
      %1835 = vset.pattern.permute.xlu0 0
      %1836 = vperm.xlu0 %1835, %v1822
      %v1837 = vpop.permute.xlu0 %1836
      %1840 = vset.pattern.permute.xlu0 0
      %1841 = vperm.xlu0 %1840, %v1823
      %v1842 = vpop.permute.xlu0 %1841
      %v1845 = vsel %vm531, %v1776, 0
      %v1848 = vsel %vm531, %v1777, 0
      %v1851 = vsel %vm531, %v1778, 0
      %v1854 = vsel %vm531, %v1779, 0
      %1856 = vmatprep.subr.mxu0 0.0
      %1857 = vmatpush1.msra.mxu0 0.0
      %1858 = vmatprep.subr.mxu0 0.0
      %1859 = vmatpush1.msra.mxu0 0.0
      %1860 = vmatprep.subr.mxu0 0.0
      %1861 = vmatpush1.msra.mxu0 0.0
      %1862 = vmatprep.subr.mxu0 0.0
      %1863 = vmatpush1.msra.mxu0 0.0
      %1864 = vmatprep.subr.mxu0 0.0
      %1865 = vmatpush1.msra.mxu0 0.0
      %1866 = vmatprep.subr.mxu0 0.0
      %1867 = vmatpush1.msra.mxu0 0.0
      %1868 = vmatprep.subr.mxu0 0.0
      %1869 = vmatpush1.msra.mxu0 0.0
      %1870 = vmatprep.subr.mxu0 0.0
      %1871 = vmatpush1.msra.mxu0 0.0
      %1872 = vmatprep.subr.mxu0 %v1816
      %1873 = vmatpush1.msra.mxu0 %v1815
      %1874 = vmatprep.subr.mxu0 %v1811
      %1875 = vmatpush1.msra.mxu0 %v1810
      %1876 = vmatprep.subr.mxu0 %v1806
      %1877 = vmatpush1.msra.mxu0 %v1805
      %1878 = vmatprep.subr.mxu0 %v1801
      %1879 = vmatpush1.msra.mxu0 %v1800
      %1880 = vmatprep.subr.mxu0 %v1796
      %1881 = vmatpush1.msra.mxu0 %v1795
      %1882 = vmatprep.subr.mxu0 %v1791
      %1883 = vmatpush1.msra.mxu0 %v1790
      %1884 = vmatprep.subr.mxu0 %v1786
      %1885 = vmatpush1.msra.mxu0 %v1785
      %1886 = vmatprep.subr.mxu0 %v1781
      %1887 = vmatpush1.msra.mxu0 %v1780
      %1888 = vmatprep.subr.mxu0 0.0
      %1889 = vmatpush2.msra.mxu0 0.0
      %1890 = vmatprep.subr.mxu0 0.0
      %1891 = vmatpush2.msra.mxu0 0.0
      %1892 = vmatprep.subr.mxu0 0.0
      %1893 = vmatpush2.msra.mxu0 0.0
      %1894 = vmatprep.subr.mxu0 0.0
      %1895 = vmatpush2.msra.mxu0 0.0
      %1896 = vmatprep.subr.mxu0 0.0
      %1897 = vmatpush2.msra.mxu0 0.0
      %1898 = vmatprep.subr.mxu0 0.0
      %1899 = vmatpush2.msra.mxu0 0.0
      %1900 = vmatprep.subr.mxu0 0.0
      %1901 = vmatpush2.msra.mxu0 0.0
      %1902 = vmatprep.subr.mxu0 0.0
      %1903 = vmatpush2.msra.mxu0 0.0
      %1904 = vmatprep.subr.mxu0 0.0
      %1905 = vmatpush2.msra.mxu0 0.0
      %1906 = vmatprep.subr.mxu0 0.0
      %1907 = vmatpush2.msra.mxu0 0.0
      %1908 = vmatprep.subr.mxu0 0.0
      %1909 = vmatpush2.msra.mxu0 0.0
      %1910 = vmatprep.subr.mxu0 0.0
      %1911 = vmatpush2.msra.mxu0 0.0
      %1912 = vmatprep.subr.mxu0 0.0
      %1913 = vmatpush2.msra.mxu0 0.0
      %1914 = vmatprep.subr.mxu0 0.0
      %1915 = vmatpush2.msra.mxu0 0.0
      %1916 = vmatprep.subr.mxu0 0.0
      %1917 = vmatpush2.msra.mxu0 0.0
      %1918 = vmatprep.subr.mxu0 0.0
      %1919 = vmatpush2.msra.mxu0 0.0
      %1920 = vmatprep.mubr.f32.mxu0 0.0
      %1921 = vmatmul.mubr.f32.gmra.mxu0 %v1845
      %v1922 = vpop.f32.mrf.mxu0
      %v1923 = vadd.f32 %v1827, %v1922
      %v1924 = vpop.f32.mrf.mxu0
      %v1925 = vadd.f32 %v1827, %v1924
      %1926 = vmatprep.mubr.f32.mxu0 0.0
      %1927 = vmatmul.mubr.f32.gmra.mxu0 %v1848
      %v1928 = vpop.f32.mrf.mxu0
      %v1929 = vadd.f32 %v1832, %v1928
      %v1930 = vpop.f32.mrf.mxu0
      %v1931 = vadd.f32 %v1832, %v1930
      %1932 = vmatprep.mubr.f32.mxu0 0.0
      %1933 = vmatmul.mubr.f32.gmra.mxu0 %v1851
      %v1934 = vpop.f32.mrf.mxu0
      %v1935 = vadd.f32 %v1837, %v1934
      %v1936 = vpop.f32.mrf.mxu0
      %v1937 = vadd.f32 %v1837, %v1936
      %1938 = vmatprep.mubr.f32.mxu0 0.0
      %1939 = vmatmul.mubr.f32.gmra.mxu0 %v1854
      %v1940 = vpop.f32.mrf.mxu0
      %v1941 = vadd.f32 %v1842, %v1940
      %v1942 = vpop.f32.mrf.mxu0
      %v1943 = vadd.f32 %v1842, %v1942
      %1944 = vdwg.mxu0
      %1945 = vmatprep.subr.mxu0 0.0
      %1946 = vmatpush1.msra.mxu0 0.0
      %1947 = vmatprep.subr.mxu0 0.0
      %1948 = vmatpush1.msra.mxu0 0.0
      %1949 = vmatprep.subr.mxu0 0.0
      %1950 = vmatpush1.msra.mxu0 0.0
      %1951 = vmatprep.subr.mxu0 0.0
      %1952 = vmatpush1.msra.mxu0 0.0
      %1953 = vmatprep.subr.mxu0 0.0
      %1954 = vmatpush1.msra.mxu0 0.0
      %1955 = vmatprep.subr.mxu0 0.0
      %1956 = vmatpush1.msra.mxu0 0.0
      %1957 = vmatprep.subr.mxu0 0.0
      %1958 = vmatpush1.msra.mxu0 0.0
      %1959 = vmatprep.subr.mxu0 0.0
      %1960 = vmatpush1.msra.mxu0 0.0
      %1961 = vmatprep.subr.mxu0 %v1818
      %1962 = vmatpush1.msra.mxu0 %v1817
      %1963 = vmatprep.subr.mxu0 %v1813
      %1964 = vmatpush1.msra.mxu0 %v1812
      %1965 = vmatprep.subr.mxu0 %v1808
      %1966 = vmatpush1.msra.mxu0 %v1807
      %1967 = vmatprep.subr.mxu0 %v1803
      %1968 = vmatpush1.msra.mxu0 %v1802
      %1969 = vmatprep.subr.mxu0 %v1798
      %1970 = vmatpush1.msra.mxu0 %v1797
      %1971 = vmatprep.subr.mxu0 %v1793
      %1972 = vmatpush1.msra.mxu0 %v1792
      %1973 = vmatprep.subr.mxu0 %v1788
      %1974 = vmatpush1.msra.mxu0 %v1787
      %1975 = vmatprep.subr.mxu0 %v1783
      %1976 = vmatpush1.msra.mxu0 %v1782
      %1977 = vmatprep.subr.mxu0 0.0
      %1978 = vmatpush2.msra.mxu0 0.0
      %1979 = vmatprep.subr.mxu0 0.0
      %1980 = vmatpush2.msra.mxu0 0.0
      %1981 = vmatprep.subr.mxu0 0.0
      %1982 = vmatpush2.msra.mxu0 0.0
      %1983 = vmatprep.subr.mxu0 0.0
      %1984 = vmatpush2.msra.mxu0 0.0
      %1985 = vmatprep.subr.mxu0 0.0
      %1986 = vmatpush2.msra.mxu0 0.0
      %1987 = vmatprep.subr.mxu0 0.0
      %1988 = vmatpush2.msra.mxu0 0.0
      %1989 = vmatprep.subr.mxu0 0.0
      %1990 = vmatpush2.msra.mxu0 0.0
      %1991 = vmatprep.subr.mxu0 0.0
      %1992 = vmatpush2.msra.mxu0 0.0
      %1993 = vmatprep.subr.mxu0 0.0
      %1994 = vmatpush2.msra.mxu0 0.0
      %1995 = vmatprep.subr.mxu0 0.0
      %1996 = vmatpush2.msra.mxu0 0.0
      %1997 = vmatprep.subr.mxu0 0.0
      %1998 = vmatpush2.msra.mxu0 0.0
      %1999 = vmatprep.subr.mxu0 0.0
      %2000 = vmatpush2.msra.mxu0 0.0
      %2001 = vmatprep.subr.mxu0 0.0
      %2002 = vmatpush2.msra.mxu0 0.0
      %2003 = vmatprep.subr.mxu0 0.0
      %2004 = vmatpush2.msra.mxu0 0.0
      %2005 = vmatprep.subr.mxu0 0.0
      %2006 = vmatpush2.msra.mxu0 0.0
      %2007 = vmatprep.subr.mxu0 0.0
      %2008 = vmatpush2.msra.mxu0 0.0
      %2009 = vmatprep.mubr.f32.mxu0 0.0
      %2010 = vmatmul.mubr.f32.gmra.mxu0 %v1845
      %v2011 = vpop.f32.mrf.mxu0
      %v2012 = vadd.f32 %v1827, %v2011
      %v2013 = vpop.f32.mrf.mxu0
      %v2014 = vadd.f32 %v1827, %v2013
      %2015 = vmatprep.mubr.f32.mxu0 0.0
      %2016 = vmatmul.mubr.f32.gmra.mxu0 %v1848
      %v2017 = vpop.f32.mrf.mxu0
      %v2018 = vadd.f32 %v1832, %v2017
      %v2019 = vpop.f32.mrf.mxu0
      %v2020 = vadd.f32 %v1832, %v2019
      %2021 = vmatprep.mubr.f32.mxu0 0.0
      %2022 = vmatmul.mubr.f32.gmra.mxu0 %v1851
      %v2023 = vpop.f32.mrf.mxu0
      %v2024 = vadd.f32 %v1837, %v2023
      %v2025 = vpop.f32.mrf.mxu0
      %v2026 = vadd.f32 %v1837, %v2025
      %2027 = vmatprep.mubr.f32.mxu0 0.0
      %2028 = vmatmul.mubr.f32.gmra.mxu0 %v1854
      %v2029 = vpop.f32.mrf.mxu0
      %v2030 = vadd.f32 %v1842, %v2029
      %v2031 = vpop.f32.mrf.mxu0
      %v2032 = vadd.f32 %v1842, %v2031
      %2033 = vdwg.mxu0
      %2034 = vmatprep.subr.mxu0 0.0
      %2035 = vmatpush1.msra.mxu0 0.0
      %2036 = vmatprep.subr.mxu0 0.0
      %2037 = vmatpush1.msra.mxu0 0.0
      %2038 = vmatprep.subr.mxu0 0.0
      %2039 = vmatpush1.msra.mxu0 0.0
      %2040 = vmatprep.subr.mxu0 0.0
      %2041 = vmatpush1.msra.mxu0 0.0
      %2042 = vmatprep.subr.mxu0 0.0
      %2043 = vmatpush1.msra.mxu0 0.0
      %2044 = vmatprep.subr.mxu0 0.0
      %2045 = vmatpush1.msra.mxu0 0.0
      %2046 = vmatprep.subr.mxu0 0.0
      %2047 = vmatpush1.msra.mxu0 0.0
      %2048 = vmatprep.subr.mxu0 0.0
      %2049 = vmatpush1.msra.mxu0 0.0
      %2050 = vmatprep.subr.mxu0 0.0
      %2051 = vmatpush1.msra.mxu0 %v1819
      %2052 = vmatprep.subr.mxu0 0.0
      %2053 = vmatpush1.msra.mxu0 %v1814
      %2054 = vmatprep.subr.mxu0 0.0
      %2055 = vmatpush1.msra.mxu0 %v1809
      %2056 = vmatprep.subr.mxu0 0.0
      %2057 = vmatpush1.msra.mxu0 %v1804
      %2058 = vmatprep.subr.mxu0 0.0
      %2059 = vmatpush1.msra.mxu0 %v1799
      %2060 = vmatprep.subr.mxu0 0.0
      %2061 = vmatpush1.msra.mxu0 %v1794
      %2062 = vmatprep.subr.mxu0 0.0
      %2063 = vmatpush1.msra.mxu0 %v1789
      %2064 = vmatprep.subr.mxu0 0.0
      %2065 = vmatpush1.msra.mxu0 %v1784
      %2066 = vmatprep.subr.mxu0 0.0
      %2067 = vmatpush2.msra.mxu0 0.0
      %2068 = vmatprep.subr.mxu0 0.0
      %2069 = vmatpush2.msra.mxu0 0.0
      %2070 = vmatprep.subr.mxu0 0.0
      %2071 = vmatpush2.msra.mxu0 0.0
      %2072 = vmatprep.subr.mxu0 0.0
      %2073 = vmatpush2.msra.mxu0 0.0
      %2074 = vmatprep.subr.mxu0 0.0
      %2075 = vmatpush2.msra.mxu0 0.0
      %2076 = vmatprep.subr.mxu0 0.0
      %2077 = vmatpush2.msra.mxu0 0.0
      %2078 = vmatprep.subr.mxu0 0.0
      %2079 = vmatpush2.msra.mxu0 0.0
      %2080 = vmatprep.subr.mxu0 0.0
      %2081 = vmatpush2.msra.mxu0 0.0
      %2082 = vmatprep.subr.mxu0 0.0
      %2083 = vmatpush2.msra.mxu0 0.0
      %2084 = vmatprep.subr.mxu0 0.0
      %2085 = vmatpush2.msra.mxu0 0.0
      %2086 = vmatprep.subr.mxu0 0.0
      %2087 = vmatpush2.msra.mxu0 0.0
      %2088 = vmatprep.subr.mxu0 0.0
      %2089 = vmatpush2.msra.mxu0 0.0
      %2090 = vmatprep.subr.mxu0 0.0
      %2091 = vmatpush2.msra.mxu0 0.0
      %2092 = vmatprep.subr.mxu0 0.0
      %2093 = vmatpush2.msra.mxu0 0.0
      %2094 = vmatprep.subr.mxu0 0.0
      %2095 = vmatpush2.msra.mxu0 0.0
      %2096 = vmatprep.subr.mxu0 0.0
      %2097 = vmatpush2.msra.mxu0 0.0
      %2098 = vmatprep.mubr.f32.mxu0 0.0
      %2099 = vmatmul.mubr.f32.gmra.mxu0 %v1845
      %v2100 = vpop.f32.mrf.mxu0
      %v2101 = vadd.f32 %v1827, %v2100
      %v2102 = vpop.f32.mrf.mxu0
      %2103 = vmatprep.mubr.f32.mxu0 0.0
      %2104 = vmatmul.mubr.f32.gmra.mxu0 %v1848
      %v2105 = vpop.f32.mrf.mxu0
      %v2106 = vadd.f32 %v1832, %v2105
      %v2107 = vpop.f32.mrf.mxu0
      %2108 = vmatprep.mubr.f32.mxu0 0.0
      %2109 = vmatmul.mubr.f32.gmra.mxu0 %v1851
      %v2110 = vpop.f32.mrf.mxu0
      %v2111 = vadd.f32 %v1837, %v2110
      %v2112 = vpop.f32.mrf.mxu0
      %2113 = vmatprep.mubr.f32.mxu0 0.0
      %2114 = vmatmul.mubr.f32.gmra.mxu0 %v1854
      %v2115 = vpop.f32.mrf.mxu0
      %v2116 = vadd.f32 %v1842, %v2115
      %v2117 = vpop.f32.mrf.mxu0
      %2118 = vdwg.mxu0
      %v2119 = vmax.f32 %v1923, 0.0
      %v2120 = vmax.f32 %v1925, 0.0
      %v2121 = vmax.f32 %v2012, 0.0
      %v2122 = vmax.f32 %v2014, 0.0
      %v2123 = vmax.f32 %v2101, 0.0
      %v2124 = vmax.f32 %v1929, 0.0
      %v2125 = vmax.f32 %v1931, 0.0
      %v2126 = vmax.f32 %v2018, 0.0
      %v2127 = vmax.f32 %v2020, 0.0
      %v2128 = vmax.f32 %v2106, 0.0
      %v2129 = vmax.f32 %v1935, 0.0
      %v2130 = vmax.f32 %v1937, 0.0
      %v2131 = vmax.f32 %v2024, 0.0
      %v2132 = vmax.f32 %v2026, 0.0
      %v2133 = vmax.f32 %v2111, 0.0
      %v2134 = vmax.f32 %v1941, 0.0
      %v2135 = vmax.f32 %v1943, 0.0
      %v2136 = vmax.f32 %v2030, 0.0
      %v2137 = vmax.f32 %v2032, 0.0
      %v2138 = vmax.f32 %v2116, 0.0
      %2139 = vst [vmem:[#allocation4] sm:$0xff] %v2119
      %2140 = vst [vmem:[#allocation4 + $0x8] sm:$0xff] %v2120
      %2141 = vst [vmem:[#allocation4 + $0x10] sm:$0xff] %v2121
      %2142 = vst [vmem:[#allocation4 + $0x18] sm:$0xff] %v2122
      %2143 = vst [vmem:[#allocation4 + $0x20] sm:$0xff] %v2123
      %2144 = vst [vmem:[#allocation4 + $0x28] sm:$0xff] %v2124
      %2145 = vst [vmem:[#allocation4 + $0x30] sm:$0xff] %v2125
      %2146 = vst [vmem:[#allocation4 + $0x38] sm:$0xff] %v2126
      %2147 = vst [vmem:[#allocation4 + $0x40] sm:$0xff] %v2127
      %2148 = vst [vmem:[#allocation4 + $0x48] sm:$0xff] %v2128
      %2149 = vst [vmem:[#allocation4 + $0x50] sm:$0xff] %v2129
      %2150 = vst [vmem:[#allocation4 + $0x58] sm:$0xff] %v2130
      %2151 = vst [vmem:[#allocation4 + $0x60] sm:$0xff] %v2131
      %2152 = vst [vmem:[#allocation4 + $0x68] sm:$0xff] %v2132
      %2153 = vst [vmem:[#allocation4 + $0x70] sm:$0xff] %v2133
      %2154 = vst [vmem:[#allocation4 + $0x78] sm:$0xff] %v2134
      %2155 = vst [vmem:[#allocation4 + $0x80] sm:$0xff] %v2135
      %2156 = vst [vmem:[#allocation4 + $0x88] sm:$0xff] %v2136
      %2157 = vst [vmem:[#allocation4 + $0x90] sm:$0xff] %v2137
      %2158 = vst [vmem:[#allocation4 + $0x98] sm:$0xff] %v2138
      %v2159 = vld [vmem:[%s6] sm:$0xff]
      %v2160 = vld [vmem:[%s6 + $0x8] sm:$0xff]
      %v2161 = vld [vmem:[%s6 + $0x10] sm:$0xff]
      %v2162 = vld [vmem:[%s6 + $0x18] sm:$0xff]
      %v2163 = vld [vmem:[#allocation4] sm:$0xff]
      %v2164 = vld [vmem:[#allocation4 + $0x8] sm:$0xff]
      %v2165 = vld [vmem:[#allocation4 + $0x10] sm:$0xff]
      %v2166 = vld [vmem:[#allocation4 + $0x18] sm:$0xff]
      %v2167 = vld [vmem:[#allocation4 + $0x20] sm:$0xff]
      %v2168 = vld [vmem:[#allocation4 + $0x28] sm:$0xff]
      %v2169 = vld [vmem:[#allocation4 + $0x30] sm:$0xff]
      %v2170 = vld [vmem:[#allocation4 + $0x38] sm:$0xff]
      %v2171 = vld [vmem:[#allocation4 + $0x40] sm:$0xff]
      %v2172 = vld [vmem:[#allocation4 + $0x48] sm:$0xff]
      %v2173 = vld [vmem:[#allocation4 + $0x50] sm:$0xff]
      %v2174 = vld [vmem:[#allocation4 + $0x58] sm:$0xff]
      %v2175 = vld [vmem:[#allocation4 + $0x60] sm:$0xff]
      %v2176 = vld [vmem:[#allocation4 + $0x68] sm:$0xff]
      %v2177 = vld [vmem:[#allocation4 + $0x70] sm:$0xff]
      %v2178 = vld [vmem:[#allocation4 + $0x78] sm:$0xff]
      %v2179 = vld [vmem:[#allocation4 + $0x80] sm:$0xff]
      %v2180 = vld [vmem:[#allocation4 + $0x88] sm:$0xff]
      %v2181 = vld [vmem:[#allocation4 + $0x90] sm:$0xff]
      %v2182 = vld [vmem:[#allocation4 + $0x98] sm:$0xff]
      %v2184 = vsel %vm630, %v2159, 0
      %v2187 = vsel %vm630, %v2160, 0
      %v2190 = vsel %vm630, %v2161, 0
      %v2193 = vsel %vm630, %v2162, 0
      %2195 = vmatprep.subr.mxu0 0.0
      %2196 = vmatpush1.msra.mxu0 0.0
      %2197 = vmatprep.subr.mxu0 0.0
      %2198 = vmatpush1.msra.mxu0 0.0
      %2199 = vmatprep.subr.mxu0 0.0
      %2200 = vmatpush1.msra.mxu0 0.0
      %2201 = vmatprep.subr.mxu0 0.0
      %2202 = vmatpush1.msra.mxu0 0.0
      %2203 = vmatprep.subr.mxu0 0.0
      %2204 = vmatpush1.msra.mxu0 0.0
      %2205 = vmatprep.subr.mxu0 0.0
      %2206 = vmatpush1.msra.mxu0 0.0
      %2207 = vmatprep.subr.mxu0 0.0
      %2208 = vmatpush1.msra.mxu0 0.0
      %2209 = vmatprep.subr.mxu0 0.0
      %2210 = vmatpush1.msra.mxu0 0.0
      %2211 = vmatprep.subr.mxu0 0.0
      %2212 = vmatpush1.msra.mxu0 0.0
      %2213 = vmatprep.subr.mxu0 0.0
      %2214 = vmatpush1.msra.mxu0 0.0
      %2215 = vmatprep.subr.mxu0 0.0
      %2216 = vmatpush1.msra.mxu0 0.0
      %2217 = vmatprep.subr.mxu0 0.0
      %2218 = vmatpush1.msra.mxu0 0.0
      %2219 = vmatprep.subr.mxu0 %v2179
      %2220 = vmatpush1.msra.mxu0 %v2178
      %2221 = vmatprep.subr.mxu0 %v2174
      %2222 = vmatpush1.msra.mxu0 %v2173
      %2223 = vmatprep.subr.mxu0 %v2169
      %2224 = vmatpush1.msra.mxu0 %v2168
      %2225 = vmatprep.subr.mxu0 %v2164
      %2226 = vmatpush1.msra.mxu0 %v2163
      %2227 = vmatprep.subr.mxu0 0.0
      %2228 = vmatpush2.msra.mxu0 0.0
      %2229 = vmatprep.subr.mxu0 0.0
      %2230 = vmatpush2.msra.mxu0 0.0
      %2231 = vmatprep.subr.mxu0 0.0
      %2232 = vmatpush2.msra.mxu0 0.0
      %2233 = vmatprep.subr.mxu0 0.0
      %2234 = vmatpush2.msra.mxu0 0.0
      %2235 = vmatprep.subr.mxu0 0.0
      %2236 = vmatpush2.msra.mxu0 0.0
      %2237 = vmatprep.subr.mxu0 0.0
      %2238 = vmatpush2.msra.mxu0 0.0
      %2239 = vmatprep.subr.mxu0 0.0
      %2240 = vmatpush2.msra.mxu0 0.0
      %2241 = vmatprep.subr.mxu0 0.0
      %2242 = vmatpush2.msra.mxu0 0.0
      %2243 = vmatprep.subr.mxu0 0.0
      %2244 = vmatpush2.msra.mxu0 0.0
      %2245 = vmatprep.subr.mxu0 0.0
      %2246 = vmatpush2.msra.mxu0 0.0
      %2247 = vmatprep.subr.mxu0 0.0
      %2248 = vmatpush2.msra.mxu0 0.0
      %2249 = vmatprep.subr.mxu0 0.0
      %2250 = vmatpush2.msra.mxu0 0.0
      %2251 = vmatprep.subr.mxu0 0.0
      %2252 = vmatpush2.msra.mxu0 0.0
      %2253 = vmatprep.subr.mxu0 0.0
      %2254 = vmatpush2.msra.mxu0 0.0
      %2255 = vmatprep.subr.mxu0 0.0
      %2256 = vmatpush2.msra.mxu0 0.0
      %2257 = vmatprep.subr.mxu0 0.0
      %2258 = vmatpush2.msra.mxu0 0.0
      %2259 = vmatprep.mubr.f32.mxu0 0.0
      %2260 = vmatmul.mubr.f32.gmra.mxu0 %v2184
      %v2261 = vpop.f32.mrf.mxu0
      %v2262 = vadd.f32 0.0, %v2261
      %v2263 = vpop.f32.mrf.mxu0
      %v2264 = vadd.f32 0.0, %v2263
      %2265 = vmatprep.mubr.f32.mxu0 0.0
      %2266 = vmatmul.mubr.f32.gmra.mxu0 %v2187
      %v2267 = vpop.f32.mrf.mxu0
      %v2268 = vadd.f32 0.0, %v2267
      %v2269 = vpop.f32.mrf.mxu0
      %v2270 = vadd.f32 0.0, %v2269
      %2271 = vmatprep.mubr.f32.mxu0 0.0
      %2272 = vmatmul.mubr.f32.gmra.mxu0 %v2190
      %v2273 = vpop.f32.mrf.mxu0
      %v2274 = vadd.f32 0.0, %v2273
      %v2275 = vpop.f32.mrf.mxu0
      %v2276 = vadd.f32 0.0, %v2275
      %2277 = vmatprep.mubr.f32.mxu0 0.0
      %2278 = vmatmul.mubr.f32.gmra.mxu0 %v2193
      %v2279 = vpop.f32.mrf.mxu0
      %v2280 = vadd.f32 0.0, %v2279
      %v2281 = vpop.f32.mrf.mxu0
      %v2282 = vadd.f32 0.0, %v2281
      %2283 = vdwg.mxu0
      %2284 = vmatprep.subr.mxu0 0.0
      %2285 = vmatpush1.msra.mxu0 0.0
      %2286 = vmatprep.subr.mxu0 0.0
      %2287 = vmatpush1.msra.mxu0 0.0
      %2288 = vmatprep.subr.mxu0 0.0
      %2289 = vmatpush1.msra.mxu0 0.0
      %2290 = vmatprep.subr.mxu0 0.0
      %2291 = vmatpush1.msra.mxu0 0.0
      %2292 = vmatprep.subr.mxu0 0.0
      %2293 = vmatpush1.msra.mxu0 0.0
      %2294 = vmatprep.subr.mxu0 0.0
      %2295 = vmatpush1.msra.mxu0 0.0
      %2296 = vmatprep.subr.mxu0 0.0
      %2297 = vmatpush1.msra.mxu0 0.0
      %2298 = vmatprep.subr.mxu0 0.0
      %2299 = vmatpush1.msra.mxu0 0.0
      %2300 = vmatprep.subr.mxu0 0.0
      %2301 = vmatpush1.msra.mxu0 0.0
      %2302 = vmatprep.subr.mxu0 0.0
      %2303 = vmatpush1.msra.mxu0 0.0
      %2304 = vmatprep.subr.mxu0 0.0
      %2305 = vmatpush1.msra.mxu0 0.0
      %2306 = vmatprep.subr.mxu0 0.0
      %2307 = vmatpush1.msra.mxu0 0.0
      %2308 = vmatprep.subr.mxu0 %v2181
      %2309 = vmatpush1.msra.mxu0 %v2180
      %2310 = vmatprep.subr.mxu0 %v2176
      %2311 = vmatpush1.msra.mxu0 %v2175
      %2312 = vmatprep.subr.mxu0 %v2171
      %2313 = vmatpush1.msra.mxu0 %v2170
      %2314 = vmatprep.subr.mxu0 %v2166
      %2315 = vmatpush1.msra.mxu0 %v2165
      %2316 = vmatprep.subr.mxu0 0.0
      %2317 = vmatpush2.msra.mxu0 0.0
      %2318 = vmatprep.subr.mxu0 0.0
      %2319 = vmatpush2.msra.mxu0 0.0
      %2320 = vmatprep.subr.mxu0 0.0
      %2321 = vmatpush2.msra.mxu0 0.0
      %2322 = vmatprep.subr.mxu0 0.0
      %2323 = vmatpush2.msra.mxu0 0.0
      %2324 = vmatprep.subr.mxu0 0.0
      %2325 = vmatpush2.msra.mxu0 0.0
      %2326 = vmatprep.subr.mxu0 0.0
      %2327 = vmatpush2.msra.mxu0 0.0
      %2328 = vmatprep.subr.mxu0 0.0
      %2329 = vmatpush2.msra.mxu0 0.0
      %2330 = vmatprep.subr.mxu0 0.0
      %2331 = vmatpush2.msra.mxu0 0.0
      %2332 = vmatprep.subr.mxu0 0.0
      %2333 = vmatpush2.msra.mxu0 0.0
      %2334 = vmatprep.subr.mxu0 0.0
      %2335 = vmatpush2.msra.mxu0 0.0
      %2336 = vmatprep.subr.mxu0 0.0
      %2337 = vmatpush2.msra.mxu0 0.0
      %2338 = vmatprep.subr.mxu0 0.0
      %2339 = vmatpush2.msra.mxu0 0.0
      %2340 = vmatprep.subr.mxu0 0.0
      %2341 = vmatpush2.msra.mxu0 0.0
      %2342 = vmatprep.subr.mxu0 0.0
      %2343 = vmatpush2.msra.mxu0 0.0
      %2344 = vmatprep.subr.mxu0 0.0
      %2345 = vmatpush2.msra.mxu0 0.0
      %2346 = vmatprep.subr.mxu0 0.0
      %2347 = vmatpush2.msra.mxu0 0.0
      %2348 = vmatprep.mubr.f32.mxu0 0.0
      %2349 = vmatmul.mubr.f32.gmra.mxu0 %v2184
      %v2350 = vpop.f32.mrf.mxu0
      %v2351 = vadd.f32 0.0, %v2350
      %v2352 = vpop.f32.mrf.mxu0
      %v2353 = vadd.f32 0.0, %v2352
      %2354 = vmatprep.mubr.f32.mxu0 0.0
      %2355 = vmatmul.mubr.f32.gmra.mxu0 %v2187
      %v2356 = vpop.f32.mrf.mxu0
      %v2357 = vadd.f32 0.0, %v2356
      %v2358 = vpop.f32.mrf.mxu0
      %v2359 = vadd.f32 0.0, %v2358
      %2360 = vmatprep.mubr.f32.mxu0 0.0
      %2361 = vmatmul.mubr.f32.gmra.mxu0 %v2190
      %v2362 = vpop.f32.mrf.mxu0
      %v2363 = vadd.f32 0.0, %v2362
      %v2364 = vpop.f32.mrf.mxu0
      %v2365 = vadd.f32 0.0, %v2364
      %2366 = vmatprep.mubr.f32.mxu0 0.0
      %2367 = vmatmul.mubr.f32.gmra.mxu0 %v2193
      %v2368 = vpop.f32.mrf.mxu0
      %v2369 = vadd.f32 0.0, %v2368
      %v2370 = vpop.f32.mrf.mxu0
      %v2371 = vadd.f32 0.0, %v2370
      %2372 = vdwg.mxu0
      %2373 = vmatprep.subr.mxu0 0.0
      %2374 = vmatpush1.msra.mxu0 0.0
      %2375 = vmatprep.subr.mxu0 0.0
      %2376 = vmatpush1.msra.mxu0 0.0
      %2377 = vmatprep.subr.mxu0 0.0
      %2378 = vmatpush1.msra.mxu0 0.0
      %2379 = vmatprep.subr.mxu0 0.0
      %2380 = vmatpush1.msra.mxu0 0.0
      %2381 = vmatprep.subr.mxu0 0.0
      %2382 = vmatpush1.msra.mxu0 0.0
      %2383 = vmatprep.subr.mxu0 0.0
      %2384 = vmatpush1.msra.mxu0 0.0
      %2385 = vmatprep.subr.mxu0 0.0
      %2386 = vmatpush1.msra.mxu0 0.0
      %2387 = vmatprep.subr.mxu0 0.0
      %2388 = vmatpush1.msra.mxu0 0.0
      %2389 = vmatprep.subr.mxu0 0.0
      %2390 = vmatpush1.msra.mxu0 0.0
      %2391 = vmatprep.subr.mxu0 0.0
      %2392 = vmatpush1.msra.mxu0 0.0
      %2393 = vmatprep.subr.mxu0 0.0
      %2394 = vmatpush1.msra.mxu0 0.0
      %2395 = vmatprep.subr.mxu0 0.0
      %2396 = vmatpush1.msra.mxu0 0.0
      %2397 = vmatprep.subr.mxu0 0.0
      %2398 = vmatpush1.msra.mxu0 %v2182
      %2399 = vmatprep.subr.mxu0 0.0
      %2400 = vmatpush1.msra.mxu0 %v2177
      %2401 = vmatprep.subr.mxu0 0.0
      %2402 = vmatpush1.msra.mxu0 %v2172
      %2403 = vmatprep.subr.mxu0 0.0
      %2404 = vmatpush1.msra.mxu0 %v2167
      %2405 = vmatprep.subr.mxu0 0.0
      %2406 = vmatpush2.msra.mxu0 0.0
      %2407 = vmatprep.subr.mxu0 0.0
      %2408 = vmatpush2.msra.mxu0 0.0
      %2409 = vmatprep.subr.mxu0 0.0
      %2410 = vmatpush2.msra.mxu0 0.0
      %2411 = vmatprep.subr.mxu0 0.0
      %2412 = vmatpush2.msra.mxu0 0.0
      %2413 = vmatprep.subr.mxu0 0.0
      %2414 = vmatpush2.msra.mxu0 0.0
      %2415 = vmatprep.subr.mxu0 0.0
      %2416 = vmatpush2.msra.mxu0 0.0
      %2417 = vmatprep.subr.mxu0 0.0
      %2418 = vmatpush2.msra.mxu0 0.0
      %2419 = vmatprep.subr.mxu0 0.0
      %2420 = vmatpush2.msra.mxu0 0.0
      %2421 = vmatprep.subr.mxu0 0.0
      %2422 = vmatpush2.msra.mxu0 0.0
      %2423 = vmatprep.subr.mxu0 0.0
      %2424 = vmatpush2.msra.mxu0 0.0
      %2425 = vmatprep.subr.mxu0 0.0
      %2426 = vmatpush2.msra.mxu0 0.0
      %2427 = vmatprep.subr.mxu0 0.0
      %2428 = vmatpush2.msra.mxu0 0.0
      %2429 = vmatprep.subr.mxu0 0.0
      %2430 = vmatpush2.msra.mxu0 0.0
      %2431 = vmatprep.subr.mxu0 0.0
      %2432 = vmatpush2.msra.mxu0 0.0
      %2433 = vmatprep.subr.mxu0 0.0
      %2434 = vmatpush2.msra.mxu0 0.0
      %2435 = vmatprep.subr.mxu0 0.0
      %2436 = vmatpush2.msra.mxu0 0.0
      %2437 = vmatprep.mubr.f32.mxu0 0.0
      %2438 = vmatmul.mubr.f32.gmra.mxu0 %v2184
      %v2439 = vpop.f32.mrf.mxu0
      %v2440 = vadd.f32 0.0, %v2439
      %v2441 = vpop.f32.mrf.mxu0
      %2442 = vmatprep.mubr.f32.mxu0 0.0
      %2443 = vmatmul.mubr.f32.gmra.mxu0 %v2187
      %v2444 = vpop.f32.mrf.mxu0
      %v2445 = vadd.f32 0.0, %v2444
      %v2446 = vpop.f32.mrf.mxu0
      %2447 = vmatprep.mubr.f32.mxu0 0.0
      %2448 = vmatmul.mubr.f32.gmra.mxu0 %v2190
      %v2449 = vpop.f32.mrf.mxu0
      %v2450 = vadd.f32 0.0, %v2449
      %v2451 = vpop.f32.mrf.mxu0
      %2452 = vmatprep.mubr.f32.mxu0 0.0
      %2453 = vmatmul.mubr.f32.gmra.mxu0 %v2193
      %v2454 = vpop.f32.mrf.mxu0
      %v2455 = vadd.f32 0.0, %v2454
      %v2456 = vpop.f32.mrf.mxu0
      %2457 = vdwg.mxu0
      %2458 = vst [vmem:[#allocation5] sm:$0xff] %v2262
      %2459 = vst [vmem:[#allocation5 + $0x8] sm:$0xff] %v2264
      %2460 = vst [vmem:[#allocation5 + $0x10] sm:$0xff] %v2351
      %2461 = vst [vmem:[#allocation5 + $0x18] sm:$0xff] %v2353
      %2462 = vst [vmem:[#allocation5 + $0x20] sm:$0xff] %v2440
      %2463 = vst [vmem:[#allocation5 + $0x38] sm:$0xff] %v2268
      %2464 = vst [vmem:[#allocation5 + $0x40] sm:$0xff] %v2270
      %2465 = vst [vmem:[#allocation5 + $0x48] sm:$0xff] %v2357
      %2466 = vst [vmem:[#allocation5 + $0x50] sm:$0xff] %v2359
      %2467 = vst [vmem:[#allocation5 + $0x58] sm:$0xff] %v2445
      %2468 = vst [vmem:[#allocation5 + $0x70] sm:$0xff] %v2274
      %2469 = vst [vmem:[#allocation5 + $0x78] sm:$0xff] %v2276
      %2470 = vst [vmem:[#allocation5 + $0x80] sm:$0xff] %v2363
      %2471 = vst [vmem:[#allocation5 + $0x88] sm:$0xff] %v2365
      %2472 = vst [vmem:[#allocation5 + $0x90] sm:$0xff] %v2450
      %2473 = vst [vmem:[#allocation5 + $0xa8] sm:$0xff] %v2280
      %2474 = vst [vmem:[#allocation5 + $0xb0] sm:$0xff] %v2282
      %2475 = vst [vmem:[#allocation5 + $0xb8] sm:$0xff] %v2369
      %2476 = vst [vmem:[#allocation5 + $0xc0] sm:$0xff] %v2371
      %2477 = vst [vmem:[#allocation5 + $0xc8] sm:$0xff] %v2455
      %2478 = vst [vmem:[#allocation5 + $0x28] sm:$0xff] 0.0
      %2479 = vst [vmem:[#allocation5 + $0x30] sm:$0xff] 0.0
      %2480 = vst [vmem:[#allocation5 + $0x60] sm:$0xff] 0.0
      %2481 = vst [vmem:[#allocation5 + $0x68] sm:$0xff] 0.0
      %2482 = vst [vmem:[#allocation5 + $0x98] sm:$0xff] 0.0
      %2483 = vst [vmem:[#allocation5 + $0xa0] sm:$0xff] 0.0
      %2484 = vst [vmem:[#allocation5 + $0xd0] sm:$0xff] 0.0
      %2485 = vst [vmem:[#allocation5 + $0xd8] sm:$0xff] 0.0
      %v2486 = vld [vmem:[#allocation5] ss:$8 sm:$0xf]
      %s2487 = scalar_lea.vmem [#allocation5], 1
      %v2488 = vld [vmem:[%s2487] ss:$8 sm:$0xf]
      %v2489 = vld [vmem:[%s2487] ss:$8 sm:$0x10]
      %v2490 = vor.u32 %v2488, %v2489
      %2492 = vrot.lane.b32.xlu0 %v2490, 127
      %v2493 = vpop.permute.xlu0 %2492
      %v2494 = vrot.slane %v2493, 1
      %v2495 = vsel %vm344, %v2493, %v2494
      %v2497 = vadd.f32 %v2486, %v2495
      %s2498 = scalar_lea.vmem [#allocation5], 2
      %v2499 = vld [vmem:[%s2498] ss:$8 sm:$0xf]
      %v2500 = vld [vmem:[%s2498] ss:$8 sm:$0x10]
      %v2501 = vor.u32 %v2499, %v2500
      %2503 = vrot.lane.b32.xlu0 %v2501, 126
      %v2504 = vpop.permute.xlu0 %2503
      %v2505 = vrot.slane %v2504, 1
      %v2506 = vsel %vm355, %v2504, %v2505
      %v2508 = vadd.f32 %v2497, %v2506
      %s2509 = scalar_lea.vmem [#allocation5], 3
      %v2510 = vld [vmem:[%s2509] ss:$8 sm:$0xf]
      %v2511 = vld [vmem:[%s2509] ss:$8 sm:$0x10]
      %v2512 = vor.u32 %v2510, %v2511
      %2514 = vrot.lane.b32.xlu0 %v2512, 125
      %v2515 = vpop.permute.xlu0 %2514
      %v2516 = vrot.slane %v2515, 1
      %v2517 = vsel %vm366, %v2515, %v2516
      %v2519 = vadd.f32 %v2508, %v2517
      %s2520 = scalar_lea.vmem [#allocation5], 4
      %v2521 = vld [vmem:[%s2520] ss:$8 sm:$0xf]
      %v2522 = vld [vmem:[%s2520] ss:$8 sm:$0x10]
      %v2523 = vor.u32 %v2521, %v2522
      %2525 = vrot.lane.b32.xlu0 %v2523, 124
      %v2526 = vpop.permute.xlu0 %2525
      %v2527 = vrot.slane %v2526, 1
      %v2528 = vsel %vm377, %v2526, %v2527
      %v2530 = vadd.f32 %v2519, %v2528
      %s2531 = scalar_lea.vmem [#allocation5], 5
      %v2532 = vld [vmem:[%s2531] ss:$8 sm:$0xf]
      %v2533 = vld [vmem:[%s2531] ss:$8 sm:$0x10]
      %v2534 = vor.u32 %v2532, %v2533
      %2536 = vrot.lane.b32.xlu0 %v2534, 96
      %v2537 = vpop.permute.xlu0 %2536
      %v2538 = vrot.slane %v2537, 1
      %v2539 = vsel %vm432, %v2537, %v2538
      %v2541 = vadd.f32 %v2530, %v2539
      %s2542 = scalar_lea.vmem [#allocation5], 6
      %v2543 = vld [vmem:[%s2542] ss:$8 sm:$0xf]
      %v2544 = vld [vmem:[%s2542] ss:$8 sm:$0x10]
      %v2545 = vor.u32 %v2543, %v2544
      %2547 = vrot.lane.b32.xlu0 %v2545, 95
      %v2548 = vpop.permute.xlu0 %2547
      %v2549 = vrot.slane %v2548, 1
      %v2550 = vsel %vm443, %v2548, %v2549
      %v2552 = vadd.f32 %v2541, %v2550
      %s2553 = scalar_lea.vmem [#allocation5], 7
      %v2554 = vld [vmem:[%s2553] ss:$8 sm:$0xf]
      %v2555 = vld [vmem:[%s2553] ss:$8 sm:$0x10]
      %v2556 = vor.u32 %v2554, %v2555
      %2558 = vrot.lane.b32.xlu0 %v2556, 94
      %v2559 = vpop.permute.xlu0 %2558
      %v2560 = vrot.slane %v2559, 1
      %v2561 = vsel %vm454, %v2559, %v2560
      %v2563 = vadd.f32 %v2552, %v2561
      %s2564 = scalar_lea.vmem [#allocation5], 56
      %v2565 = vld [vmem:[%s2564] ss:$8 sm:$0xf]
      %v2566 = vld [vmem:[%s2564] ss:$8 sm:$0x10]
      %v2567 = vor.u32 %v2565, %v2566
      %2569 = vrot.lane.b32.xlu0 %v2567, 93
      %v2570 = vpop.permute.xlu0 %2569
      %v2571 = vrot.slane %v2570, 1
      %v2572 = vsel %vm465, %v2570, %v2571
      %v2574 = vadd.f32 %v2563, %v2572
      %s2575 = scalar_lea.vmem [#allocation5], 57
      %v2576 = vld [vmem:[%s2575] ss:$8 sm:$0xf]
      %v2577 = vld [vmem:[%s2575] ss:$8 sm:$0x10]
      %v2578 = vor.u32 %v2576, %v2577
      %2580 = vrot.lane.b32.xlu0 %v2578, 92
      %v2581 = vpop.permute.xlu0 %2580
      %v2582 = vrot.slane %v2581, 1
      %v2583 = vsel %vm476, %v2581, %v2582
      %v2585 = vadd.f32 %v2574, %v2583
      %s2586 = scalar_lea.vmem [#allocation5], 58
      %v2587 = vld [vmem:[%s2586] ss:$8 sm:$0xf]
      %v2588 = vld [vmem:[%s2586] ss:$8 sm:$0x10]
      %v2589 = vor.u32 %v2587, %v2588
      %2591 = vrot.lane.b32.xlu0 %v2589, 64
      %v2592 = vpop.permute.xlu0 %2591
      %v2593 = vrot.slane %v2592, 1
      %v2594 = vsel %vm531, %v2592, %v2593
      %v2596 = vadd.f32 %v2585, %v2594
      %s2597 = scalar_lea.vmem [#allocation5], 59
      %v2598 = vld [vmem:[%s2597] ss:$8 sm:$0xf]
      %v2599 = vld [vmem:[%s2597] ss:$8 sm:$0x10]
      %v2600 = vor.u32 %v2598, %v2599
      %2602 = vrot.lane.b32.xlu0 %v2600, 63
      %v2603 = vpop.permute.xlu0 %2602
      %v2604 = vrot.slane %v2603, 1
      %v2605 = vsel %vm542, %v2603, %v2604
      %v2607 = vadd.f32 %v2596, %v2605
      %s2608 = scalar_lea.vmem [#allocation5], 60
      %v2609 = vld [vmem:[%s2608] ss:$8 sm:$0xf]
      %v2610 = vld [vmem:[%s2608] ss:$8 sm:$0x10]
      %v2611 = vor.u32 %v2609, %v2610
      %2613 = vrot.lane.b32.xlu0 %v2611, 62
      %v2614 = vpop.permute.xlu0 %2613
      %v2615 = vrot.slane %v2614, 1
      %v2616 = vsel %vm553, %v2614, %v2615
      %v2618 = vadd.f32 %v2607, %v2616
      %s2619 = scalar_lea.vmem [#allocation5], 61
      %v2620 = vld [vmem:[%s2619] ss:$8 sm:$0xf]
      %v2621 = vld [vmem:[%s2619] ss:$8 sm:$0x10]
      %v2622 = vor.u32 %v2620, %v2621
      %2624 = vrot.lane.b32.xlu0 %v2622, 61
      %v2625 = vpop.permute.xlu0 %2624
      %v2626 = vrot.slane %v2625, 1
      %v2627 = vsel %vm564, %v2625, %v2626
      %v2629 = vadd.f32 %v2618, %v2627
      %s2630 = scalar_lea.vmem [#allocation5], 62
      %v2631 = vld [vmem:[%s2630] ss:$8 sm:$0xf]
      %v2632 = vld [vmem:[%s2630] ss:$8 sm:$0x10]
      %v2633 = vor.u32 %v2631, %v2632
      %2635 = vrot.lane.b32.xlu0 %v2633, 60
      %v2636 = vpop.permute.xlu0 %2635
      %v2637 = vrot.slane %v2636, 1
      %v2638 = vsel %vm575, %v2636, %v2637
      %v2640 = vadd.f32 %v2629, %v2638
      %s2641 = scalar_lea.vmem [#allocation5], 63
      %v2642 = vld [vmem:[%s2641] ss:$8 sm:$0xf]
      %v2643 = vld [vmem:[%s2641] ss:$8 sm:$0x10]
      %v2644 = vor.u32 %v2642, %v2643
      %2646 = vrot.lane.b32.xlu0 %v2644, 32
      %v2647 = vpop.permute.xlu0 %2646
      %v2648 = vrot.slane %v2647, 1
      %v2649 = vsel %vm630, %v2647, %v2648
      %v2651 = vadd.f32 %v2640, %v2649
      %s2652 = scalar_lea.vmem [#allocation5], 112
      %v2653 = vld [vmem:[%s2652] ss:$8 sm:$0xf]
      %v2654 = vld [vmem:[%s2652] ss:$8 sm:$0x10]
      %v2655 = vor.u32 %v2653, %v2654
      %2657 = vrot.lane.b32.xlu0 %v2655, 31
      %v2658 = vpop.permute.xlu0 %2657
      %v2659 = vrot.slane %v2658, 1
      %v2660 = vsel %vm641, %v2658, %v2659
      %v2662 = vadd.f32 %v2651, %v2660
      %s2663 = scalar_lea.vmem [#allocation5], 113
      %v2664 = vld [vmem:[%s2663] ss:$8 sm:$0xf]
      %v2665 = vld [vmem:[%s2663] ss:$8 sm:$0x10]
      %v2666 = vor.u32 %v2664, %v2665
      %2668 = vrot.lane.b32.xlu0 %v2666, 30
      %v2669 = vpop.permute.xlu0 %2668
      %v2670 = vrot.slane %v2669, 1
      %v2671 = vsel %vm652, %v2669, %v2670
      %v2673 = vadd.f32 %v2662, %v2671
      %s2674 = scalar_lea.vmem [#allocation5], 114
      %v2675 = vld [vmem:[%s2674] ss:$8 sm:$0xf]
      %v2676 = vld [vmem:[%s2674] ss:$8 sm:$0x10]
      %v2677 = vor.u32 %v2675, %v2676
      %2679 = vrot.lane.b32.xlu0 %v2677, 29
      %v2680 = vpop.permute.xlu0 %2679
      %v2681 = vrot.slane %v2680, 1
      %v2682 = vsel %vm663, %v2680, %v2681
      %v2684 = vadd.f32 %v2673, %v2682
      %s2685 = scalar_lea.vmem [#allocation5], 115
      %v2686 = vld [vmem:[%s2685] ss:$8 sm:$0xf]
      %v2687 = vld [vmem:[%s2685] ss:$8 sm:$0x10]
      %v2688 = vor.u32 %v2686, %v2687
      %2690 = vrot.lane.b32.xlu0 %v2688, 28
      %v2691 = vpop.permute.xlu0 %2690
      %v2692 = vrot.slane %v2691, 1
      %v2693 = vsel %vm674, %v2691, %v2692
      %v2695 = vadd.f32 %v2684, %v2693
      %s2696 = scalar_lea.vmem [#allocation5], 124
      %v2697 = vld [vmem:[%s2696] ss:$8 sm:$0xf]
      %v2698 = vadd.f32 %v2695, %v2697
      %s2699 = scalar_lea.vmem [#allocation5], 125
      %v2700 = vld [vmem:[%s2699] ss:$8 sm:$0xf]
      %v2701 = vld [vmem:[%s2699] ss:$8 sm:$0x10]
      %v2702 = vor.u32 %v2700, %v2701
      %2704 = vrot.lane.b32.xlu0 %v2702, 127
      %v2705 = vpop.permute.xlu0 %2704
      %v2706 = vrot.slane %v2705, 1
      %v2707 = vsel %vm344, %v2705, %v2706
      %v2709 = vadd.f32 %v2698, %v2707
      %s2710 = scalar_lea.vmem [#allocation5], 126
      %v2711 = vld [vmem:[%s2710] ss:$8 sm:$0xf]
      %v2712 = vld [vmem:[%s2710] ss:$8 sm:$0x10]
      %v2713 = vor.u32 %v2711, %v2712
      %2715 = vrot.lane.b32.xlu0 %v2713, 126
      %v2716 = vpop.permute.xlu0 %2715
      %v2717 = vrot.slane %v2716, 1
      %v2718 = vsel %vm355, %v2716, %v2717
      %v2720 = vadd.f32 %v2709, %v2718
      %s2721 = scalar_lea.vmem [#allocation5], 127
      %v2722 = vld [vmem:[%s2721] ss:$8 sm:$0xf]
      %v2723 = vld [vmem:[%s2721] ss:$8 sm:$0x10]
      %v2724 = vor.u32 %v2722, %v2723
      %2726 = vrot.lane.b32.xlu0 %v2724, 125
      %v2727 = vpop.permute.xlu0 %2726
      %v2728 = vrot.slane %v2727, 1
      %v2729 = vsel %vm366, %v2727, %v2728
      %v2731 = vadd.f32 %v2720, %v2729
      %s2732 = scalar_lea.vmem [#allocation5], 176
      %v2733 = vld [vmem:[%s2732] ss:$8 sm:$0xf]
      %v2734 = vld [vmem:[%s2732] ss:$8 sm:$0x10]
      %v2735 = vor.u32 %v2733, %v2734
      %2737 = vrot.lane.b32.xlu0 %v2735, 124
      %v2738 = vpop.permute.xlu0 %2737
      %v2739 = vrot.slane %v2738, 1
      %v2740 = vsel %vm377, %v2738, %v2739
      %v2742 = vadd.f32 %v2731, %v2740
      %s2743 = sld [smem:[#allocation6]]
      %v2744 = vstv %s2743
      %v2745 = vadd.f32 %v2742, %v2744
      %vm2746 = vcmp.lt.s32.totalorder %v333, 512
      %vm2747 = vmand %vm334, %vm2746
      %2748 = vst.msk [vmem:[%s301] sm:$0xf] %vm2747, %v2745
      %p2749 = scmp.lt.s32.totalorder %s20, 1
      %s2750 = scalar_select %p2749, %s20, 1
      %s2751 = smul.addr %s2750, 4
      %s2752 = scalar_lea.vmem %s8, %s2751
      // Predicated region
      $region53: #{srcnn_forward.1} parent=51 // pred_check
        %p2753 = pneg %p211
      $region54: #{srcnn_forward.1} parent=51 // pred_check_branch
        %2755 = sbr.rel (%p2753) target = $region56
      $region55: #{srcnn_forward.1} parent=51 // pred_region
        _
      $region56: #{srcnn_forward.1} parent=51 // pred_fallthru
        _
    $region52: #{srcnn_forward.1} parent=5 // pred_fallthru
      _
    %p2756 = scmp.le.s32.totalorder 2, %s15
    // Predicated region
    $region57: #{srcnn_forward.1} parent=5 // pred_check
      %p2757 = pneg %p2756
    $region58: #{srcnn_forward.1} parent=5 // pred_check_branch
      %2759 = sbr.rel (%p2757) target = $region60
    $region59: #{srcnn_forward.1} parent=5 // pred_region
      %s2760 = ssub.s32 %s15, 2
      // Predicated region
      $region61: #{srcnn_forward.1} parent=59 // pred_check
        %p2761 = pneg %p217
      $region62: #{srcnn_forward.1} parent=59 // pred_check_branch
        %2763 = sbr.rel (%p2761) target = $region64
      $region63: #{srcnn_forward.1} parent=59 // pred_region
        %p2764 = scmp.lt.s32.totalorder %s21, 1
        %s2765 = scalar_select %p2764, %s21, 1
        %s2766 = smul.addr %s2765, 4
        %s2767 = scalar_lea.vmem %s8, %s2766
      $region64: #{srcnn_forward.1} parent=59 // pred_fallthru
        _
    $region60: #{srcnn_forward.1} parent=5 // pred_fallthru
      _
  $region6: #{srcnn_forward.1} parent=0 // loop_footer
    %s19 = sadd.s32 1, %s15
  $region7: #{srcnn_forward.1} parent=0 // loop_footer_branch
    %14 = sbr.rel target = $region3
  $region8: #{srcnn_forward.1} parent=0 // loop_exit
    _

</llo_original>
